<compile_context>
chip_gen: v7x
topology: tpu7x:2x2x1
jax: 0.10.0
libtpu: 0.0.40
codegen_flags: <defaults>
</compile_context>

<pallas_src>
import functools

import jax
import jax.numpy as jnp
from jax.experimental import pallas as pl
from jax.experimental.pallas import tpu as pltpu


# ----------------------------------------------------------------------------
# In-kernel helpers
# ----------------------------------------------------------------------------
def _layer_norm(x, g, b, eps=1e-5):
    # single-pass: var = E[x^2] - mu^2 (halves cross-lane reductions)
    mu = jnp.mean(x, axis=-1, keepdims=True)
    ms = jnp.mean(x * x, axis=-1, keepdims=True)
    var = ms - mu * mu
    return (x - mu) * jax.lax.rsqrt(var + eps) * g + b


def _gelu_exact(x):
    # matches torch.nn.GELU() (erf form), kept in f32 (v5e has no bf16 VPU)
    return 0.5 * x * (1.0 + jax.lax.erf(x * 0.7071067811865475))


# ----------------------------------------------------------------------------
# Fused kernel: patch embed + pos embed + all encoder layers.
#   grid = (depth,); activation carried in a VMEM scratch across layers.
# ----------------------------------------------------------------------------
def fused_encoder_kernel(
    xp_ref, pw_ref, pb_ref, pos_ref, mask_ref, sel_ref,
    ln1g_ref, ln1b_ref, wqkv_ref,
    ln2g_ref, ln2b_ref, w1_ref, b1_ref, w2_ref, b2_ref,
    o_ref, x_acc, *, heads):
    layer = pl.program_id(0)
    M, D = x_acc.shape
    dh = D // heads
    scale = dh ** -0.5

    # ---- first grid step: patch embedding + positional embedding ------------
    @pl.when(layer == 0)
    def _init():
        y = jnp.dot(xp_ref[...].astype(jnp.bfloat16), pw_ref[...],
                    preferred_element_type=jnp.float32)
        x_acc[...] = y + pb_ref[...] + pos_ref[...]   # emb dropout = identity

    x = x_acc[...]                                    # (B*N, D) f32 residual stream

    # ---- PreLN + multi-head attention (no qkv bias / no out-proj, per spec) --
    xn = _layer_norm(x, ln1g_ref[0], ln1b_ref[0]).astype(jnp.bfloat16)
    # one batched MXU matmul produces q/k/v already split per head: (3H, M, dh)
    xb = jnp.broadcast_to(xn[None, :, :], (3 * heads, M, D))
    qkv = jnp.einsum('gmd,gdk->gmk', xb, wqkv_ref[0],
                     preferred_element_type=jnp.float32)
    q = qkv[0 * heads:1 * heads]                      # (H, M, dh) f32
    k = qkv[1 * heads:2 * heads]
    v = qkv[2 * heads:3 * heads]

    scores = jnp.einsum('hnk,hmk->hnm', q.astype(jnp.bfloat16),
                        k.astype(jnp.bfloat16),
                        preferred_element_type=jnp.float32) * scale
    scores = scores + mask_ref[...][None]             # block-diag batch mask
    mx = jnp.max(scores, axis=-1, keepdims=True)
    p = jnp.exp(scores - mx)
    s = jnp.sum(p, axis=-1, keepdims=True)
    attn = p * pl.reciprocal(s, approx=True)          # softmax via EUP recip

    oh = jnp.einsum('hnm,hmk->hnk', attn.astype(jnp.bfloat16),
                    v.astype(jnp.bfloat16),
                    preferred_element_type=jnp.float32)     # (H, M, dh)
    # 'h n d -> n (h d)' done as a batched matmul with a 0/1 selector
    attn_out = jnp.einsum('hnk,hkc->hnc', oh, sel_ref[...],
                          preferred_element_type=jnp.float32).sum(axis=0)
    x = x + attn_out

    # ---- PreLN + feed-forward ------------------------------------------------
    xn2 = _layer_norm(x, ln2g_ref[0], ln2b_ref[0]).astype(jnp.bfloat16)
    h1 = jnp.dot(xn2, w1_ref[0], preferred_element_type=jnp.float32) + b1_ref[0]
    h1 = _gelu_exact(h1).astype(jnp.bfloat16)
    h2 = jnp.dot(h1, w2_ref[0], preferred_element_type=jnp.float32) + b2_ref[0]
    x = x + h2

    x_acc[...] = x

    @pl.when(layer == pl.num_programs(0) - 1)
    def _finalize():
        # TODO(synk): D=32 (<128 lanes) makes this a masked store; a lane-dense
        # repack would help, but it is a single HBM write for the whole network.
        o_ref[...] = x


# ----------------------------------------------------------------------------
# pallas_call wrapper
# ----------------------------------------------------------------------------
def fused_encoder(xp_flat, pk, *, heads, depth):
    M, PD = xp_flat.shape
    D = pk["patch_w"].shape[1]
    F = pk["w1"].shape[-1]
    dh = D // heads

    const2 = lambda l: (0, 0)
    stack3 = lambda l: (l, 0, 0)
    stack4 = lambda l: (l, 0, 0, 0)

    grid_spec = pltpu.PrefetchScalarGridSpec(
        num_scalar_prefetch=0,
        grid=(depth,),
        in_specs=[
            pl.BlockSpec((M, PD), const2),                 # patches (B*N, PD)
            pl.BlockSpec((PD, D), const2),                 # patch W  (bf16)
            pl.BlockSpec((1, D), const2),                  # patch b
            pl.BlockSpec((M, D), const2),                  # pos emb (tiled over batch)
            pl.BlockSpec((M, M), const2),                  # additive batch mask
            pl.BlockSpec((heads, dh, D), lambda l: (0, 0, 0)),  # head selector
            pl.BlockSpec((1, 1, D), stack3),               # ln1 gamma
            pl.BlockSpec((1, 1, D), stack3),               # ln1 beta
            pl.BlockSpec((1, 3 * heads, D, dh), stack4),   # qkv per-head (bf16)
            pl.BlockSpec((1, 1, D), stack3),               # ln2 gamma
            pl.BlockSpec((1, 1, D), stack3),               # ln2 beta
            pl.BlockSpec((1, D, F), stack3),               # ffn W1 (bf16)
            pl.BlockSpec((1, 1, F), stack3),               # ffn b1
            pl.BlockSpec((1, F, D), stack3),               # ffn W2 (bf16)
            pl.BlockSpec((1, 1, D), stack3),               # ffn b2
        ],
        out_specs=pl.BlockSpec((M, D), const2),
        scratch_shapes=[pltpu.VMEM((M, D), jnp.float32)],  # resident activation
    )
    return pl.pallas_call(
        functools.partial(fused_encoder_kernel, heads=heads),
        out_shape=jax.ShapeDtypeStruct((M, D), jnp.float32),
        grid_spec=grid_spec,
        compiler_params=pltpu.CompilerParams(
            dimension_semantics=("arbitrary",)),           # layers are sequential
    )(xp_flat, pk["patch_w"], pk["patch_b"], pk["pos"], pk["mask"], pk["sel"],
      pk["ln1_g"], pk["ln1_b"], pk["wqkv"], pk["ln2_g"], pk["ln2_b"],
      pk["w1"], pk["b1"], pk["w2"], pk["b2"])


# ----------------------------------------------------------------------------
# Parameters (logical, f32) + packing into the kernel layout
# ----------------------------------------------------------------------------
def _xavier(key, shape):
    fan_in, fan_out = shape[-2], shape[-1]
    lim = (6.0 / (fan_in + fan_out)) ** 0.5
    return jax.random.uniform(key, shape, jnp.float32, -lim, lim)


def init_params(key, *, patch_dim, dim, num_patches, depth, ffn_dim):
    keys = jax.random.split(key, 4 + depth * 4)
    params = {
        "patch_w": _xavier(keys[0], (patch_dim, dim)),
        "patch_b": jax.random.normal(keys[1], (1, dim), jnp.float32) * 0.02,
        "pos": jax.random.normal(keys[2], (num_patches, dim), jnp.float32) * 0.02,
        "layers": [],
    }
    for l in range(depth):
        k0, k1, k2, k3 = keys[4 + 4 * l: 8 + 4 * l]
        params["layers"].append({
            "ln1_g": jnp.ones((1, dim), jnp.float32),
            "ln1_b": jnp.zeros((1, dim), jnp.float32),
            "wqkv": _xavier(k0, (dim, 3 * dim)),
            "ln2_g": jnp.ones((1, dim), jnp.float32),
            "ln2_b": jnp.zeros((1, dim), jnp.float32),
            "w1": _xavier(k1, (dim, ffn_dim)),
            "b1": jax.random.normal(k2, (1, ffn_dim), jnp.float32) * 0.02,
            "w2": _xavier(k3, (ffn_dim, dim)),
            "b2": jnp.zeros((1, dim), jnp.float32),
        })
    return params


def pack_params(params, *, batch, heads):
    D = params["patch_w"].shape[1]
    dh = D // heads
    N = params["pos"].shape[0]
    depth = len(params["layers"])
    F = params["layers"][0]["w1"].shape[1]

    def stack(name):
        return jnp.stack([lp[name] for lp in params["layers"]])

    # (depth, D, 3D) -> (depth, 3*H, D, dh) so q/k/v come out per head
    wqkv = stack("wqkv").reshape(depth, D, 3, heads, dh)
    wqkv = wqkv.transpose(0, 2, 3, 1, 4).reshape(depth, 3 * heads, D, dh)

    # block-diagonal additive mask: tokens only attend within their own image
    seg = jnp.repeat(jnp.arange(batch, dtype=jnp.int32), N)
    mask = jnp.where(seg[:, None] == seg[None, :], 0.0, -1e9).astype(jnp.float32)

    # selector realising 'h n d -> n (h d)' on the MXU
    sel = jnp.eye(D, dtype=jnp.float32).reshape(heads, dh, D)

    return {
        "patch_w": params["patch_w"].astype(jnp.bfloat16),
        "patch_b": params["patch_b"].reshape(1, D).astype(jnp.float32),
        "pos": jnp.tile(params["pos"], (batch, 1)).astype(jnp.float32),
        "mask": mask,
        "sel": sel,
        "ln1_g": stack("ln1_g").reshape(depth, 1, D),
        "ln1_b": stack("ln1_b").reshape(depth, 1, D),
        "wqkv": wqkv.astype(jnp.bfloat16),
        "ln2_g": stack("ln2_g").reshape(depth, 1, D),
        "ln2_b": stack("ln2_b").reshape(depth, 1, D),
        "w1": stack("w1").astype(jnp.bfloat16),
        "b1": stack("b1").reshape(depth, 1, F),
        "w2": stack("w2").astype(jnp.bfloat16),
        "b2": stack("b2").reshape(depth, 1, D),
    }


# ----------------------------------------------------------------------------
# Full forward pass (layout glue in JAX, everything hot in one Pallas kernel)
# ----------------------------------------------------------------------------
def transformer_encoder_forward(x_nchw, params, config):
    b, c, Hh, Ww = x_nchw.shape
    ph, pw = config["patch_size"]
    hn, wn = Hh // ph, Ww // pw
    heads = config["heads"]
    depth = len(params["layers"])

    # 'b c (h p1) (w p2) -> b (h w) (p1 p2 c)', with batch folded into rows
    xp = x_nchw.reshape(b, c, hn, ph, wn, pw)
    xp = xp.transpose(0, 2, 4, 3, 5, 1)
    xp = xp.reshape(b * hn * wn, ph * pw * c)          # (B*N, patch_dim)

    pk = pack_params(params, batch=b, heads=heads)
    out = fused_encoder(xp, pk, heads=heads, depth=depth)   # (B*N, D)
    return out.reshape(b, hn * wn, out.shape[-1])


# ----------------------------------------------------------------------------
# Pure-JAX f32 reference (for validation)
# ----------------------------------------------------------------------------
def reference_forward(x_nchw, params, config):
    hi = jax.lax.Precision.HIGHEST
    b, c, Hh, Ww = x_nchw.shape
    ph, pw = config["patch_size"]
    hn, wn = Hh // ph, Ww // pw
    heads = config["heads"]

    xp = x_nchw.reshape(b, c, hn, ph, wn, pw).transpose(0, 2, 4, 3, 5, 1)
    xp = xp.reshape(b, hn * wn, ph * pw * c)

    x = jnp.einsum('bnp,pd->bnd', xp, params["patch_w"], precision=hi)
    x = x + params["patch_b"] + params["pos"][None]

    def ln(t, g, beta):
        mu = jnp.mean(t, -1, keepdims=True)
        var = jnp.mean((t - mu) ** 2, -1, keepdims=True)
        return (t - mu) / jnp.sqrt(var + 1e-5) * g + beta

    D = x.shape[-1]
    dh = D // heads
    scale = dh ** -0.5
    for lp in params["layers"]:
        xn = ln(x, lp["ln1_g"], lp["ln1_b"])
        qkv = jnp.einsum('bnd,de->bne', xn, lp["wqkv"], precision=hi)
        q, k, v = jnp.split(qkv, 3, axis=-1)
        B, N, _ = q.shape
        q = q.reshape(B, N, heads, dh)
        k = k.reshape(B, N, heads, dh)
        v = v.reshape(B, N, heads, dh)
        s = jnp.einsum('bnhd,bmhd->bhnm', q, k, precision=hi) * scale
        a = jax.nn.softmax(s, axis=-1)
        o = jnp.einsum('bhnm,bmhd->bnhd', a, v, precision=hi).reshape(B, N, D)
        x = x + o
        xn2 = ln(x, lp["ln2_g"], lp["ln2_b"])
        h1 = jnp.einsum('bnd,df->bnf', xn2, lp["w1"], precision=hi) + lp["b1"]
        h1 = 0.5 * h1 * (1.0 + jax.lax.erf(h1 * 0.7071067811865475))
        h2 = jnp.einsum('bnf,fd->bnd', h1, lp["w2"], precision=hi) + lp["b2"]
        x = x + h2
    return x


if __name__ == "__main__":
    config = {
        "image_size": (16, 16),
        "patch_size": (4, 4),
        "channels": 4,
        "patch_dim": 32,      # transformer hidden dim
        "pool": "mean",       # unused by forward
        "emb_dropout": 0.0,
        "depth": 2,
        "heads": 4,
        "ffn_dim": 64,
        "ffn_dropout": 0.0,
    }
    H, W = config["image_size"]
    ph, pw = config["patch_size"]
    c = config["channels"]
    num_patches = (H // ph) * (W // pw)
    patch_dim_in = c * ph * pw

    key = jax.random.PRNGKey(0)
    kx, kp = jax.random.split(key)
    x = jax.random.normal(kx, (2, c, H, W), jnp.float32)   # NCHW, like PyTorch

    params = init_params(
        kp,
        patch_dim=patch_dim_in,
        dim=config["patch_dim"],
        num_patches=num_patches,
        depth=config["depth"],
        ffn_dim=config["ffn_dim"],
    )

    fwd = jax.jit(functools.partial(transformer_encoder_forward, config=config))
    out = jax.block_until_ready(fwd(x, params))
    assert out.shape == (2, num_patches, config["patch_dim"]), out.shape

    ref = jax.block_until_ready(reference_forward(x, params, config))
    err = float(jnp.max(jnp.abs(out - ref)))
    assert err < 0.15, f"max abs error vs f32 reference too large: {err}"

    print("KERNEL_OK")
</pallas_src>

<mosaic_0001>
module attributes {stable_mosaic.version = 11 : i64} {
  func.func @fused_encoder_kernel(%arg0: i32, %arg1: memref<32x64xf32, #tpu.memory_space<vmem>>, %arg2: memref<64x32xbf16, #tpu.memory_space<vmem>>, %arg3: memref<1x32xf32, #tpu.memory_space<vmem>>, %arg4: memref<32x32xf32, #tpu.memory_space<vmem>>, %arg5: memref<32x32xf32, #tpu.memory_space<vmem>>, %arg6: memref<4x8x32xf32, #tpu.memory_space<vmem>>, %arg7: memref<1x1x32xf32, #tpu.memory_space<vmem>>, %arg8: memref<1x1x32xf32, #tpu.memory_space<vmem>>, %arg9: memref<1x12x32x8xbf16, #tpu.memory_space<vmem>>, %arg10: memref<1x1x32xf32, #tpu.memory_space<vmem>>, %arg11: memref<1x1x32xf32, #tpu.memory_space<vmem>>, %arg12: memref<1x32x64xbf16, #tpu.memory_space<vmem>>, %arg13: memref<1x1x64xf32, #tpu.memory_space<vmem>>, %arg14: memref<1x64x32xbf16, #tpu.memory_space<vmem>>, %arg15: memref<1x1x32xf32, #tpu.memory_space<vmem>>, %arg16: memref<32x32xf32, #tpu.memory_space<vmem>>, %arg17: memref<32x32xf32, #tpu.memory_space<vmem>>) attributes {dimension_semantics = [#tpu.dimension_semantics<arbitrary>], iteration_bounds = array<i64: 2>, scalar_prefetch = 0 : i64, scratch_operands = 1 : i64, tpu.core_type = #tpu.core_type<tc>, window_params = [{pipeline_mode = #tpu.pipeline_mode<synchronous>, transform_indices = @transform_0, window_bounds = array<i64: 32, 64>}, {pipeline_mode = #tpu.pipeline_mode<synchronous>, transform_indices = @transform_1, window_bounds = array<i64: 64, 32>}, {pipeline_mode = #tpu.pipeline_mode<synchronous>, transform_indices = @transform_2, window_bounds = array<i64: 1, 32>}, {pipeline_mode = #tpu.pipeline_mode<synchronous>, transform_indices = @transform_3, window_bounds = array<i64: 32, 32>}, {pipeline_mode = #tpu.pipeline_mode<synchronous>, transform_indices = @transform_4, window_bounds = array<i64: 32, 32>}, {pipeline_mode = #tpu.pipeline_mode<synchronous>, transform_indices = @transform_5, window_bounds = array<i64: 4, 8, 32>}, {transform_indices = @transform_6, window_bounds = array<i64: 1, 1, 32>}, {transform_indices = @transform_7, window_bounds = array<i64: 1, 1, 32>}, {transform_indices = @transform_8, window_bounds = array<i64: 1, 12, 32, 8>}, {transform_indices = @transform_9, window_bounds = array<i64: 1, 1, 32>}, {transform_indices = @transform_10, window_bounds = array<i64: 1, 1, 32>}, {transform_indices = @transform_11, window_bounds = array<i64: 1, 32, 64>}, {transform_indices = @transform_12, window_bounds = array<i64: 1, 1, 64>}, {transform_indices = @transform_13, window_bounds = array<i64: 1, 64, 32>}, {transform_indices = @transform_14, window_bounds = array<i64: 1, 1, 32>}, {pipeline_mode = #tpu.pipeline_mode<synchronous>, transform_indices = @transform_15, window_bounds = array<i64: 32, 32>}]} {
    %c0_i32 = arith.constant 0 : i32
    %0 = arith.cmpi eq, %arg0, %c0_i32 : i32
    %1 = arith.extui %0 : i1 to i32
    %c0_i32_0 = arith.constant 0 : i32
    %2 = arith.cmpi ne, %1, %c0_i32_0 : i32
    scf.if %2 {
      %c0_60 = arith.constant 0 : index
      %c0_61 = arith.constant 0 : index
      %121 = vector.load %arg1[%c0_60, %c0_61] : memref<32x64xf32, #tpu.memory_space<vmem>>, vector<32x64xf32>
      %122 = arith.truncf %121 : vector<32x64xf32> to vector<32x64xbf16>
      %c0_62 = arith.constant 0 : index
      %c0_63 = arith.constant 0 : index
      %123 = vector.load %arg2[%c0_62, %c0_63] : memref<64x32xbf16, #tpu.memory_space<vmem>>, vector<64x32xbf16>
      %cst_64 = arith.constant dense<0.000000e+00> : vector<32x32xf32>
      %124 = tpu.matmul %122, %123, %cst_64 {dimension_numbers = #tpu.dot_dimension_numbers<[1], [0], [0], [1], [0, 0, 1, 1], [], []>} : vector<32x64xbf16>, vector<64x32xbf16>, vector<32x32xf32> -> vector<32x32xf32>
      %c0_65 = arith.constant 0 : index
      %c0_66 = arith.constant 0 : index
      %125 = vector.load %arg3[%c0_65, %c0_66] : memref<1x32xf32, #tpu.memory_space<vmem>>, vector<1x32xf32>
      %126 = vector.broadcast %125 : vector<1x32xf32> to vector<32x32xf32>
      %127 = arith.addf %124, %126 : vector<32x32xf32>
      %c0_67 = arith.constant 0 : index
      %c0_68 = arith.constant 0 : index
      %128 = vector.load %arg4[%c0_67, %c0_68] : memref<32x32xf32, #tpu.memory_space<vmem>>, vector<32x32xf32>
      %129 = arith.addf %127, %128 : vector<32x32xf32>
      %c0_69 = arith.constant 0 : index
      %c0_70 = arith.constant 0 : index
      %130 = vector.load %arg17[%c0_69, %c0_70] : memref<32x32xf32, #tpu.memory_space<vmem>>, vector<32x32xf32>
      tpu.vector_store %arg17[%c0_69, %c0_70], %129 {strides = array<i32>} : memref<32x32xf32, #tpu.memory_space<vmem>>, vector<32x32xf32>,
    } else {
    }
    %c0 = arith.constant 0 : index
    %c0_1 = arith.constant 0 : index
    %3 = vector.load %arg17[%c0, %c0_1] : memref<32x32xf32, #tpu.memory_space<vmem>>, vector<32x32xf32>
    %c0_2 = arith.constant 0 : index
    %c0_3 = arith.constant 0 : index
    %c0_4 = arith.constant 0 : index
    %4 = vector.load %arg7[%c0_2, %c0_3, %c0_4] : memref<1x1x32xf32, #tpu.memory_space<vmem>>, vector<1x1x32xf32>
    %5 = vector.shape_cast %4 : vector<1x1x32xf32> to vector<1x32xf32>
    %c0_5 = arith.constant 0 : index
    %c0_6 = arith.constant 0 : index
    %c0_7 = arith.constant 0 : index
    %6 = vector.load %arg8[%c0_5, %c0_6, %c0_7] : memref<1x1x32xf32, #tpu.memory_space<vmem>>, vector<1x1x32xf32>
    %7 = vector.shape_cast %6 : vector<1x1x32xf32> to vector<1x32xf32>
    %cst = arith.constant dense<0.000000e+00> : vector<32xf32>
    %8 = vector.multi_reduction <add>, %3, %cst [1] : vector<32x32xf32> to vector<32xf32>
    %9 = vector.shape_cast %8 : vector<32xf32> to vector<32x1xf32>
    %cst_8 = arith.constant 3.200000e+01 : f32
    %10 = vector.broadcast %cst_8 : f32 to vector<32x1xf32>
    %11 = arith.divf %9, %10 : vector<32x1xf32>
    %12 = arith.mulf %3, %3 : vector<32x32xf32>
    %cst_9 = arith.constant dense<0.000000e+00> : vector<32xf32>
    %13 = vector.multi_reduction <add>, %12, %cst_9 [1] : vector<32x32xf32> to vector<32xf32>
    %14 = vector.shape_cast %13 : vector<32xf32> to vector<32x1xf32>
    %cst_10 = arith.constant 3.200000e+01 : f32
    %15 = vector.broadcast %cst_10 : f32 to vector<32x1xf32>
    %16 = arith.divf %14, %15 : vector<32x1xf32>
    %17 = arith.mulf %11, %11 : vector<32x1xf32>
    %18 = arith.subf %16, %17 : vector<32x1xf32>
    %19 = vector.broadcast %11 : vector<32x1xf32> to vector<32x32xf32>
    %20 = arith.subf %3, %19 : vector<32x32xf32>
    %cst_11 = arith.constant 9.99999974E-6 : f32
    %21 = vector.broadcast %cst_11 : f32 to vector<32x1xf32>
    %22 = arith.addf %18, %21 : vector<32x1xf32>
    %23 = math.rsqrt %22 : vector<32x1xf32>
    %24 = vector.broadcast %23 : vector<32x1xf32> to vector<32x32xf32>
    %25 = arith.mulf %20, %24 : vector<32x32xf32>
    %26 = vector.broadcast %5 : vector<1x32xf32> to vector<32x32xf32>
    %27 = arith.mulf %25, %26 : vector<32x32xf32>
    %28 = vector.broadcast %7 : vector<1x32xf32> to vector<32x32xf32>
    %29 = arith.addf %27, %28 : vector<32x32xf32>
    %30 = arith.truncf %29 : vector<32x32xf32> to vector<32x32xbf16>
    %31 = vector.shape_cast %30 : vector<32x32xbf16> to vector<1x32x32xbf16>
    %32 = vector.shape_cast %31 : vector<1x32x32xbf16> to vector<1x32x32xbf16>
    %33 = vector.broadcast %32 : vector<1x32x32xbf16> to vector<12x32x32xbf16>
    %c0_12 = arith.constant 0 : index
    %c0_13 = arith.constant 0 : index
    %c0_14 = arith.constant 0 : index
    %c0_15 = arith.constant 0 : index
    %34 = vector.load %arg9[%c0_12, %c0_13, %c0_14, %c0_15] : memref<1x12x32x8xbf16, #tpu.memory_space<vmem>>, vector<1x12x32x8xbf16>
    %35 = vector.shape_cast %34 : vector<1x12x32x8xbf16> to vector<12x32x8xbf16>
    "tpu.trace_start"() <{level = 10 : i32, message = "gmd,gdk->gmk"}> : () -> ()
    %cst_16 = arith.constant dense<0.000000e+00> : vector<12x32x8xf32>
    %36 = tpu.matmul %33, %35, %cst_16 {dimension_numbers = #tpu.dot_dimension_numbers<[2], [1], [1], [2], [0, 0, 0, 1, 1, 2], [0], [0]>} : vector<12x32x32xbf16>, vector<12x32x8xbf16>, vector<12x32x8xf32> -> vector<12x32x8xf32>
    "tpu.trace_stop"() : () -> ()
    %37 = vector.extract_strided_slice %36 {offsets = [0, 0, 0], sizes = [4, 32, 8], strides = [1, 1, 1]} : vector<12x32x8xf32> to vector<4x32x8xf32>
    %38 = vector.extract_strided_slice %36 {offsets = [4, 0, 0], sizes = [4, 32, 8], strides = [1, 1, 1]} : vector<12x32x8xf32> to vector<4x32x8xf32>
    %39 = vector.extract_strided_slice %36 {offsets = [8, 0, 0], sizes = [4, 32, 8], strides = [1, 1, 1]} : vector<12x32x8xf32> to vector<4x32x8xf32>
    %40 = arith.truncf %37 : vector<4x32x8xf32> to vector<4x32x8xbf16>
    %41 = arith.truncf %38 : vector<4x32x8xf32> to vector<4x32x8xbf16>
    "tpu.trace_start"() <{level = 10 : i32, message = "hnk,hmk->hnm"}> : () -> ()
    %cst_17 = arith.constant dense<0.000000e+00> : vector<4x32x32xf32>
    %42 = tpu.matmul %40, %41, %cst_17 {dimension_numbers = #tpu.dot_dimension_numbers<[2], [2], [1], [1], [0, 0, 0, 1, 1, 1], [0], [0]>} : vector<4x32x8xbf16>, vector<4x32x8xbf16>, vector<4x32x32xf32> -> vector<4x32x32xf32>
    "tpu.trace_stop"() : () -> ()
    %cst_18 = arith.constant 0.353553385 : f32
    %43 = vector.broadcast %cst_18 : f32 to vector<4x32x32xf32>
    %44 = arith.mulf %42, %43 : vector<4x32x32xf32>
    %c0_19 = arith.constant 0 : index
    %c0_20 = arith.constant 0 : index
    %45 = vector.load %arg5[%c0_19, %c0_20] : memref<32x32xf32, #tpu.memory_space<vmem>>, vector<32x32xf32>
    %46 = vector.shape_cast %45 : vector<32x32xf32> to vector<1x32x32xf32>
    %47 = vector.broadcast %46 : vector<1x32x32xf32> to vector<4x32x32xf32>
    %48 = arith.addf %44, %47 : vector<4x32x32xf32>
    %cst_21 = arith.constant dense<0xFF800000> : vector<4x32xf32>
    %49 = vector.multi_reduction <maximumf>, %48, %cst_21 [2] : vector<4x32x32xf32> to vector<4x32xf32>
    %50 = vector.shape_cast %49 : vector<4x32xf32> to vector<4x32x1xf32>
    %51 = vector.broadcast %50 : vector<4x32x1xf32> to vector<4x32x32xf32>
    %52 = arith.subf %48, %51 : vector<4x32x32xf32>
    %53 = math.exp %52 : vector<4x32x32xf32>
    %cst_22 = arith.constant dense<0.000000e+00> : vector<4x32xf32>
    %54 = vector.multi_reduction <add>, %53, %cst_22 [2] : vector<4x32x32xf32> to vector<4x32xf32>
    %55 = vector.shape_cast %54 : vector<4x32xf32> to vector<4x32x1xf32>
    %56 = tpu.reciprocal %55 {approx = true} : vector<4x32x1xf32> -> vector<4x32x1xf32>
    %57 = vector.broadcast %56 : vector<4x32x1xf32> to vector<4x32x32xf32>
    %58 = arith.mulf %53, %57 : vector<4x32x32xf32>
    %59 = arith.truncf %58 : vector<4x32x32xf32> to vector<4x32x32xbf16>
    %60 = arith.truncf %39 : vector<4x32x8xf32> to vector<4x32x8xbf16>
    "tpu.trace_start"() <{level = 10 : i32, message = "hnm,hmk->hnk"}> : () -> ()
    %cst_23 = arith.constant dense<0.000000e+00> : vector<4x32x8xf32>
    %61 = tpu.matmul %59, %60, %cst_23 {dimension_numbers = #tpu.dot_dimension_numbers<[2], [1], [1], [2], [0, 0, 0, 1, 1, 2], [0], [0]>} : vector<4x32x32xbf16>, vector<4x32x8xbf16>, vector<4x32x8xf32> -> vector<4x32x8xf32>
    "tpu.trace_stop"() : () -> ()
    %c0_24 = arith.constant 0 : index
    %c0_25 = arith.constant 0 : index
    %c0_26 = arith.constant 0 : index
    %62 = vector.load %arg6[%c0_24, %c0_25, %c0_26] : memref<4x8x32xf32, #tpu.memory_space<vmem>>, vector<4x8x32xf32>
    "tpu.trace_start"() <{level = 10 : i32, message = "hnk,hkc->hnc"}> : () -> ()
    %cst_27 = arith.constant dense<0.000000e+00> : vector<4x32x32xf32>
    %63 = tpu.matmul %61, %62, %cst_27 {dimension_numbers = #tpu.dot_dimension_numbers<[2], [1], [1], [2], [0, 0, 0, 1, 1, 2], [0], [0]>} : vector<4x32x8xf32>, vector<4x8x32xf32>, vector<4x32x32xf32> -> vector<4x32x32xf32>
    "tpu.trace_stop"() : () -> ()
    %cst_28 = arith.constant dense<0.000000e+00> : vector<32x32xf32>
    %64 = vector.multi_reduction <add>, %63, %cst_28 [0] : vector<4x32x32xf32> to vector<32x32xf32>
    %65 = arith.addf %3, %64 : vector<32x32xf32>
    %c0_29 = arith.constant 0 : index
    %c0_30 = arith.constant 0 : index
    %c0_31 = arith.constant 0 : index
    %66 = vector.load %arg10[%c0_29, %c0_30, %c0_31] : memref<1x1x32xf32, #tpu.memory_space<vmem>>, vector<1x1x32xf32>
    %67 = vector.shape_cast %66 : vector<1x1x32xf32> to vector<1x32xf32>
    %c0_32 = arith.constant 0 : index
    %c0_33 = arith.constant 0 : index
    %c0_34 = arith.constant 0 : index
    %68 = vector.load %arg11[%c0_32, %c0_33, %c0_34] : memref<1x1x32xf32, #tpu.memory_space<vmem>>, vector<1x1x32xf32>
    %69 = vector.shape_cast %68 : vector<1x1x32xf32> to vector<1x32xf32>
    %cst_35 = arith.constant dense<0.000000e+00> : vector<32xf32>
    %70 = vector.multi_reduction <add>, %65, %cst_35 [1] : vector<32x32xf32> to vector<32xf32>
    %71 = vector.shape_cast %70 : vector<32xf32> to vector<32x1xf32>
    %cst_36 = arith.constant 3.200000e+01 : f32
    %72 = vector.broadcast %cst_36 : f32 to vector<32x1xf32>
    %73 = arith.divf %71, %72 : vector<32x1xf32>
    %74 = arith.mulf %65, %65 : vector<32x32xf32>
    %cst_37 = arith.constant dense<0.000000e+00> : vector<32xf32>
    %75 = vector.multi_reduction <add>, %74, %cst_37 [1] : vector<32x32xf32> to vector<32xf32>
    %76 = vector.shape_cast %75 : vector<32xf32> to vector<32x1xf32>
    %cst_38 = arith.constant 3.200000e+01 : f32
    %77 = vector.broadcast %cst_38 : f32 to vector<32x1xf32>
    %78 = arith.divf %76, %77 : vector<32x1xf32>
    %79 = arith.mulf %73, %73 : vector<32x1xf32>
    %80 = arith.subf %78, %79 : vector<32x1xf32>
    %81 = vector.broadcast %73 : vector<32x1xf32> to vector<32x32xf32>
    %82 = arith.subf %65, %81 : vector<32x32xf32>
    %cst_39 = arith.constant 9.99999974E-6 : f32
    %83 = vector.broadcast %cst_39 : f32 to vector<32x1xf32>
    %84 = arith.addf %80, %83 : vector<32x1xf32>
    %85 = math.rsqrt %84 : vector<32x1xf32>
    %86 = vector.broadcast %85 : vector<32x1xf32> to vector<32x32xf32>
    %87 = arith.mulf %82, %86 : vector<32x32xf32>
    %88 = vector.broadcast %67 : vector<1x32xf32> to vector<32x32xf32>
    %89 = arith.mulf %87, %88 : vector<32x32xf32>
    %90 = vector.broadcast %69 : vector<1x32xf32> to vector<32x32xf32>
    %91 = arith.addf %89, %90 : vector<32x32xf32>
    %92 = arith.truncf %91 : vector<32x32xf32> to vector<32x32xbf16>
    %c0_40 = arith.constant 0 : index
    %c0_41 = arith.constant 0 : index
    %c0_42 = arith.constant 0 : index
    %93 = vector.load %arg12[%c0_40, %c0_41, %c0_42] : memref<1x32x64xbf16, #tpu.memory_space<vmem>>, vector<1x32x64xbf16>
    %94 = vector.shape_cast %93 : vector<1x32x64xbf16> to vector<32x64xbf16>
    %cst_43 = arith.constant dense<0.000000e+00> : vector<32x64xf32>
    %95 = tpu.matmul %92, %94, %cst_43 {dimension_numbers = #tpu.dot_dimension_numbers<[1], [0], [0], [1], [0, 0, 1, 1], [], []>} : vector<32x32xbf16>, vector<32x64xbf16>, vector<32x64xf32> -> vector<32x64xf32>
    %c0_44 = arith.constant 0 : index
    %c0_45 = arith.constant 0 : index
    %c0_46 = arith.constant 0 : index
    %96 = vector.load %arg13[%c0_44, %c0_45, %c0_46] : memref<1x1x64xf32, #tpu.memory_space<vmem>>, vector<1x1x64xf32>
    %97 = vector.shape_cast %96 : vector<1x1x64xf32> to vector<1x64xf32>
    %98 = vector.broadcast %97 : vector<1x64xf32> to vector<32x64xf32>
    %99 = arith.addf %95, %98 : vector<32x64xf32>
    %cst_47 = arith.constant 5.000000e-01 : f32
    %100 = vector.broadcast %cst_47 : f32 to vector<32x64xf32>
    %101 = arith.mulf %100, %99 : vector<32x64xf32>
    %cst_48 = arith.constant 0.707106769 : f32
    %102 = vector.broadcast %cst_48 : f32 to vector<32x64xf32>
    %103 = arith.mulf %99, %102 : vector<32x64xf32>
    %104 = math.erf %103 : vector<32x64xf32>
    %cst_49 = arith.constant 1.000000e+00 : f32
    %105 = vector.broadcast %cst_49 : f32 to vector<32x64xf32>
    %106 = arith.addf %105, %104 : vector<32x64xf32>
    %107 = arith.mulf %101, %106 : vector<32x64xf32>
    %108 = arith.truncf %107 : vector<32x64xf32> to vector<32x64xbf16>
    %c0_50 = arith.constant 0 : index
    %c0_51 = arith.constant 0 : index
    %c0_52 = arith.constant 0 : index
    %109 = vector.load %arg14[%c0_50, %c0_51, %c0_52] : memref<1x64x32xbf16, #tpu.memory_space<vmem>>, vector<1x64x32xbf16>
    %110 = vector.shape_cast %109 : vector<1x64x32xbf16> to vector<64x32xbf16>
    %cst_53 = arith.constant dense<0.000000e+00> : vector<32x32xf32>
    %111 = tpu.matmul %108, %110, %cst_53 {dimension_numbers = #tpu.dot_dimension_numbers<[1], [0], [0], [1], [0, 0, 1, 1], [], []>} : vector<32x64xbf16>, vector<64x32xbf16>, vector<32x32xf32> -> vector<32x32xf32>
    %c0_54 = arith.constant 0 : index
    %c0_55 = arith.constant 0 : index
    %c0_56 = arith.constant 0 : index
    %112 = vector.load %arg15[%c0_54, %c0_55, %c0_56] : memref<1x1x32xf32, #tpu.memory_space<vmem>>, vector<1x1x32xf32>
    %113 = vector.shape_cast %112 : vector<1x1x32xf32> to vector<1x32xf32>
    %114 = vector.broadcast %113 : vector<1x32xf32> to vector<32x32xf32>
    %115 = arith.addf %111, %114 : vector<32x32xf32>
    %116 = arith.addf %65, %115 : vector<32x32xf32>
    %c0_57 = arith.constant 0 : index
    %c0_58 = arith.constant 0 : index
    %117 = vector.load %arg17[%c0_57, %c0_58] : memref<32x32xf32, #tpu.memory_space<vmem>>, vector<32x32xf32>
    tpu.vector_store %arg17[%c0_57, %c0_58], %116 {strides = array<i32>} : memref<32x32xf32, #tpu.memory_space<vmem>>, vector<32x32xf32>,
    %c1_i32 = arith.constant 1 : i32
    %118 = arith.cmpi eq, %arg0, %c1_i32 : i32
    %119 = arith.extui %118 : i1 to i32
    %c0_i32_59 = arith.constant 0 : i32
    %120 = arith.cmpi ne, %119, %c0_i32_59 : i32
    scf.if %120 {
      %c0_60 = arith.constant 0 : index
      %c0_61 = arith.constant 0 : index
      %121 = vector.load %arg16[%c0_60, %c0_61] : memref<32x32xf32, #tpu.memory_space<vmem>>, vector<32x32xf32>
      tpu.vector_store %arg16[%c0_60, %c0_61], %116 {strides = array<i32>} : memref<32x32xf32, #tpu.memory_space<vmem>>, vector<32x32xf32>,
    } else {
    }
    return
  }
  func.func @transform_0(%arg0: i32) -> (i32, i32) {
    %c0_i32 = arith.constant 0 : i32
    %c0_i32_0 = arith.constant 0 : i32
    %c0_i32_1 = arith.constant 0 : i32
    return %c0_i32, %c0_i32_0 : i32, i32
  }
  func.func @transform_1(%arg0: i32) -> (i32, i32) {
    %c0_i32 = arith.constant 0 : i32
    %c0_i32_0 = arith.constant 0 : i32
    %c0_i32_1 = arith.constant 0 : i32
    return %c0_i32, %c0_i32_0 : i32, i32
  }
  func.func @transform_2(%arg0: i32) -> (i32, i32) {
    %c0_i32 = arith.constant 0 : i32
    %c0_i32_0 = arith.constant 0 : i32
    %c0_i32_1 = arith.constant 0 : i32
    return %c0_i32, %c0_i32_0 : i32, i32
  }
  func.func @transform_3(%arg0: i32) -> (i32, i32) {
    %c0_i32 = arith.constant 0 : i32
    %c0_i32_0 = arith.constant 0 : i32
    %c0_i32_1 = arith.constant 0 : i32
    return %c0_i32, %c0_i32_0 : i32, i32
  }
  func.func @transform_4(%arg0: i32) -> (i32, i32) {
    %c0_i32 = arith.constant 0 : i32
    %c0_i32_0 = arith.constant 0 : i32
    %c0_i32_1 = arith.constant 0 : i32
    return %c0_i32, %c0_i32_0 : i32, i32
  }
  func.func @transform_5(%arg0: i32) -> (i32, i32, i32) {
    %c0_i32 = arith.constant 0 : i32
    %c0_i32_0 = arith.constant 0 : i32
    %c0_i32_1 = arith.constant 0 : i32
    %c0_i32_2 = arith.constant 0 : i32
    return %c0_i32, %c0_i32_0, %c0_i32_1 : i32, i32, i32
  }
  func.func @transform_6(%arg0: i32) -> (i32, i32, i32) {
    %c0_i32 = arith.constant 0 : i32
    %c0_i32_0 = arith.constant 0 : i32
    %c0_i32_1 = arith.constant 0 : i32
    return %arg0, %c0_i32, %c0_i32_0 : i32, i32, i32
  }
  func.func @transform_7(%arg0: i32) -> (i32, i32, i32) {
    %c0_i32 = arith.constant 0 : i32
    %c0_i32_0 = arith.constant 0 : i32
    %c0_i32_1 = arith.constant 0 : i32
    return %arg0, %c0_i32, %c0_i32_0 : i32, i32, i32
  }
  func.func @transform_8(%arg0: i32) -> (i32, i32, i32, i32) {
    %c0_i32 = arith.constant 0 : i32
    %c0_i32_0 = arith.constant 0 : i32
    %c0_i32_1 = arith.constant 0 : i32
    %c0_i32_2 = arith.constant 0 : i32
    return %arg0, %c0_i32, %c0_i32_0, %c0_i32_1 : i32, i32, i32, i32
  }
  func.func @transform_9(%arg0: i32) -> (i32, i32, i32) {
    %c0_i32 = arith.constant 0 : i32
    %c0_i32_0 = arith.constant 0 : i32
    %c0_i32_1 = arith.constant 0 : i32
    return %arg0, %c0_i32, %c0_i32_0 : i32, i32, i32
  }
  func.func @transform_10(%arg0: i32) -> (i32, i32, i32) {
    %c0_i32 = arith.constant 0 : i32
    %c0_i32_0 = arith.constant 0 : i32
    %c0_i32_1 = arith.constant 0 : i32
    return %arg0, %c0_i32, %c0_i32_0 : i32, i32, i32
  }
  func.func @transform_11(%arg0: i32) -> (i32, i32, i32) {
    %c0_i32 = arith.constant 0 : i32
    %c0_i32_0 = arith.constant 0 : i32
    %c0_i32_1 = arith.constant 0 : i32
    return %arg0, %c0_i32, %c0_i32_0 : i32, i32, i32
  }
  func.func @transform_12(%arg0: i32) -> (i32, i32, i32) {
    %c0_i32 = arith.constant 0 : i32
    %c0_i32_0 = arith.constant 0 : i32
    %c0_i32_1 = arith.constant 0 : i32
    return %arg0, %c0_i32, %c0_i32_0 : i32, i32, i32
  }
  func.func @transform_13(%arg0: i32) -> (i32, i32, i32) {
    %c0_i32 = arith.constant 0 : i32
    %c0_i32_0 = arith.constant 0 : i32
    %c0_i32_1 = arith.constant 0 : i32
    return %arg0, %c0_i32, %c0_i32_0 : i32, i32, i32
  }
  func.func @transform_14(%arg0: i32) -> (i32, i32, i32) {
    %c0_i32 = arith.constant 0 : i32
    %c0_i32_0 = arith.constant 0 : i32
    %c0_i32_1 = arith.constant 0 : i32
    return %arg0, %c0_i32, %c0_i32_0 : i32, i32, i32
  }
  func.func @transform_15(%arg0: i32) -> (i32, i32) {
    %c0_i32 = arith.constant 0 : i32
    %c0_i32_0 = arith.constant 0 : i32
    %c0_i32_1 = arith.constant 0 : i32
    return %c0_i32, %c0_i32_0 : i32, i32
  }
}

</mosaic_0001>

<llo_original>
// kernel: eq.9
$region0: #{eq.9}
  %s0 = inlined_call_operand.vmem [shape: s32[2,16], index: 0, kind: input, shape index: {}]
  %s1 = inlined_call_operand.vmem [shape: s32[32], index: 1, kind: output, shape index: {}]
  $region1: #{eq.9} parent=0
    #allocation0 [shape = 'u8[4096]{0}', space=vmem, size = 0x1000, scoped, tag = 'scoped mem for output reshape']
    #allocation1 [shape = 'u8[4096]{0}', space=vmem, size = 0x1000, scoped, tag = 'scoped mem for input reshape']
    %s3 = sshllo.u32 0, 2
    %v4 = vld [vmem:[%s0] sm:%s3]
    %5 = vst [vmem:[#allocation1] sm:%s3] %v4
    %v6 = vld [vmem:[#allocation1] sm:$0x1]
    %vm7 = vcmask 130048
    %8 = vst.msk [vmem:[#allocation0] sm:$0x1] %vm7, %v6
    %s9 = scalar_lea.vmem [#allocation1], 1
    %v10 = vld [vmem:[%s9] sm:$0x1]
    %11 = vrot.lane.b32.xlu0 %v10, 16
    %v12 = vpop.permute.xlu0 %11
    %vm13 = vcmask 261248
    %14 = vst.msk [vmem:[#allocation0] sm:$0x1] %vm13, %v12
    %s16 = sshllo.u32 0, 1
    %v18 = vld [vmem:[#allocation0] sm:%s16]
    %s19 = sshllo.u32 0, 1
    %20 = vst [vmem:[%s1] sm:%s19] %v18

// kernel: transformer_encoder_forward.1
$region0: #{transformer_encoder_forward.1}
  #allocation0 [shape = 'u32[]', space=smem, size = 0x4, offset = 0x4, fixed_abs, tag = 'smem constant byte address 0x4 - core index']
  #allocation1 [shape = 'u32[144,128]{1,0:T(1,128)}', space=vmem, size = 0x12000, scoped, tag = 'internal scratch']
  #allocation2 [shape = 'f32[32,32]{1,0:T(8,128)}', space=vmem, size = 0x4000, scoped, tag = 'scratch operand']
  %s0 = inlined_call_operand.vmem [shape: f32[32,64], index: 0, kind: input, shape index: {}]
  %s1 = inlined_call_operand.vmem [shape: bf16[64,32], index: 1, kind: input, shape index: {}]
  %s2 = inlined_call_operand.vmem [shape: f32[1,32], index: 2, kind: input, shape index: {}]
  %s3 = inlined_call_operand.vmem [shape: f32[32,32], index: 3, kind: input, shape index: {}]
  %s4 = inlined_call_operand.vmem [shape: f32[32,32], index: 4, kind: input, shape index: {}]
  %s5 = inlined_call_operand.vmem [shape: f32[4,8,32], index: 5, kind: input, shape index: {}]
  %s6 = inlined_call_operand.vmem [shape: f32[2,1,32], index: 6, kind: input, shape index: {}]
  %s7 = inlined_call_operand.vmem [shape: f32[2,1,32], index: 7, kind: input, shape index: {}]
  %s8 = inlined_call_operand.vmem [shape: bf16[2,12,32,8], index: 8, kind: input, shape index: {}]
  %s9 = inlined_call_operand.vmem [shape: f32[2,1,32], index: 9, kind: input, shape index: {}]
  %s10 = inlined_call_operand.vmem [shape: f32[2,1,32], index: 10, kind: input, shape index: {}]
  %s11 = inlined_call_operand.vmem [shape: bf16[2,32,64], index: 11, kind: input, shape index: {}]
  %s12 = inlined_call_operand.vmem [shape: f32[2,1,64], index: 12, kind: input, shape index: {}]
  %s13 = inlined_call_operand.vmem [shape: bf16[2,64,32], index: 13, kind: input, shape index: {}]
  %s14 = inlined_call_operand.vmem [shape: f32[2,1,32], index: 14, kind: input, shape index: {}]
  %s15 = inlined_call_operand.hbm [shape: f32[32,32], index: 15, kind: output, shape index: {}]
  %s16 = sld [smem:[#allocation0]]
  $region101: #{transformer_encoder_forward.1} parent=0
    _
  %s18 = ssub.s32 1, %s16
  %s19 = scalar_select 0, %s18, %s16
  $region1: #{transformer_encoder_forward.1} parent=0
    #allocation3 [shape = 'u8[16384]{0}', space=vmem, size = 0x4000, scoped, tag = 'output window, operand 0, single buffered']
    #allocation4 [shape = 's32[2]{0}', space=sflag, size = 0x8, scoped, tag = 'scoped memory for transformer_encoder_forward.1']
    %20 = vsyncpa [#allocation4], 0
    loop: start=0, step=1, limit=4
    $region2: #{transformer_encoder_forward.1} parent=1 // loop_pre_header
      _
    $region3: #{transformer_encoder_forward.1} parent=1 // loop_header
      %s22 = sphi 0, %s26
      %p23 = scmp.ge.s32.totalorder %s22, 4
      %s30 = sphi 0, %s30
      %s32 = sphi 0, %s30
      %s33 = sphi 0, %s32
      %s47 = sphi 0, %s33
      %s51 = sphi 0, %s51
      %s53 = sphi 0, %s51
      %s54 = sphi 0, %s53
      %s68 = sphi 0, %s54
      %s72 = sphi 0, %s72
      %s74 = sphi 0, %s72
      %s75 = sphi 0, %s74
      %s89 = sphi 0, %s75
      %s93 = sphi 0, %s93
      %s95 = sphi 0, %s93
      %s96 = sphi 0, %s95
      %s110 = sphi 0, %s96
      %s114 = sphi 0, %s114
      %s116 = sphi 0, %s114
      %s117 = sphi 0, %s116
      %s131 = sphi 0, %s117
      %s135 = sphi 0, %s135
      %s137 = sphi 0, %s135
      %s138 = sphi 0, %s137
      %s152 = sphi 0, %s138
      %s158 = sphi 0, %s160
      %s161 = sphi 0, %s158
      %s162 = sphi 0, %s161
      %s178 = sphi 0, %s162
      %s184 = sphi 0, %s186
      %s187 = sphi 0, %s184
      %s188 = sphi 0, %s187
      %s204 = sphi 0, %s188
      %s210 = sphi 0, %s212
      %s213 = sphi 0, %s210
      %s214 = sphi 0, %s213
      %s230 = sphi 0, %s214
      %s236 = sphi 0, %s238
      %s239 = sphi 0, %s236
      %s240 = sphi 0, %s239
      %s256 = sphi 0, %s240
      %s262 = sphi 0, %s264
      %s265 = sphi 0, %s262
      %s266 = sphi 0, %s265
      %s282 = sphi 0, %s266
      %s288 = sphi 0, %s290
      %s291 = sphi 0, %s288
      %s292 = sphi 0, %s291
      %s308 = sphi 0, %s292
      %s314 = sphi 0, %s316
      %s317 = sphi 0, %s314
      %s318 = sphi 0, %s317
      %s334 = sphi 0, %s318
      %s340 = sphi 0, %s342
      %s343 = sphi 0, %s340
      %s344 = sphi 0, %s343
      %s360 = sphi 0, %s344
      %s366 = sphi 0, %s368
      %s369 = sphi 0, %s366
      %s370 = sphi 0, %s369
      %s386 = sphi 0, %s370
      %s390 = sphi 0, %s390
      %s392 = sphi 0, %s390
      %s393 = sphi 0, %s392
      %s407 = sphi 0, %s393
    $region4: #{transformer_encoder_forward.1} parent=1 // loop_header_branch
      %25 = sbr.rel (%p23) target = $region8
    $region5: #{transformer_encoder_forward.1} parent=1 // loop_body
      %s27 = ssub.s32 %s22, 1
      %s28 = ssub.s32 %s22, 2
      %s29 = sadd.s32 %s22, 1
      %s31 = sadd.s32 %s30, 1
      %p34 = scmp.eq.s32.totalorder %s22, 1
      %p35 = scmp.ne.s32.totalorder %s30, %s32
      %p36 = scmp.eq.s32.totalorder %s22, 0
      %p37 = por %p35, %p36
      %p38 = scmp.ne.s32.totalorder %s30, %s32
      %p39 = scmp.eq.s32.totalorder %s27, 1
      %p40 = por %p38, %p39
      %p41 = scmp.ne.s32.totalorder %s32, %s33
      %p42 = scmp.eq.s32.totalorder %s27, 0
      %p43 = por %p41, %p42
      %p44 = scmp.ne.s32.totalorder %s32, %s33
      %p45 = scmp.eq.s32.totalorder %s28, 1
      %p46 = por %p44, %p45
      %p48 = scmp.ne.s32.totalorder %s33, %s47
      %p49 = scmp.eq.s32.totalorder %s28, 0
      %p50 = por %p48, %p49
      %s52 = sadd.s32 %s51, 1
      %p55 = scmp.eq.s32.totalorder %s22, 1
      %p56 = scmp.ne.s32.totalorder %s51, %s53
      %p57 = scmp.eq.s32.totalorder %s22, 0
      %p58 = por %p56, %p57
      %p59 = scmp.ne.s32.totalorder %s51, %s53
      %p60 = scmp.eq.s32.totalorder %s27, 1
      %p61 = por %p59, %p60
      %p62 = scmp.ne.s32.totalorder %s53, %s54
      %p63 = scmp.eq.s32.totalorder %s27, 0
      %p64 = por %p62, %p63
      %p65 = scmp.ne.s32.totalorder %s53, %s54
      %p66 = scmp.eq.s32.totalorder %s28, 1
      %p67 = por %p65, %p66
      %p69 = scmp.ne.s32.totalorder %s54, %s68
      %p70 = scmp.eq.s32.totalorder %s28, 0
      %p71 = por %p69, %p70
      %s73 = sadd.s32 %s72, 1
      %p76 = scmp.eq.s32.totalorder %s22, 1
      %p77 = scmp.ne.s32.totalorder %s72, %s74
      %p78 = scmp.eq.s32.totalorder %s22, 0
      %p79 = por %p77, %p78
      %p80 = scmp.ne.s32.totalorder %s72, %s74
      %p81 = scmp.eq.s32.totalorder %s27, 1
      %p82 = por %p80, %p81
      %p83 = scmp.ne.s32.totalorder %s74, %s75
      %p84 = scmp.eq.s32.totalorder %s27, 0
      %p85 = por %p83, %p84
      %p86 = scmp.ne.s32.totalorder %s74, %s75
      %p87 = scmp.eq.s32.totalorder %s28, 1
      %p88 = por %p86, %p87
      %p90 = scmp.ne.s32.totalorder %s75, %s89
      %p91 = scmp.eq.s32.totalorder %s28, 0
      %p92 = por %p90, %p91
      %s94 = sadd.s32 %s93, 1
      %p97 = scmp.eq.s32.totalorder %s22, 1
      %p98 = scmp.ne.s32.totalorder %s93, %s95
      %p99 = scmp.eq.s32.totalorder %s22, 0
      %p100 = por %p98, %p99
      %p101 = scmp.ne.s32.totalorder %s93, %s95
      %p102 = scmp.eq.s32.totalorder %s27, 1
      %p103 = por %p101, %p102
      %p104 = scmp.ne.s32.totalorder %s95, %s96
      %p105 = scmp.eq.s32.totalorder %s27, 0
      %p106 = por %p104, %p105
      %p107 = scmp.ne.s32.totalorder %s95, %s96
      %p108 = scmp.eq.s32.totalorder %s28, 1
      %p109 = por %p107, %p108
      %p111 = scmp.ne.s32.totalorder %s96, %s110
      %p112 = scmp.eq.s32.totalorder %s28, 0
      %p113 = por %p111, %p112
      %s115 = sadd.s32 %s114, 1
      %p118 = scmp.eq.s32.totalorder %s22, 1
      %p119 = scmp.ne.s32.totalorder %s114, %s116
      %p120 = scmp.eq.s32.totalorder %s22, 0
      %p121 = por %p119, %p120
      %p122 = scmp.ne.s32.totalorder %s114, %s116
      %p123 = scmp.eq.s32.totalorder %s27, 1
      %p124 = por %p122, %p123
      %p125 = scmp.ne.s32.totalorder %s116, %s117
      %p126 = scmp.eq.s32.totalorder %s27, 0
      %p127 = por %p125, %p126
      %p128 = scmp.ne.s32.totalorder %s116, %s117
      %p129 = scmp.eq.s32.totalorder %s28, 1
      %p130 = por %p128, %p129
      %p132 = scmp.ne.s32.totalorder %s117, %s131
      %p133 = scmp.eq.s32.totalorder %s28, 0
      %p134 = por %p132, %p133
      %s136 = sadd.s32 %s135, 1
      %p139 = scmp.eq.s32.totalorder %s22, 1
      %p140 = scmp.ne.s32.totalorder %s135, %s137
      %p141 = scmp.eq.s32.totalorder %s22, 0
      %p142 = por %p140, %p141
      %p143 = scmp.ne.s32.totalorder %s135, %s137
      %p144 = scmp.eq.s32.totalorder %s27, 1
      %p145 = por %p143, %p144
      %p146 = scmp.ne.s32.totalorder %s137, %s138
      %p147 = scmp.eq.s32.totalorder %s27, 0
      %p148 = por %p146, %p147
      %p149 = scmp.ne.s32.totalorder %s137, %s138
      %p150 = scmp.eq.s32.totalorder %s28, 1
      %p151 = por %p149, %p150
      %p153 = scmp.ne.s32.totalorder %s138, %s152
      %p154 = scmp.eq.s32.totalorder %s28, 0
      %p155 = por %p153, %p154
      %s156 = ssub.s32 %s22, %s29
      %p157 = scmp.eq.s32.totalorder %s156, 0
      %s159 = sadd.s32 %s158, 1
      %s160 = scalar_select %p157, %s158, %s159
      %p163 = pneg %p157
      %p164 = scmp.eq.s32.totalorder %s22, 1
      %p165 = por %p163, %p164
      %p166 = scmp.ne.s32.totalorder %s158, %s161
      %p167 = scmp.eq.s32.totalorder %s22, 0
      %p168 = por %p166, %p167
      %p169 = scmp.ne.s32.totalorder %s158, %s161
      %p170 = scmp.eq.s32.totalorder %s27, 1
      %p171 = por %p169, %p170
      %p172 = scmp.ne.s32.totalorder %s161, %s162
      %p173 = scmp.eq.s32.totalorder %s27, 0
      %p174 = por %p172, %p173
      %p175 = scmp.ne.s32.totalorder %s161, %s162
      %p176 = scmp.eq.s32.totalorder %s28, 1
      %p177 = por %p175, %p176
      %p179 = scmp.ne.s32.totalorder %s162, %s178
      %p180 = scmp.eq.s32.totalorder %s28, 0
      %p181 = por %p179, %p180
      %s182 = ssub.s32 %s22, %s29
      %p183 = scmp.eq.s32.totalorder %s182, 0
      %s185 = sadd.s32 %s184, 1
      %s186 = scalar_select %p183, %s184, %s185
      %p189 = pneg %p183
      %p190 = scmp.eq.s32.totalorder %s22, 1
      %p191 = por %p189, %p190
      %p192 = scmp.ne.s32.totalorder %s184, %s187
      %p193 = scmp.eq.s32.totalorder %s22, 0
      %p194 = por %p192, %p193
      %p195 = scmp.ne.s32.totalorder %s184, %s187
      %p196 = scmp.eq.s32.totalorder %s27, 1
      %p197 = por %p195, %p196
      %p198 = scmp.ne.s32.totalorder %s187, %s188
      %p199 = scmp.eq.s32.totalorder %s27, 0
      %p200 = por %p198, %p199
      %p201 = scmp.ne.s32.totalorder %s187, %s188
      %p202 = scmp.eq.s32.totalorder %s28, 1
      %p203 = por %p201, %p202
      %p205 = scmp.ne.s32.totalorder %s188, %s204
      %p206 = scmp.eq.s32.totalorder %s28, 0
      %p207 = por %p205, %p206
      %s208 = ssub.s32 %s22, %s29
      %p209 = scmp.eq.s32.totalorder %s208, 0
      %s211 = sadd.s32 %s210, 1
      %s212 = scalar_select %p209, %s210, %s211
      %p215 = pneg %p209
      %p216 = scmp.eq.s32.totalorder %s22, 1
      %p217 = por %p215, %p216
      %p218 = scmp.ne.s32.totalorder %s210, %s213
      %p219 = scmp.eq.s32.totalorder %s22, 0
      %p220 = por %p218, %p219
      %p221 = scmp.ne.s32.totalorder %s210, %s213
      %p222 = scmp.eq.s32.totalorder %s27, 1
      %p223 = por %p221, %p222
      %p224 = scmp.ne.s32.totalorder %s213, %s214
      %p225 = scmp.eq.s32.totalorder %s27, 0
      %p226 = por %p224, %p225
      %p227 = scmp.ne.s32.totalorder %s213, %s214
      %p228 = scmp.eq.s32.totalorder %s28, 1
      %p229 = por %p227, %p228
      %p231 = scmp.ne.s32.totalorder %s214, %s230
      %p232 = scmp.eq.s32.totalorder %s28, 0
      %p233 = por %p231, %p232
      %s234 = ssub.s32 %s22, %s29
      %p235 = scmp.eq.s32.totalorder %s234, 0
      %s237 = sadd.s32 %s236, 1
      %s238 = scalar_select %p235, %s236, %s237
      %p241 = pneg %p235
      %p242 = scmp.eq.s32.totalorder %s22, 1
      %p243 = por %p241, %p242
      %p244 = scmp.ne.s32.totalorder %s236, %s239
      %p245 = scmp.eq.s32.totalorder %s22, 0
      %p246 = por %p244, %p245
      %p247 = scmp.ne.s32.totalorder %s236, %s239
      %p248 = scmp.eq.s32.totalorder %s27, 1
      %p249 = por %p247, %p248
      %p250 = scmp.ne.s32.totalorder %s239, %s240
      %p251 = scmp.eq.s32.totalorder %s27, 0
      %p252 = por %p250, %p251
      %p253 = scmp.ne.s32.totalorder %s239, %s240
      %p254 = scmp.eq.s32.totalorder %s28, 1
      %p255 = por %p253, %p254
      %p257 = scmp.ne.s32.totalorder %s240, %s256
      %p258 = scmp.eq.s32.totalorder %s28, 0
      %p259 = por %p257, %p258
      %s260 = ssub.s32 %s22, %s29
      %p261 = scmp.eq.s32.totalorder %s260, 0
      %s263 = sadd.s32 %s262, 1
      %s264 = scalar_select %p261, %s262, %s263
      %p267 = pneg %p261
      %p268 = scmp.eq.s32.totalorder %s22, 1
      %p269 = por %p267, %p268
      %p270 = scmp.ne.s32.totalorder %s262, %s265
      %p271 = scmp.eq.s32.totalorder %s22, 0
      %p272 = por %p270, %p271
      %p273 = scmp.ne.s32.totalorder %s262, %s265
      %p274 = scmp.eq.s32.totalorder %s27, 1
      %p275 = por %p273, %p274
      %p276 = scmp.ne.s32.totalorder %s265, %s266
      %p277 = scmp.eq.s32.totalorder %s27, 0
      %p278 = por %p276, %p277
      %p279 = scmp.ne.s32.totalorder %s265, %s266
      %p280 = scmp.eq.s32.totalorder %s28, 1
      %p281 = por %p279, %p280
      %p283 = scmp.ne.s32.totalorder %s266, %s282
      %p284 = scmp.eq.s32.totalorder %s28, 0
      %p285 = por %p283, %p284
      %s286 = ssub.s32 %s22, %s29
      %p287 = scmp.eq.s32.totalorder %s286, 0
      %s289 = sadd.s32 %s288, 1
      %s290 = scalar_select %p287, %s288, %s289
      %p293 = pneg %p287
      %p294 = scmp.eq.s32.totalorder %s22, 1
      %p295 = por %p293, %p294
      %p296 = scmp.ne.s32.totalorder %s288, %s291
      %p297 = scmp.eq.s32.totalorder %s22, 0
      %p298 = por %p296, %p297
      %p299 = scmp.ne.s32.totalorder %s288, %s291
      %p300 = scmp.eq.s32.totalorder %s27, 1
      %p301 = por %p299, %p300
      %p302 = scmp.ne.s32.totalorder %s291, %s292
      %p303 = scmp.eq.s32.totalorder %s27, 0
      %p304 = por %p302, %p303
      %p305 = scmp.ne.s32.totalorder %s291, %s292
      %p306 = scmp.eq.s32.totalorder %s28, 1
      %p307 = por %p305, %p306
      %p309 = scmp.ne.s32.totalorder %s292, %s308
      %p310 = scmp.eq.s32.totalorder %s28, 0
      %p311 = por %p309, %p310
      %s312 = ssub.s32 %s22, %s29
      %p313 = scmp.eq.s32.totalorder %s312, 0
      %s315 = sadd.s32 %s314, 1
      %s316 = scalar_select %p313, %s314, %s315
      %p319 = pneg %p313
      %p320 = scmp.eq.s32.totalorder %s22, 1
      %p321 = por %p319, %p320
      %p322 = scmp.ne.s32.totalorder %s314, %s317
      %p323 = scmp.eq.s32.totalorder %s22, 0
      %p324 = por %p322, %p323
      %p325 = scmp.ne.s32.totalorder %s314, %s317
      %p326 = scmp.eq.s32.totalorder %s27, 1
      %p327 = por %p325, %p326
      %p328 = scmp.ne.s32.totalorder %s317, %s318
      %p329 = scmp.eq.s32.totalorder %s27, 0
      %p330 = por %p328, %p329
      %p331 = scmp.ne.s32.totalorder %s317, %s318
      %p332 = scmp.eq.s32.totalorder %s28, 1
      %p333 = por %p331, %p332
      %p335 = scmp.ne.s32.totalorder %s318, %s334
      %p336 = scmp.eq.s32.totalorder %s28, 0
      %p337 = por %p335, %p336
      %s338 = ssub.s32 %s22, %s29
      %p339 = scmp.eq.s32.totalorder %s338, 0
      %s341 = sadd.s32 %s340, 1
      %s342 = scalar_select %p339, %s340, %s341
      %p345 = pneg %p339
      %p346 = scmp.eq.s32.totalorder %s22, 1
      %p347 = por %p345, %p346
      %p348 = scmp.ne.s32.totalorder %s340, %s343
      %p349 = scmp.eq.s32.totalorder %s22, 0
      %p350 = por %p348, %p349
      %p351 = scmp.ne.s32.totalorder %s340, %s343
      %p352 = scmp.eq.s32.totalorder %s27, 1
      %p353 = por %p351, %p352
      %p354 = scmp.ne.s32.totalorder %s343, %s344
      %p355 = scmp.eq.s32.totalorder %s27, 0
      %p356 = por %p354, %p355
      %p357 = scmp.ne.s32.totalorder %s343, %s344
      %p358 = scmp.eq.s32.totalorder %s28, 1
      %p359 = por %p357, %p358
      %p361 = scmp.ne.s32.totalorder %s344, %s360
      %p362 = scmp.eq.s32.totalorder %s28, 0
      %p363 = por %p361, %p362
      %s364 = ssub.s32 %s22, %s29
      %p365 = scmp.eq.s32.totalorder %s364, 0
      %s367 = sadd.s32 %s366, 1
      %s368 = scalar_select %p365, %s366, %s367
      %p371 = pneg %p365
      %p372 = scmp.eq.s32.totalorder %s22, 1
      %p373 = por %p371, %p372
      %p374 = scmp.ne.s32.totalorder %s366, %s369
      %p375 = scmp.eq.s32.totalorder %s22, 0
      %p376 = por %p374, %p375
      %p377 = scmp.ne.s32.totalorder %s366, %s369
      %p378 = scmp.eq.s32.totalorder %s27, 1
      %p379 = por %p377, %p378
      %p380 = scmp.ne.s32.totalorder %s369, %s370
      %p381 = scmp.eq.s32.totalorder %s27, 0
      %p382 = por %p380, %p381
      %p383 = scmp.ne.s32.totalorder %s369, %s370
      %p384 = scmp.eq.s32.totalorder %s28, 1
      %p385 = por %p383, %p384
      %p387 = scmp.ne.s32.totalorder %s370, %s386
      %p388 = scmp.eq.s32.totalorder %s28, 0
      %p389 = por %p387, %p388
      %s391 = sadd.s32 %s390, 1
      %p394 = scmp.eq.s32.totalorder %s22, 1
      %p395 = scmp.ne.s32.totalorder %s390, %s392
      %p396 = scmp.eq.s32.totalorder %s22, 0
      %p397 = por %p395, %p396
      %p398 = scmp.ne.s32.totalorder %s390, %s392
      %p399 = scmp.eq.s32.totalorder %s27, 1
      %p400 = por %p398, %p399
      %p401 = scmp.ne.s32.totalorder %s392, %s393
      %p402 = scmp.eq.s32.totalorder %s27, 0
      %p403 = por %p401, %p402
      %p404 = scmp.ne.s32.totalorder %s392, %s393
      %p405 = scmp.eq.s32.totalorder %s28, 1
      %p406 = por %p404, %p405
      %p408 = scmp.ne.s32.totalorder %s393, %s407
      %p409 = scmp.eq.s32.totalorder %s28, 0
      %p410 = por %p408, %p409
      %p411 = scmp.le.s32.totalorder 1, %s22
      %p412 = scmp.lt.s32.totalorder %s22, 3
      %p413 = pnand %p411, %p412
      %p414 = pneg %p413
      // Predicated region
      $region9: #{transformer_encoder_forward.1} parent=5 // pred_check
        _
      $region10: #{transformer_encoder_forward.1} parent=5 // pred_check_branch
        %416 = sbr.rel (%p413) target = $region12
      $region11: #{transformer_encoder_forward.1} parent=5 // pred_region
        %s417 = ssub.s32 %s22, 1
        // Predicated region
        $region13: #{transformer_encoder_forward.1} parent=11 // pred_check
          %p418 = pneg %p43
        $region14: #{transformer_encoder_forward.1} parent=11 // pred_check_branch
          %420 = sbr.rel (%p418) target = $region16
        $region15: #{transformer_encoder_forward.1} parent=11 // pred_region
          _
        $region16: #{transformer_encoder_forward.1} parent=11 // pred_fallthru
          _
        // Predicated region
        $region17: #{transformer_encoder_forward.1} parent=11 // pred_check
          %p421 = pneg %p64
        $region18: #{transformer_encoder_forward.1} parent=11 // pred_check_branch
          %423 = sbr.rel (%p421) target = $region20
        $region19: #{transformer_encoder_forward.1} parent=11 // pred_region
          _
        $region20: #{transformer_encoder_forward.1} parent=11 // pred_fallthru
          _
        // Predicated region
        $region21: #{transformer_encoder_forward.1} parent=11 // pred_check
          %p424 = pneg %p85
        $region22: #{transformer_encoder_forward.1} parent=11 // pred_check_branch
          %426 = sbr.rel (%p424) target = $region24
        $region23: #{transformer_encoder_forward.1} parent=11 // pred_region
          _
        $region24: #{transformer_encoder_forward.1} parent=11 // pred_fallthru
          _
        // Predicated region
        $region25: #{transformer_encoder_forward.1} parent=11 // pred_check
          %p427 = pneg %p106
        $region26: #{transformer_encoder_forward.1} parent=11 // pred_check_branch
          %429 = sbr.rel (%p427) target = $region28
        $region27: #{transformer_encoder_forward.1} parent=11 // pred_region
          _
        $region28: #{transformer_encoder_forward.1} parent=11 // pred_fallthru
          _
        // Predicated region
        $region29: #{transformer_encoder_forward.1} parent=11 // pred_check
          %p430 = pneg %p127
        $region30: #{transformer_encoder_forward.1} parent=11 // pred_check_branch
          %432 = sbr.rel (%p430) target = $region32
        $region31: #{transformer_encoder_forward.1} parent=11 // pred_region
          _
        $region32: #{transformer_encoder_forward.1} parent=11 // pred_fallthru
          _
        // Predicated region
        $region33: #{transformer_encoder_forward.1} parent=11 // pred_check
          %p433 = pneg %p148
        $region34: #{transformer_encoder_forward.1} parent=11 // pred_check_branch
          %435 = sbr.rel (%p433) target = $region36
        $region35: #{transformer_encoder_forward.1} parent=11 // pred_region
          _
        $region36: #{transformer_encoder_forward.1} parent=11 // pred_fallthru
          _
      $region12: #{transformer_encoder_forward.1} parent=5 // pred_fallthru
        _
      %p436 = scmp.lt.s32.totalorder %s22, 2
      // Predicated region
      $region37: #{transformer_encoder_forward.1} parent=5 // pred_check
        %p437 = pneg %p436
      $region38: #{transformer_encoder_forward.1} parent=5 // pred_check_branch
        %439 = sbr.rel (%p437) target = $region40
      $region39: #{transformer_encoder_forward.1} parent=5 // pred_region
        // Predicated region
        $region41: #{transformer_encoder_forward.1} parent=39 // pred_check
          %p440 = pneg %p168
        $region42: #{transformer_encoder_forward.1} parent=39 // pred_check_branch
          %442 = sbr.rel (%p440) target = $region44
        $region43: #{transformer_encoder_forward.1} parent=39 // pred_region
          %p443 = scmp.lt.s32.totalorder %s22, 1
          %s444 = scalar_select %p443, %s22, 1
          %s445 = scalar_lea.vmem %s6, %s444
        $region44: #{transformer_encoder_forward.1} parent=39 // pred_fallthru
          _
        // Predicated region
        $region45: #{transformer_encoder_forward.1} parent=39 // pred_check
          %p446 = pneg %p194
        $region46: #{transformer_encoder_forward.1} parent=39 // pred_check_branch
          %448 = sbr.rel (%p446) target = $region48
        $region47: #{transformer_encoder_forward.1} parent=39 // pred_region
          %p449 = scmp.lt.s32.totalorder %s22, 1
          %s450 = scalar_select %p449, %s22, 1
          %s451 = scalar_lea.vmem %s7, %s450
        $region48: #{transformer_encoder_forward.1} parent=39 // pred_fallthru
          _
        // Predicated region
        $region49: #{transformer_encoder_forward.1} parent=39 // pred_check
          %p452 = pneg %p220
        $region50: #{transformer_encoder_forward.1} parent=39 // pred_check_branch
          %454 = sbr.rel (%p452) target = $region52
        $region51: #{transformer_encoder_forward.1} parent=39 // pred_region
          %p455 = scmp.lt.s32.totalorder %s22, 1
          %s456 = scalar_select %p455, %s22, 1
          %s457 = smul.addr %s456, 48
          %s458 = smul.addr %s457, 4
          %s459 = scalar_lea.vmem %s8, %s458
        $region52: #{transformer_encoder_forward.1} parent=39 // pred_fallthru
          _
        // Predicated region
        $region53: #{transformer_encoder_forward.1} parent=39 // pred_check
          %p460 = pneg %p246
        $region54: #{transformer_encoder_forward.1} parent=39 // pred_check_branch
          %462 = sbr.rel (%p460) target = $region56
        $region55: #{transformer_encoder_forward.1} parent=39 // pred_region
          %p463 = scmp.lt.s32.totalorder %s22, 1
          %s464 = scalar_select %p463, %s22, 1
          %s465 = scalar_lea.vmem %s9, %s464
        $region56: #{transformer_encoder_forward.1} parent=39 // pred_fallthru
          _
        // Predicated region
        $region57: #{transformer_encoder_forward.1} parent=39 // pred_check
          %p466 = pneg %p272
        $region58: #{transformer_encoder_forward.1} parent=39 // pred_check_branch
          %468 = sbr.rel (%p466) target = $region60
        $region59: #{transformer_encoder_forward.1} parent=39 // pred_region
          %p469 = scmp.lt.s32.totalorder %s22, 1
          %s470 = scalar_select %p469, %s22, 1
          %s471 = scalar_lea.vmem %s10, %s470
        $region60: #{transformer_encoder_forward.1} parent=39 // pred_fallthru
          _
        // Predicated region
        $region61: #{transformer_encoder_forward.1} parent=39 // pred_check
          %p472 = pneg %p298
        $region62: #{transformer_encoder_forward.1} parent=39 // pred_check_branch
          %474 = sbr.rel (%p472) target = $region64
        $region63: #{transformer_encoder_forward.1} parent=39 // pred_region
          %p475 = scmp.lt.s32.totalorder %s22, 1
          %s476 = scalar_select %p475, %s22, 1
          %s477 = smul.addr %s476, 4
          %s478 = smul.addr %s477, 4
          %s479 = scalar_lea.vmem %s11, %s478
        $region64: #{transformer_encoder_forward.1} parent=39 // pred_fallthru
          _
        // Predicated region
        $region65: #{transformer_encoder_forward.1} parent=39 // pred_check
          %p480 = pneg %p324
        $region66: #{transformer_encoder_forward.1} parent=39 // pred_check_branch
          %482 = sbr.rel (%p480) target = $region68
        $region67: #{transformer_encoder_forward.1} parent=39 // pred_region
          %p483 = scmp.lt.s32.totalorder %s22, 1
          %s484 = scalar_select %p483, %s22, 1
          %s485 = scalar_lea.vmem %s12, %s484
        $region68: #{transformer_encoder_forward.1} parent=39 // pred_fallthru
          _
        // Predicated region
        $region69: #{transformer_encoder_forward.1} parent=39 // pred_check
          %p486 = pneg %p350
        $region70: #{transformer_encoder_forward.1} parent=39 // pred_check_branch
          %488 = sbr.rel (%p486) target = $region72
        $region71: #{transformer_encoder_forward.1} parent=39 // pred_region
          %p489 = scmp.lt.s32.totalorder %s22, 1
          %s490 = scalar_select %p489, %s22, 1
          %s491 = smul.addr %s490, 8
          %s492 = smul.addr %s491, 4
          %s493 = scalar_lea.vmem %s13, %s492
        $region72: #{transformer_encoder_forward.1} parent=39 // pred_fallthru
          _
        // Predicated region
        $region73: #{transformer_encoder_forward.1} parent=39 // pred_check
          %p494 = pneg %p376
        $region74: #{transformer_encoder_forward.1} parent=39 // pred_check_branch
          %496 = sbr.rel (%p494) target = $region76
        $region75: #{transformer_encoder_forward.1} parent=39 // pred_region
          %p497 = scmp.lt.s32.totalorder %s22, 1
          %s498 = scalar_select %p497, %s22, 1
          %s499 = scalar_lea.vmem %s14, %s498
        $region76: #{transformer_encoder_forward.1} parent=39 // pred_fallthru
          _
      $region40: #{transformer_encoder_forward.1} parent=5 // pred_fallthru
        _
      %p500 = scmp.le.s32.totalorder 1, %s22
      %p501 = scmp.lt.s32.totalorder %s22, 3
      %p502 = pnand %p500, %p501
      %p503 = pneg %p502
      // Predicated region
      $region77: #{transformer_encoder_forward.1} parent=5 // pred_check
        _
      $region78: #{transformer_encoder_forward.1} parent=5 // pred_check_branch
        %505 = sbr.rel (%p502) target = $region80
      $region79: #{transformer_encoder_forward.1} parent=5 // pred_region
        %s506 = ssub.s32 %s22, 1
        %p507 = pneg %p43
        %p508 = pneg %p40
        %p509 = pneg %p64
        %p510 = pneg %p61
        %p511 = pneg %p85
        %p512 = pneg %p82
        %p513 = pneg %p106
        %p514 = pneg %p103
        %p515 = pneg %p127
        %p516 = pneg %p124
        %p517 = pneg %p148
        %p518 = pneg %p145
        %p519 = scmp.lt.s32.totalorder %s27, 1
        %s520 = scalar_select %p519, %s27, 1
        %s521 = scalar_lea.vmem %s6, %s520
        %p522 = pneg %p174
        %p523 = pneg %p171
        %p524 = scmp.lt.s32.totalorder %s27, 1
        %s525 = scalar_select %p524, %s27, 1
        %s526 = scalar_lea.vmem %s7, %s525
        %p527 = pneg %p200
        %p528 = pneg %p197
        %p529 = scmp.lt.s32.totalorder %s27, 1
        %s530 = scalar_select %p529, %s27, 1
        %s531 = smul.addr %s530, 48
        %s532 = smul.addr %s531, 4
        %s533 = scalar_lea.vmem %s8, %s532
        %p534 = pneg %p226
        %p535 = pneg %p223
        %p536 = scmp.lt.s32.totalorder %s27, 1
        %s537 = scalar_select %p536, %s27, 1
        %s538 = scalar_lea.vmem %s9, %s537
        %p539 = pneg %p252
        %p540 = pneg %p249
        %p541 = scmp.lt.s32.totalorder %s27, 1
        %s542 = scalar_select %p541, %s27, 1
        %s543 = scalar_lea.vmem %s10, %s542
        %p544 = pneg %p278
        %p545 = pneg %p275
        %p546 = scmp.lt.s32.totalorder %s27, 1
        %s547 = scalar_select %p546, %s27, 1
        %s548 = smul.addr %s547, 4
        %s549 = smul.addr %s548, 4
        %s550 = scalar_lea.vmem %s11, %s549
        %p551 = pneg %p304
        %p552 = pneg %p301
        %p553 = scmp.lt.s32.totalorder %s27, 1
        %s554 = scalar_select %p553, %s27, 1
        %s555 = scalar_lea.vmem %s12, %s554
        %p556 = pneg %p330
        %p557 = pneg %p327
        %p558 = scmp.lt.s32.totalorder %s27, 1
        %s559 = scalar_select %p558, %s27, 1
        %s560 = smul.addr %s559, 8
        %s561 = smul.addr %s560, 4
        %s562 = scalar_lea.vmem %s13, %s561
        %p563 = pneg %p356
        %p564 = pneg %p353
        %p565 = scmp.lt.s32.totalorder %s27, 1
        %s566 = scalar_select %p565, %s27, 1
        %s567 = scalar_lea.vmem %s14, %s566
        %p568 = pneg %p382
        %p569 = pneg %p379
        %p570 = pneg %p403
        %p571 = pneg %p400
        %p572 = scmp.lt.s32.totalorder %s27, 1
        %s573 = scalar_select %p572, %s27, 1
        %s574 = scalar_lea.vmem %s6, %s573
        %p575 = scmp.lt.s32.totalorder %s27, 1
        %s576 = scalar_select %p575, %s27, 1
        %s577 = scalar_lea.vmem %s7, %s576
        %p578 = scmp.lt.s32.totalorder %s27, 1
        %s579 = scalar_select %p578, %s27, 1
        %s580 = smul.addr %s579, 48
        %s581 = smul.addr %s580, 4
        %s582 = scalar_lea.vmem %s8, %s581
        %p583 = scmp.lt.s32.totalorder %s27, 1
        %s584 = scalar_select %p583, %s27, 1
        %s585 = scalar_lea.vmem %s9, %s584
        %p586 = scmp.lt.s32.totalorder %s27, 1
        %s587 = scalar_select %p586, %s27, 1
        %s588 = scalar_lea.vmem %s10, %s587
        %p589 = scmp.lt.s32.totalorder %s27, 1
        %s590 = scalar_select %p589, %s27, 1
        %s591 = smul.addr %s590, 4
        %s592 = smul.addr %s591, 4
        %s593 = scalar_lea.vmem %s11, %s592
        %p594 = scmp.lt.s32.totalorder %s27, 1
        %s595 = scalar_select %p594, %s27, 1
        %s596 = scalar_lea.vmem %s12, %s595
        %p597 = scmp.lt.s32.totalorder %s27, 1
        %s598 = scalar_select %p597, %s27, 1
        %s599 = smul.addr %s598, 8
        %s600 = smul.addr %s599, 4
        %s601 = scalar_lea.vmem %s13, %s600
        %p602 = scmp.lt.s32.totalorder %s27, 1
        %s603 = scalar_select %p602, %s27, 1
        %s604 = scalar_lea.vmem %s14, %s603
        %p606 = scmp.eq.s32.totalorder %s27, 0
        // Predicated region
        $region81: #{transformer_encoder_forward.1} parent=79 // pred_check
          %p607 = pneg %p606
        $region82: #{transformer_encoder_forward.1} parent=79 // pred_check_branch
          %609 = sbr.rel (%p607) target = $region84
        $region83: #{transformer_encoder_forward.1} parent=79 // pred_region
          %v610 = vld [vmem:[%s0] sm:$0xff]
          %v611 = vld [vmem:[%s0 + $0x8] sm:$0xff]
          %v612 = vld [vmem:[%s0 + $0x10] sm:$0xff]
          %v613 = vld [vmem:[%s0 + $0x18] sm:$0xff]
          %v614 = vpack.c.bf16 %v611, %v610
          %v615 = vpack.c.bf16 %v613, %v612
          %v616 = vld [vmem:[%s1] sm:$0xf]
          %v617 = vld [vmem:[%s1 + $0x4] sm:$0xf]
          %v618 = vld [vmem:[%s1 + $0x8] sm:$0xf]
          %v619 = vld [vmem:[%s1 + $0xc] sm:$0xf]
          %v620 = vld [vmem:[%s1 + $0x10] sm:$0xf]
          %v621 = vld [vmem:[%s1 + $0x14] sm:$0xf]
          %v622 = vld [vmem:[%s1 + $0x18] sm:$0xf]
          %v623 = vld [vmem:[%s1 + $0x1c] sm:$0xf]
          %v624 = vld [vmem:[%s2] sm:$0x1]
          %v626 = vlaneseq
          %v627 = vshrl.u32 %v626, 7
          %v628 = vsub.s32 0, %v627
          %v629 = vrot.slane %v624, %v628
          %v639 = vunpack.c.l.b16 %v616
          %v640 = vunpack.c.l.b16 %v617
          %v641 = vunpack.c.l.b16 %v618
          %v642 = vunpack.c.l.b16 %v619
          %v643 = vunpack.c.l.b16 %v620
          %v644 = vunpack.c.l.b16 %v621
          %v645 = vunpack.c.l.b16 %v622
          %v646 = vunpack.c.l.b16 %v623
          %v647 = vpack.c.b16 %v640, %v639
          %v648 = vpack.c.b16 %v642, %v641
          %v649 = vpack.c.b16 %v644, %v643
          %v650 = vpack.c.b16 %v646, %v645
          %vm655 = vcmask 523264
          %v657 = vsel %vm655, %v614, 0
          %v660 = vsel %vm655, %v615, 0
          %662 = vmatprep.subr.bf16.mxu0 0
          %663 = vmatpush1.bf16.msra.mxu0 %v647
          %664 = vmatprep.subr.bf16.mxu0 0
          %665 = vmatpush1.bf16.msra.mxu0 %v648
          %666 = vmatprep.subr.bf16.mxu0 0
          %667 = vmatpush1.bf16.msra.mxu0 %v649
          %668 = vmatprep.subr.bf16.mxu0 0
          %669 = vmatpush1.bf16.msra.mxu0 %v650
          %670 = vmatprep.subr.bf16.mxu0 0
          %671 = vmatpush1.bf16.msra.mxu0 0
          %672 = vmatprep.subr.bf16.mxu0 0
          %673 = vmatpush1.bf16.msra.mxu0 0
          %674 = vmatprep.subr.bf16.mxu0 0
          %675 = vmatpush1.bf16.msra.mxu0 0
          %676 = vmatprep.subr.bf16.mxu0 0
          %677 = vmatpush1.bf16.msra.mxu0 0
          %678 = vmatprep.subr.bf16.mxu0 0
          %679 = vmatpush1.bf16.msra.mxu0 0
          %680 = vmatprep.subr.bf16.mxu0 0
          %681 = vmatpush1.bf16.msra.mxu0 0
          %682 = vmatprep.subr.bf16.mxu0 0
          %683 = vmatpush1.bf16.msra.mxu0 0
          %684 = vmatprep.subr.bf16.mxu0 0
          %685 = vmatpush1.bf16.msra.mxu0 0
          %686 = vmatprep.subr.bf16.mxu0 0
          %687 = vmatpush1.bf16.msra.mxu0 0
          %688 = vmatprep.subr.bf16.mxu0 0
          %689 = vmatpush1.bf16.msra.mxu0 0
          %690 = vmatprep.subr.bf16.mxu0 0
          %691 = vmatpush1.bf16.msra.mxu0 0
          %692 = vmatprep.subr.bf16.mxu0 0
          %693 = vmatpush1.bf16.msra.mxu0 0
          %694 = vmatprep.mubr.bf16.mxu0 0
          %695 = vmatmul.mubr.bf16.gmra.mrb[0].mxu0 %v657
          %v696 = vpop.f32.mrb[0].mxu0
          %v697 = vadd.f32 %v629, %v696
          %v698 = vpop.f32.mrb[0].mxu0
          %v699 = vpop.f32.mrb[0].mxu0
          %v700 = vadd.f32 %v629, %v699
          %v701 = vpop.f32.mrb[0].mxu0
          %702 = vmatprep.mubr.bf16.mxu0 0
          %703 = vmatmul.mubr.bf16.gmra.mrb[0].mxu0 %v660
          %v704 = vpop.f32.mrb[0].mxu0
          %v705 = vadd.f32 %v629, %v704
          %v706 = vpop.f32.mrb[0].mxu0
          %v707 = vpop.f32.mrb[0].mxu0
          %v708 = vadd.f32 %v629, %v707
          %v709 = vpop.f32.mrb[0].mxu0
          %710 = vdwg.mxu0
          %v711 = vld [vmem:[%s3] sm:$0xff]
          %v712 = vld [vmem:[%s3 + $0x8] sm:$0xff]
          %v713 = vld [vmem:[%s3 + $0x10] sm:$0xff]
          %v714 = vld [vmem:[%s3 + $0x18] sm:$0xff]
          %v715 = vadd.f32 %v697, %v711
          %v716 = vadd.f32 %v700, %v712
          %v717 = vadd.f32 %v705, %v713
          %v718 = vadd.f32 %v708, %v714
          %vm719 = vcmask 261120
          %720 = vst.msk [vmem:[#allocation2] sm:$0xff] %vm719, %v715
          %721 = vst.msk [vmem:[#allocation2 + $0x8] sm:$0xff] %vm719, %v716
          %722 = vst.msk [vmem:[#allocation2 + $0x10] sm:$0xff] %vm719, %v717
          %723 = vst.msk [vmem:[#allocation2 + $0x18] sm:$0xff] %vm719, %v718
        $region84: #{transformer_encoder_forward.1} parent=79 // pred_fallthru
          _
        %v724 = vld [vmem:[#allocation2] sm:$0xff]
        %v725 = vld [vmem:[#allocation2 + $0x8] sm:$0xff]
        %v726 = vld [vmem:[#allocation2 + $0x10] sm:$0xff]
        %v727 = vld [vmem:[#allocation2 + $0x18] sm:$0xff]
        %v728 = vld [vmem:[%s574] sm:$0x1]
        %v729 = vld [vmem:[%s577] sm:$0x1]
        %vm730 = vcmask 261120
        %v731 = vsel %vm730, %v724, 0.0
        %732 = vadd.xlane.f32.xlu0 %v731
        %v733 = vpop.xlane.xlu0 %732
        %v734 = vsel %vm730, %v725, 0.0
        %735 = vadd.xlane.f32.xlu0 %v734
        %v736 = vpop.xlane.xlu0 %735
        %v737 = vsel %vm730, %v726, 0.0
        %738 = vadd.xlane.f32.xlu0 %v737
        %v739 = vpop.xlane.xlu0 %738
        %v740 = vsel %vm730, %v727, 0.0
        %741 = vadd.xlane.f32.xlu0 %v740
        %v742 = vpop.xlane.xlu0 %741
        %v743 = vrcp.pop 32.0
        %v744 = vmul.f32 %v733, %v743
        %v745 = vmul.f32 %v736, %v743
        %v746 = vmul.f32 %v739, %v743
        %v747 = vmul.f32 %v742, %v743
        %v748 = vmul.f32 %v724, %v724
        %v749 = vmul.f32 %v725, %v725
        %v750 = vmul.f32 %v726, %v726
        %v751 = vmul.f32 %v727, %v727
        %v752 = vsel %vm730, %v748, 0.0
        %753 = vadd.xlane.f32.xlu0 %v752
        %v754 = vpop.xlane.xlu0 %753
        %v755 = vsel %vm730, %v749, 0.0
        %756 = vadd.xlane.f32.xlu0 %v755
        %v757 = vpop.xlane.xlu0 %756
        %v758 = vsel %vm730, %v750, 0.0
        %759 = vadd.xlane.f32.xlu0 %v758
        %v760 = vpop.xlane.xlu0 %759
        %v761 = vsel %vm730, %v751, 0.0
        %762 = vadd.xlane.f32.xlu0 %v761
        %v763 = vpop.xlane.xlu0 %762
        %v764 = vmul.f32 %v754, %v743
        %v765 = vmul.f32 %v757, %v743
        %v766 = vmul.f32 %v760, %v743
        %v767 = vmul.f32 %v763, %v743
        %v768 = vmul.f32 %v744, %v744
        %v769 = vmul.f32 %v745, %v745
        %v770 = vmul.f32 %v746, %v746
        %v771 = vmul.f32 %v747, %v747
        %v772 = vsub.f32 %v764, %v768
        %v773 = vsub.f32 %v765, %v769
        %v774 = vsub.f32 %v766, %v770
        %v775 = vsub.f32 %v767, %v771
        %v776 = vsub.f32 %v724, %v744
        %v777 = vsub.f32 %v725, %v745
        %v778 = vsub.f32 %v726, %v746
        %v779 = vsub.f32 %v727, %v747
        %v780 = vadd.f32 %v772, 1e-05
        %v781 = vadd.f32 %v773, 1e-05
        %v782 = vadd.f32 %v774, 1e-05
        %v783 = vadd.f32 %v775, 1e-05
        %v784 = vrsqrt.pop %v780
        %v785 = vrsqrt.pop %v781
        %v786 = vrsqrt.pop %v782
        %v787 = vrsqrt.pop %v783
        %v788 = vmul.f32 %v776, %v784
        %v789 = vmul.f32 %v777, %v785
        %v790 = vmul.f32 %v778, %v786
        %v791 = vmul.f32 %v779, %v787
        %v793 = vlaneseq
        %v794 = vshrl.u32 %v793, 7
        %v795 = vsub.s32 0, %v794
        %v796 = vrot.slane %v728, %v795
        %v798 = vmul.f32 %v788, %v796
        %v799 = vmul.f32 %v789, %v796
        %v800 = vmul.f32 %v790, %v796
        %v801 = vmul.f32 %v791, %v796
        %v803 = vlaneseq
        %v804 = vshrl.u32 %v803, 7
        %v805 = vsub.s32 0, %v804
        %v806 = vrot.slane %v729, %v805
        %v808 = vadd.f32 %v798, %v806
        %v809 = vadd.f32 %v799, %v806
        %v810 = vadd.f32 %v800, %v806
        %v811 = vadd.f32 %v801, %v806
        %v812 = vpack.c.bf16 %v809, %v808
        %v813 = vpack.c.bf16 %v811, %v810
        %v814 = vld [vmem:[%s582] sm:$0xf]
        %v815 = vld [vmem:[%s582 + $0x4] sm:$0xf]
        %v816 = vld [vmem:[%s582 + $0x8] sm:$0xf]
        %v817 = vld [vmem:[%s582 + $0xc] sm:$0xf]
        %v818 = vld [vmem:[%s582 + $0x10] sm:$0xf]
        %v819 = vld [vmem:[%s582 + $0x14] sm:$0xf]
        %v820 = vld [vmem:[%s582 + $0x18] sm:$0xf]
        %v821 = vld [vmem:[%s582 + $0x1c] sm:$0xf]
        %v822 = vld [vmem:[%s582 + $0x20] sm:$0xf]
        %v823 = vld [vmem:[%s582 + $0x24] sm:$0xf]
        %v824 = vld [vmem:[%s582 + $0x28] sm:$0xf]
        %v825 = vld [vmem:[%s582 + $0x2c] sm:$0xf]
        %v826 = vld [vmem:[%s582 + $0x30] sm:$0xf]
        %v827 = vld [vmem:[%s582 + $0x34] sm:$0xf]
        %v828 = vld [vmem:[%s582 + $0x38] sm:$0xf]
        %v829 = vld [vmem:[%s582 + $0x3c] sm:$0xf]
        %v830 = vld [vmem:[%s582 + $0x40] sm:$0xf]
        %v831 = vld [vmem:[%s582 + $0x44] sm:$0xf]
        %v832 = vld [vmem:[%s582 + $0x48] sm:$0xf]
        %v833 = vld [vmem:[%s582 + $0x4c] sm:$0xf]
        %v834 = vld [vmem:[%s582 + $0x50] sm:$0xf]
        %v835 = vld [vmem:[%s582 + $0x54] sm:$0xf]
        %v836 = vld [vmem:[%s582 + $0x58] sm:$0xf]
        %v837 = vld [vmem:[%s582 + $0x5c] sm:$0xf]
        %v838 = vld [vmem:[%s582 + $0x60] sm:$0xf]
        %v839 = vld [vmem:[%s582 + $0x64] sm:$0xf]
        %v840 = vld [vmem:[%s582 + $0x68] sm:$0xf]
        %v841 = vld [vmem:[%s582 + $0x6c] sm:$0xf]
        %v842 = vld [vmem:[%s582 + $0x70] sm:$0xf]
        %v843 = vld [vmem:[%s582 + $0x74] sm:$0xf]
        %v844 = vld [vmem:[%s582 + $0x78] sm:$0xf]
        %v845 = vld [vmem:[%s582 + $0x7c] sm:$0xf]
        %v846 = vld [vmem:[%s582 + $0x80] sm:$0xf]
        %v847 = vld [vmem:[%s582 + $0x84] sm:$0xf]
        %v848 = vld [vmem:[%s582 + $0x88] sm:$0xf]
        %v849 = vld [vmem:[%s582 + $0x8c] sm:$0xf]
        %v850 = vld [vmem:[%s582 + $0x90] sm:$0xf]
        %v851 = vld [vmem:[%s582 + $0x94] sm:$0xf]
        %v852 = vld [vmem:[%s582 + $0x98] sm:$0xf]
        %v853 = vld [vmem:[%s582 + $0x9c] sm:$0xf]
        %v854 = vld [vmem:[%s582 + $0xa0] sm:$0xf]
        %v855 = vld [vmem:[%s582 + $0xa4] sm:$0xf]
        %v856 = vld [vmem:[%s582 + $0xa8] sm:$0xf]
        %v857 = vld [vmem:[%s582 + $0xac] sm:$0xf]
        %v858 = vld [vmem:[%s582 + $0xb0] sm:$0xf]
        %v859 = vld [vmem:[%s582 + $0xb4] sm:$0xf]
        %v860 = vld [vmem:[%s582 + $0xb8] sm:$0xf]
        %v861 = vld [vmem:[%s582 + $0xbc] sm:$0xf]
        %v866 = vunpack.c.l.b16 %v814
        %v867 = vunpack.c.l.b16 %v815
        %v868 = vunpack.c.l.b16 %v816
        %v869 = vunpack.c.l.b16 %v817
        %v870 = vpack.c.b16 %v867, %v866
        %v871 = vpack.c.b16 %v869, %v868
        %v875 = vsel %vm730, %v812, 0
        %v878 = vsel %vm730, %v813, 0
        %880 = vmatprep.subr.bf16.mxu0 0
        %881 = vmatpush1.bf16.msra.mxu0 %v870
        %882 = vmatprep.subr.bf16.mxu0 0
        %883 = vmatpush1.bf16.msra.mxu0 %v871
        %884 = vmatprep.subr.bf16.mxu0 0
        %885 = vmatpush1.bf16.msra.mxu0 0
        %886 = vmatprep.subr.bf16.mxu0 0
        %887 = vmatpush1.bf16.msra.mxu0 0
        %888 = vmatprep.subr.bf16.mxu0 0
        %889 = vmatpush1.bf16.msra.mxu0 0
        %890 = vmatprep.subr.bf16.mxu0 0
        %891 = vmatpush1.bf16.msra.mxu0 0
        %892 = vmatprep.subr.bf16.mxu0 0
        %893 = vmatpush1.bf16.msra.mxu0 0
        %894 = vmatprep.subr.bf16.mxu0 0
        %895 = vmatpush1.bf16.msra.mxu0 0
        %896 = vmatprep.subr.bf16.mxu0 0
        %897 = vmatpush1.bf16.msra.mxu0 0
        %898 = vmatprep.subr.bf16.mxu0 0
        %899 = vmatpush1.bf16.msra.mxu0 0
        %900 = vmatprep.subr.bf16.mxu0 0
        %901 = vmatpush1.bf16.msra.mxu0 0
        %902 = vmatprep.subr.bf16.mxu0 0
        %903 = vmatpush1.bf16.msra.mxu0 0
        %904 = vmatprep.subr.bf16.mxu0 0
        %905 = vmatpush1.bf16.msra.mxu0 0
        %906 = vmatprep.subr.bf16.mxu0 0
        %907 = vmatpush1.bf16.msra.mxu0 0
        %908 = vmatprep.subr.bf16.mxu0 0
        %909 = vmatpush1.bf16.msra.mxu0 0
        %910 = vmatprep.subr.bf16.mxu0 0
        %911 = vmatpush1.bf16.msra.mxu0 0
        %912 = vmatprep.mubr.bf16.mxu0 0
        %913 = vmatmul.mubr.bf16.gmra.mrb[0].mxu0 %v875
        %v914 = vpop.f32.mrb[0].mxu0
        %v915 = vadd.f32 0.0, %v914
        %v916 = vpop.f32.mrb[0].mxu0
        %v917 = vpop.f32.mrb[0].mxu0
        %v918 = vadd.f32 0.0, %v917
        %v919 = vpop.f32.mrb[0].mxu0
        %920 = vmatprep.mubr.bf16.mxu0 0
        %921 = vmatmul.mubr.bf16.gmra.mrb[0].mxu0 %v878
        %v922 = vpop.f32.mrb[0].mxu0
        %v923 = vadd.f32 0.0, %v922
        %v924 = vpop.f32.mrb[0].mxu0
        %v925 = vpop.f32.mrb[0].mxu0
        %v926 = vadd.f32 0.0, %v925
        %v927 = vpop.f32.mrb[0].mxu0
        %928 = vdwg.mxu0
        %v933 = vunpack.c.l.b16 %v818
        %v934 = vunpack.c.l.b16 %v819
        %v935 = vunpack.c.l.b16 %v820
        %v936 = vunpack.c.l.b16 %v821
        %v937 = vpack.c.b16 %v934, %v933
        %v938 = vpack.c.b16 %v936, %v935
        %941 = vmatprep.subr.bf16.mxu0 0
        %942 = vmatpush1.bf16.msra.mxu0 %v937
        %943 = vmatprep.subr.bf16.mxu0 0
        %944 = vmatpush1.bf16.msra.mxu0 %v938
        %945 = vmatprep.subr.bf16.mxu0 0
        %946 = vmatpush1.bf16.msra.mxu0 0
        %947 = vmatprep.subr.bf16.mxu0 0
        %948 = vmatpush1.bf16.msra.mxu0 0
        %949 = vmatprep.subr.bf16.mxu0 0
        %950 = vmatpush1.bf16.msra.mxu0 0
        %951 = vmatprep.subr.bf16.mxu0 0
        %952 = vmatpush1.bf16.msra.mxu0 0
        %953 = vmatprep.subr.bf16.mxu0 0
        %954 = vmatpush1.bf16.msra.mxu0 0
        %955 = vmatprep.subr.bf16.mxu0 0
        %956 = vmatpush1.bf16.msra.mxu0 0
        %957 = vmatprep.subr.bf16.mxu0 0
        %958 = vmatpush1.bf16.msra.mxu0 0
        %959 = vmatprep.subr.bf16.mxu0 0
        %960 = vmatpush1.bf16.msra.mxu0 0
        %961 = vmatprep.subr.bf16.mxu0 0
        %962 = vmatpush1.bf16.msra.mxu0 0
        %963 = vmatprep.subr.bf16.mxu0 0
        %964 = vmatpush1.bf16.msra.mxu0 0
        %965 = vmatprep.subr.bf16.mxu0 0
        %966 = vmatpush1.bf16.msra.mxu0 0
        %967 = vmatprep.subr.bf16.mxu0 0
        %968 = vmatpush1.bf16.msra.mxu0 0
        %969 = vmatprep.subr.bf16.mxu0 0
        %970 = vmatpush1.bf16.msra.mxu0 0
        %971 = vmatprep.subr.bf16.mxu0 0
        %972 = vmatpush1.bf16.msra.mxu0 0
        %973 = vmatprep.mubr.bf16.mxu0 0
        %974 = vmatmul.mubr.bf16.gmra.mrb[0].mxu0 %v875
        %v975 = vpop.f32.mrb[0].mxu0
        %v976 = vadd.f32 0.0, %v975
        %v977 = vpop.f32.mrb[0].mxu0
        %v978 = vpop.f32.mrb[0].mxu0
        %v979 = vadd.f32 0.0, %v978
        %v980 = vpop.f32.mrb[0].mxu0
        %981 = vmatprep.mubr.bf16.mxu0 0
        %982 = vmatmul.mubr.bf16.gmra.mrb[0].mxu0 %v878
        %v983 = vpop.f32.mrb[0].mxu0
        %v984 = vadd.f32 0.0, %v983
        %v985 = vpop.f32.mrb[0].mxu0
        %v986 = vpop.f32.mrb[0].mxu0
        %v987 = vadd.f32 0.0, %v986
        %v988 = vpop.f32.mrb[0].mxu0
        %989 = vdwg.mxu0
        %v994 = vunpack.c.l.b16 %v822
        %v995 = vunpack.c.l.b16 %v823
        %v996 = vunpack.c.l.b16 %v824
        %v997 = vunpack.c.l.b16 %v825
        %v998 = vpack.c.b16 %v995, %v994
        %v999 = vpack.c.b16 %v997, %v996
        %1002 = vmatprep.subr.bf16.mxu0 0
        %1003 = vmatpush1.bf16.msra.mxu0 %v998
        %1004 = vmatprep.subr.bf16.mxu0 0
        %1005 = vmatpush1.bf16.msra.mxu0 %v999
        %1006 = vmatprep.subr.bf16.mxu0 0
        %1007 = vmatpush1.bf16.msra.mxu0 0
        %1008 = vmatprep.subr.bf16.mxu0 0
        %1009 = vmatpush1.bf16.msra.mxu0 0
        %1010 = vmatprep.subr.bf16.mxu0 0
        %1011 = vmatpush1.bf16.msra.mxu0 0
        %1012 = vmatprep.subr.bf16.mxu0 0
        %1013 = vmatpush1.bf16.msra.mxu0 0
        %1014 = vmatprep.subr.bf16.mxu0 0
        %1015 = vmatpush1.bf16.msra.mxu0 0
        %1016 = vmatprep.subr.bf16.mxu0 0
        %1017 = vmatpush1.bf16.msra.mxu0 0
        %1018 = vmatprep.subr.bf16.mxu0 0
        %1019 = vmatpush1.bf16.msra.mxu0 0
        %1020 = vmatprep.subr.bf16.mxu0 0
        %1021 = vmatpush1.bf16.msra.mxu0 0
        %1022 = vmatprep.subr.bf16.mxu0 0
        %1023 = vmatpush1.bf16.msra.mxu0 0
        %1024 = vmatprep.subr.bf16.mxu0 0
        %1025 = vmatpush1.bf16.msra.mxu0 0
        %1026 = vmatprep.subr.bf16.mxu0 0
        %1027 = vmatpush1.bf16.msra.mxu0 0
        %1028 = vmatprep.subr.bf16.mxu0 0
        %1029 = vmatpush1.bf16.msra.mxu0 0
        %1030 = vmatprep.subr.bf16.mxu0 0
        %1031 = vmatpush1.bf16.msra.mxu0 0
        %1032 = vmatprep.subr.bf16.mxu0 0
        %1033 = vmatpush1.bf16.msra.mxu0 0
        %1034 = vmatprep.mubr.bf16.mxu0 0
        %1035 = vmatmul.mubr.bf16.gmra.mrb[0].mxu0 %v875
        %v1036 = vpop.f32.mrb[0].mxu0
        %v1037 = vadd.f32 0.0, %v1036
        %v1038 = vpop.f32.mrb[0].mxu0
        %v1039 = vpop.f32.mrb[0].mxu0
        %v1040 = vadd.f32 0.0, %v1039
        %v1041 = vpop.f32.mrb[0].mxu0
        %1042 = vmatprep.mubr.bf16.mxu0 0
        %1043 = vmatmul.mubr.bf16.gmra.mrb[0].mxu0 %v878
        %v1044 = vpop.f32.mrb[0].mxu0
        %v1045 = vadd.f32 0.0, %v1044
        %v1046 = vpop.f32.mrb[0].mxu0
        %v1047 = vpop.f32.mrb[0].mxu0
        %v1048 = vadd.f32 0.0, %v1047
        %v1049 = vpop.f32.mrb[0].mxu0
        %1050 = vdwg.mxu0
        %v1055 = vunpack.c.l.b16 %v826
        %v1056 = vunpack.c.l.b16 %v827
        %v1057 = vunpack.c.l.b16 %v828
        %v1058 = vunpack.c.l.b16 %v829
        %v1059 = vpack.c.b16 %v1056, %v1055
        %v1060 = vpack.c.b16 %v1058, %v1057
        %1063 = vmatprep.subr.bf16.mxu0 0
        %1064 = vmatpush1.bf16.msra.mxu0 %v1059
        %1065 = vmatprep.subr.bf16.mxu0 0
        %1066 = vmatpush1.bf16.msra.mxu0 %v1060
        %1067 = vmatprep.subr.bf16.mxu0 0
        %1068 = vmatpush1.bf16.msra.mxu0 0
        %1069 = vmatprep.subr.bf16.mxu0 0
        %1070 = vmatpush1.bf16.msra.mxu0 0
        %1071 = vmatprep.subr.bf16.mxu0 0
        %1072 = vmatpush1.bf16.msra.mxu0 0
        %1073 = vmatprep.subr.bf16.mxu0 0
        %1074 = vmatpush1.bf16.msra.mxu0 0
        %1075 = vmatprep.subr.bf16.mxu0 0
        %1076 = vmatpush1.bf16.msra.mxu0 0
        %1077 = vmatprep.subr.bf16.mxu0 0
        %1078 = vmatpush1.bf16.msra.mxu0 0
        %1079 = vmatprep.subr.bf16.mxu0 0
        %1080 = vmatpush1.bf16.msra.mxu0 0
        %1081 = vmatprep.subr.bf16.mxu0 0
        %1082 = vmatpush1.bf16.msra.mxu0 0
        %1083 = vmatprep.subr.bf16.mxu0 0
        %1084 = vmatpush1.bf16.msra.mxu0 0
        %1085 = vmatprep.subr.bf16.mxu0 0
        %1086 = vmatpush1.bf16.msra.mxu0 0
        %1087 = vmatprep.subr.bf16.mxu0 0
        %1088 = vmatpush1.bf16.msra.mxu0 0
        %1089 = vmatprep.subr.bf16.mxu0 0
        %1090 = vmatpush1.bf16.msra.mxu0 0
        %1091 = vmatprep.subr.bf16.mxu0 0
        %1092 = vmatpush1.bf16.msra.mxu0 0
        %1093 = vmatprep.subr.bf16.mxu0 0
        %1094 = vmatpush1.bf16.msra.mxu0 0
        %1095 = vmatprep.mubr.bf16.mxu0 0
        %1096 = vmatmul.mubr.bf16.gmra.mrb[0].mxu0 %v875
        %v1097 = vpop.f32.mrb[0].mxu0
        %v1098 = vadd.f32 0.0, %v1097
        %v1099 = vpop.f32.mrb[0].mxu0
        %v1100 = vpop.f32.mrb[0].mxu0
        %v1101 = vadd.f32 0.0, %v1100
        %v1102 = vpop.f32.mrb[0].mxu0
        %1103 = vmatprep.mubr.bf16.mxu0 0
        %1104 = vmatmul.mubr.bf16.gmra.mrb[0].mxu0 %v878
        %v1105 = vpop.f32.mrb[0].mxu0
        %v1106 = vadd.f32 0.0, %v1105
        %v1107 = vpop.f32.mrb[0].mxu0
        %v1108 = vpop.f32.mrb[0].mxu0
        %v1109 = vadd.f32 0.0, %v1108
        %v1110 = vpop.f32.mrb[0].mxu0
        %1111 = vdwg.mxu0
        %v1116 = vunpack.c.l.b16 %v830
        %v1117 = vunpack.c.l.b16 %v831
        %v1118 = vunpack.c.l.b16 %v832
        %v1119 = vunpack.c.l.b16 %v833
        %v1120 = vpack.c.b16 %v1117, %v1116
        %v1121 = vpack.c.b16 %v1119, %v1118
        %1124 = vmatprep.subr.bf16.mxu0 0
        %1125 = vmatpush1.bf16.msra.mxu0 %v1120
        %1126 = vmatprep.subr.bf16.mxu0 0
        %1127 = vmatpush1.bf16.msra.mxu0 %v1121
        %1128 = vmatprep.subr.bf16.mxu0 0
        %1129 = vmatpush1.bf16.msra.mxu0 0
        %1130 = vmatprep.subr.bf16.mxu0 0
        %1131 = vmatpush1.bf16.msra.mxu0 0
        %1132 = vmatprep.subr.bf16.mxu0 0
        %1133 = vmatpush1.bf16.msra.mxu0 0
        %1134 = vmatprep.subr.bf16.mxu0 0
        %1135 = vmatpush1.bf16.msra.mxu0 0
        %1136 = vmatprep.subr.bf16.mxu0 0
        %1137 = vmatpush1.bf16.msra.mxu0 0
        %1138 = vmatprep.subr.bf16.mxu0 0
        %1139 = vmatpush1.bf16.msra.mxu0 0
        %1140 = vmatprep.subr.bf16.mxu0 0
        %1141 = vmatpush1.bf16.msra.mxu0 0
        %1142 = vmatprep.subr.bf16.mxu0 0
        %1143 = vmatpush1.bf16.msra.mxu0 0
        %1144 = vmatprep.subr.bf16.mxu0 0
        %1145 = vmatpush1.bf16.msra.mxu0 0
        %1146 = vmatprep.subr.bf16.mxu0 0
        %1147 = vmatpush1.bf16.msra.mxu0 0
        %1148 = vmatprep.subr.bf16.mxu0 0
        %1149 = vmatpush1.bf16.msra.mxu0 0
        %1150 = vmatprep.subr.bf16.mxu0 0
        %1151 = vmatpush1.bf16.msra.mxu0 0
        %1152 = vmatprep.subr.bf16.mxu0 0
        %1153 = vmatpush1.bf16.msra.mxu0 0
        %1154 = vmatprep.subr.bf16.mxu0 0
        %1155 = vmatpush1.bf16.msra.mxu0 0
        %1156 = vmatprep.mubr.bf16.mxu0 0
        %1157 = vmatmul.mubr.bf16.gmra.mrb[0].mxu0 %v875
        %v1158 = vpop.f32.mrb[0].mxu0
        %v1159 = vadd.f32 0.0, %v1158
        %v1160 = vpop.f32.mrb[0].mxu0
        %v1161 = vpop.f32.mrb[0].mxu0
        %v1162 = vadd.f32 0.0, %v1161
        %v1163 = vpop.f32.mrb[0].mxu0
        %1164 = vmatprep.mubr.bf16.mxu0 0
        %1165 = vmatmul.mubr.bf16.gmra.mrb[0].mxu0 %v878
        %v1166 = vpop.f32.mrb[0].mxu0
        %v1167 = vadd.f32 0.0, %v1166
        %v1168 = vpop.f32.mrb[0].mxu0
        %v1169 = vpop.f32.mrb[0].mxu0
        %v1170 = vadd.f32 0.0, %v1169
        %v1171 = vpop.f32.mrb[0].mxu0
        %1172 = vdwg.mxu0
        %v1177 = vunpack.c.l.b16 %v834
        %v1178 = vunpack.c.l.b16 %v835
        %v1179 = vunpack.c.l.b16 %v836
        %v1180 = vunpack.c.l.b16 %v837
        %v1181 = vpack.c.b16 %v1178, %v1177
        %v1182 = vpack.c.b16 %v1180, %v1179
        %1185 = vmatprep.subr.bf16.mxu0 0
        %1186 = vmatpush1.bf16.msra.mxu0 %v1181
        %1187 = vmatprep.subr.bf16.mxu0 0
        %1188 = vmatpush1.bf16.msra.mxu0 %v1182
        %1189 = vmatprep.subr.bf16.mxu0 0
        %1190 = vmatpush1.bf16.msra.mxu0 0
        %1191 = vmatprep.subr.bf16.mxu0 0
        %1192 = vmatpush1.bf16.msra.mxu0 0
        %1193 = vmatprep.subr.bf16.mxu0 0
        %1194 = vmatpush1.bf16.msra.mxu0 0
        %1195 = vmatprep.subr.bf16.mxu0 0
        %1196 = vmatpush1.bf16.msra.mxu0 0
        %1197 = vmatprep.subr.bf16.mxu0 0
        %1198 = vmatpush1.bf16.msra.mxu0 0
        %1199 = vmatprep.subr.bf16.mxu0 0
        %1200 = vmatpush1.bf16.msra.mxu0 0
        %1201 = vmatprep.subr.bf16.mxu0 0
        %1202 = vmatpush1.bf16.msra.mxu0 0
        %1203 = vmatprep.subr.bf16.mxu0 0
        %1204 = vmatpush1.bf16.msra.mxu0 0
        %1205 = vmatprep.subr.bf16.mxu0 0
        %1206 = vmatpush1.bf16.msra.mxu0 0
        %1207 = vmatprep.subr.bf16.mxu0 0
        %1208 = vmatpush1.bf16.msra.mxu0 0
        %1209 = vmatprep.subr.bf16.mxu0 0
        %1210 = vmatpush1.bf16.msra.mxu0 0
        %1211 = vmatprep.subr.bf16.mxu0 0
        %1212 = vmatpush1.bf16.msra.mxu0 0
        %1213 = vmatprep.subr.bf16.mxu0 0
        %1214 = vmatpush1.bf16.msra.mxu0 0
        %1215 = vmatprep.subr.bf16.mxu0 0
        %1216 = vmatpush1.bf16.msra.mxu0 0
        %1217 = vmatprep.mubr.bf16.mxu0 0
        %1218 = vmatmul.mubr.bf16.gmra.mrb[0].mxu0 %v875
        %v1219 = vpop.f32.mrb[0].mxu0
        %v1220 = vadd.f32 0.0, %v1219
        %v1221 = vpop.f32.mrb[0].mxu0
        %v1222 = vpop.f32.mrb[0].mxu0
        %v1223 = vadd.f32 0.0, %v1222
        %v1224 = vpop.f32.mrb[0].mxu0
        %1225 = vmatprep.mubr.bf16.mxu0 0
        %1226 = vmatmul.mubr.bf16.gmra.mrb[0].mxu0 %v878
        %v1227 = vpop.f32.mrb[0].mxu0
        %v1228 = vadd.f32 0.0, %v1227
        %v1229 = vpop.f32.mrb[0].mxu0
        %v1230 = vpop.f32.mrb[0].mxu0
        %v1231 = vadd.f32 0.0, %v1230
        %v1232 = vpop.f32.mrb[0].mxu0
        %1233 = vdwg.mxu0
        %v1238 = vunpack.c.l.b16 %v838
        %v1239 = vunpack.c.l.b16 %v839
        %v1240 = vunpack.c.l.b16 %v840
        %v1241 = vunpack.c.l.b16 %v841
        %v1242 = vpack.c.b16 %v1239, %v1238
        %v1243 = vpack.c.b16 %v1241, %v1240
        %1246 = vmatprep.subr.bf16.mxu0 0
        %1247 = vmatpush1.bf16.msra.mxu0 %v1242
        %1248 = vmatprep.subr.bf16.mxu0 0
        %1249 = vmatpush1.bf16.msra.mxu0 %v1243
        %1250 = vmatprep.subr.bf16.mxu0 0
        %1251 = vmatpush1.bf16.msra.mxu0 0
        %1252 = vmatprep.subr.bf16.mxu0 0
        %1253 = vmatpush1.bf16.msra.mxu0 0
        %1254 = vmatprep.subr.bf16.mxu0 0
        %1255 = vmatpush1.bf16.msra.mxu0 0
        %1256 = vmatprep.subr.bf16.mxu0 0
        %1257 = vmatpush1.bf16.msra.mxu0 0
        %1258 = vmatprep.subr.bf16.mxu0 0
        %1259 = vmatpush1.bf16.msra.mxu0 0
        %1260 = vmatprep.subr.bf16.mxu0 0
        %1261 = vmatpush1.bf16.msra.mxu0 0
        %1262 = vmatprep.subr.bf16.mxu0 0
        %1263 = vmatpush1.bf16.msra.mxu0 0
        %1264 = vmatprep.subr.bf16.mxu0 0
        %1265 = vmatpush1.bf16.msra.mxu0 0
        %1266 = vmatprep.subr.bf16.mxu0 0
        %1267 = vmatpush1.bf16.msra.mxu0 0
        %1268 = vmatprep.subr.bf16.mxu0 0
        %1269 = vmatpush1.bf16.msra.mxu0 0
        %1270 = vmatprep.subr.bf16.mxu0 0
        %1271 = vmatpush1.bf16.msra.mxu0 0
        %1272 = vmatprep.subr.bf16.mxu0 0
        %1273 = vmatpush1.bf16.msra.mxu0 0
        %1274 = vmatprep.subr.bf16.mxu0 0
        %1275 = vmatpush1.bf16.msra.mxu0 0
        %1276 = vmatprep.subr.bf16.mxu0 0
        %1277 = vmatpush1.bf16.msra.mxu0 0
        %1278 = vmatprep.mubr.bf16.mxu0 0
        %1279 = vmatmul.mubr.bf16.gmra.mrb[0].mxu0 %v875
        %v1280 = vpop.f32.mrb[0].mxu0
        %v1281 = vadd.f32 0.0, %v1280
        %v1282 = vpop.f32.mrb[0].mxu0
        %v1283 = vpop.f32.mrb[0].mxu0
        %v1284 = vadd.f32 0.0, %v1283
        %v1285 = vpop.f32.mrb[0].mxu0
        %1286 = vmatprep.mubr.bf16.mxu0 0
        %1287 = vmatmul.mubr.bf16.gmra.mrb[0].mxu0 %v878
        %v1288 = vpop.f32.mrb[0].mxu0
        %v1289 = vadd.f32 0.0, %v1288
        %v1290 = vpop.f32.mrb[0].mxu0
        %v1291 = vpop.f32.mrb[0].mxu0
        %v1292 = vadd.f32 0.0, %v1291
        %v1293 = vpop.f32.mrb[0].mxu0
        %1294 = vdwg.mxu0
        %v1299 = vunpack.c.l.b16 %v842
        %v1300 = vunpack.c.l.b16 %v843
        %v1301 = vunpack.c.l.b16 %v844
        %v1302 = vunpack.c.l.b16 %v845
        %v1303 = vpack.c.b16 %v1300, %v1299
        %v1304 = vpack.c.b16 %v1302, %v1301
        %1307 = vmatprep.subr.bf16.mxu0 0
        %1308 = vmatpush1.bf16.msra.mxu0 %v1303
        %1309 = vmatprep.subr.bf16.mxu0 0
        %1310 = vmatpush1.bf16.msra.mxu0 %v1304
        %1311 = vmatprep.subr.bf16.mxu0 0
        %1312 = vmatpush1.bf16.msra.mxu0 0
        %1313 = vmatprep.subr.bf16.mxu0 0
        %1314 = vmatpush1.bf16.msra.mxu0 0
        %1315 = vmatprep.subr.bf16.mxu0 0
        %1316 = vmatpush1.bf16.msra.mxu0 0
        %1317 = vmatprep.subr.bf16.mxu0 0
        %1318 = vmatpush1.bf16.msra.mxu0 0
        %1319 = vmatprep.subr.bf16.mxu0 0
        %1320 = vmatpush1.bf16.msra.mxu0 0
        %1321 = vmatprep.subr.bf16.mxu0 0
        %1322 = vmatpush1.bf16.msra.mxu0 0
        %1323 = vmatprep.subr.bf16.mxu0 0
        %1324 = vmatpush1.bf16.msra.mxu0 0
        %1325 = vmatprep.subr.bf16.mxu0 0
        %1326 = vmatpush1.bf16.msra.mxu0 0
        %1327 = vmatprep.subr.bf16.mxu0 0
        %1328 = vmatpush1.bf16.msra.mxu0 0
        %1329 = vmatprep.subr.bf16.mxu0 0
        %1330 = vmatpush1.bf16.msra.mxu0 0
        %1331 = vmatprep.subr.bf16.mxu0 0
        %1332 = vmatpush1.bf16.msra.mxu0 0
        %1333 = vmatprep.subr.bf16.mxu0 0
        %1334 = vmatpush1.bf16.msra.mxu0 0
        %1335 = vmatprep.subr.bf16.mxu0 0
        %1336 = vmatpush1.bf16.msra.mxu0 0
        %1337 = vmatprep.subr.bf16.mxu0 0
        %1338 = vmatpush1.bf16.msra.mxu0 0
        %1339 = vmatprep.mubr.bf16.mxu0 0
        %1340 = vmatmul.mubr.bf16.gmra.mrb[0].mxu0 %v875
        %v1341 = vpop.f32.mrb[0].mxu0
        %v1342 = vadd.f32 0.0, %v1341
        %v1343 = vpop.f32.mrb[0].mxu0
        %v1344 = vpop.f32.mrb[0].mxu0
        %v1345 = vadd.f32 0.0, %v1344
        %v1346 = vpop.f32.mrb[0].mxu0
        %1347 = vmatprep.mubr.bf16.mxu0 0
        %1348 = vmatmul.mubr.bf16.gmra.mrb[0].mxu0 %v878
        %v1349 = vpop.f32.mrb[0].mxu0
        %v1350 = vadd.f32 0.0, %v1349
        %v1351 = vpop.f32.mrb[0].mxu0
        %v1352 = vpop.f32.mrb[0].mxu0
        %v1353 = vadd.f32 0.0, %v1352
        %v1354 = vpop.f32.mrb[0].mxu0
        %1355 = vdwg.mxu0
        %v1360 = vunpack.c.l.b16 %v846
        %v1361 = vunpack.c.l.b16 %v847
        %v1362 = vunpack.c.l.b16 %v848
        %v1363 = vunpack.c.l.b16 %v849
        %v1364 = vpack.c.b16 %v1361, %v1360
        %v1365 = vpack.c.b16 %v1363, %v1362
        %1368 = vmatprep.subr.bf16.mxu0 0
        %1369 = vmatpush1.bf16.msra.mxu0 %v1364
        %1370 = vmatprep.subr.bf16.mxu0 0
        %1371 = vmatpush1.bf16.msra.mxu0 %v1365
        %1372 = vmatprep.subr.bf16.mxu0 0
        %1373 = vmatpush1.bf16.msra.mxu0 0
        %1374 = vmatprep.subr.bf16.mxu0 0
        %1375 = vmatpush1.bf16.msra.mxu0 0
        %1376 = vmatprep.subr.bf16.mxu0 0
        %1377 = vmatpush1.bf16.msra.mxu0 0
        %1378 = vmatprep.subr.bf16.mxu0 0
        %1379 = vmatpush1.bf16.msra.mxu0 0
        %1380 = vmatprep.subr.bf16.mxu0 0
        %1381 = vmatpush1.bf16.msra.mxu0 0
        %1382 = vmatprep.subr.bf16.mxu0 0
        %1383 = vmatpush1.bf16.msra.mxu0 0
        %1384 = vmatprep.subr.bf16.mxu0 0
        %1385 = vmatpush1.bf16.msra.mxu0 0
        %1386 = vmatprep.subr.bf16.mxu0 0
        %1387 = vmatpush1.bf16.msra.mxu0 0
        %1388 = vmatprep.subr.bf16.mxu0 0
        %1389 = vmatpush1.bf16.msra.mxu0 0
        %1390 = vmatprep.subr.bf16.mxu0 0
        %1391 = vmatpush1.bf16.msra.mxu0 0
        %1392 = vmatprep.subr.bf16.mxu0 0
        %1393 = vmatpush1.bf16.msra.mxu0 0
        %1394 = vmatprep.subr.bf16.mxu0 0
        %1395 = vmatpush1.bf16.msra.mxu0 0
        %1396 = vmatprep.subr.bf16.mxu0 0
        %1397 = vmatpush1.bf16.msra.mxu0 0
        %1398 = vmatprep.subr.bf16.mxu0 0
        %1399 = vmatpush1.bf16.msra.mxu0 0
        %1400 = vmatprep.mubr.bf16.mxu0 0
        %1401 = vmatmul.mubr.bf16.gmra.mrb[0].mxu0 %v875
        %v1402 = vpop.f32.mrb[0].mxu0
        %v1403 = vadd.f32 0.0, %v1402
        %v1404 = vpop.f32.mrb[0].mxu0
        %v1405 = vpop.f32.mrb[0].mxu0
        %v1406 = vadd.f32 0.0, %v1405
        %v1407 = vpop.f32.mrb[0].mxu0
        %1408 = vmatprep.mubr.bf16.mxu0 0
        %1409 = vmatmul.mubr.bf16.gmra.mrb[0].mxu0 %v878
        %v1410 = vpop.f32.mrb[0].mxu0
        %v1411 = vadd.f32 0.0, %v1410
        %v1412 = vpop.f32.mrb[0].mxu0
        %v1413 = vpop.f32.mrb[0].mxu0
        %v1414 = vadd.f32 0.0, %v1413
        %v1415 = vpop.f32.mrb[0].mxu0
        %1416 = vdwg.mxu0
        %v1421 = vunpack.c.l.b16 %v850
        %v1422 = vunpack.c.l.b16 %v851
        %v1423 = vunpack.c.l.b16 %v852
        %v1424 = vunpack.c.l.b16 %v853
        %v1425 = vpack.c.b16 %v1422, %v1421
        %v1426 = vpack.c.b16 %v1424, %v1423
        %1429 = vmatprep.subr.bf16.mxu0 0
        %1430 = vmatpush1.bf16.msra.mxu0 %v1425
        %1431 = vmatprep.subr.bf16.mxu0 0
        %1432 = vmatpush1.bf16.msra.mxu0 %v1426
        %1433 = vmatprep.subr.bf16.mxu0 0
        %1434 = vmatpush1.bf16.msra.mxu0 0
        %1435 = vmatprep.subr.bf16.mxu0 0
        %1436 = vmatpush1.bf16.msra.mxu0 0
        %1437 = vmatprep.subr.bf16.mxu0 0
        %1438 = vmatpush1.bf16.msra.mxu0 0
        %1439 = vmatprep.subr.bf16.mxu0 0
        %1440 = vmatpush1.bf16.msra.mxu0 0
        %1441 = vmatprep.subr.bf16.mxu0 0
        %1442 = vmatpush1.bf16.msra.mxu0 0
        %1443 = vmatprep.subr.bf16.mxu0 0
        %1444 = vmatpush1.bf16.msra.mxu0 0
        %1445 = vmatprep.subr.bf16.mxu0 0
        %1446 = vmatpush1.bf16.msra.mxu0 0
        %1447 = vmatprep.subr.bf16.mxu0 0
        %1448 = vmatpush1.bf16.msra.mxu0 0
        %1449 = vmatprep.subr.bf16.mxu0 0
        %1450 = vmatpush1.bf16.msra.mxu0 0
        %1451 = vmatprep.subr.bf16.mxu0 0
        %1452 = vmatpush1.bf16.msra.mxu0 0
        %1453 = vmatprep.subr.bf16.mxu0 0
        %1454 = vmatpush1.bf16.msra.mxu0 0
        %1455 = vmatprep.subr.bf16.mxu0 0
        %1456 = vmatpush1.bf16.msra.mxu0 0
        %1457 = vmatprep.subr.bf16.mxu0 0
        %1458 = vmatpush1.bf16.msra.mxu0 0
        %1459 = vmatprep.subr.bf16.mxu0 0
        %1460 = vmatpush1.bf16.msra.mxu0 0
        %1461 = vmatprep.mubr.bf16.mxu0 0
        %1462 = vmatmul.mubr.bf16.gmra.mrb[0].mxu0 %v875
        %v1463 = vpop.f32.mrb[0].mxu0
        %v1464 = vadd.f32 0.0, %v1463
        %v1465 = vpop.f32.mrb[0].mxu0
        %v1466 = vpop.f32.mrb[0].mxu0
        %v1467 = vadd.f32 0.0, %v1466
        %v1468 = vpop.f32.mrb[0].mxu0
        %1469 = vmatprep.mubr.bf16.mxu0 0
        %1470 = vmatmul.mubr.bf16.gmra.mrb[0].mxu0 %v878
        %v1471 = vpop.f32.mrb[0].mxu0
        %v1472 = vadd.f32 0.0, %v1471
        %v1473 = vpop.f32.mrb[0].mxu0
        %v1474 = vpop.f32.mrb[0].mxu0
        %v1475 = vadd.f32 0.0, %v1474
        %v1476 = vpop.f32.mrb[0].mxu0
        %1477 = vdwg.mxu0
        %v1482 = vunpack.c.l.b16 %v854
        %v1483 = vunpack.c.l.b16 %v855
        %v1484 = vunpack.c.l.b16 %v856
        %v1485 = vunpack.c.l.b16 %v857
        %v1486 = vpack.c.b16 %v1483, %v1482
        %v1487 = vpack.c.b16 %v1485, %v1484
        %1490 = vmatprep.subr.bf16.mxu0 0
        %1491 = vmatpush1.bf16.msra.mxu0 %v1486
        %1492 = vmatprep.subr.bf16.mxu0 0
        %1493 = vmatpush1.bf16.msra.mxu0 %v1487
        %1494 = vmatprep.subr.bf16.mxu0 0
        %1495 = vmatpush1.bf16.msra.mxu0 0
        %1496 = vmatprep.subr.bf16.mxu0 0
        %1497 = vmatpush1.bf16.msra.mxu0 0
        %1498 = vmatprep.subr.bf16.mxu0 0
        %1499 = vmatpush1.bf16.msra.mxu0 0
        %1500 = vmatprep.subr.bf16.mxu0 0
        %1501 = vmatpush1.bf16.msra.mxu0 0
        %1502 = vmatprep.subr.bf16.mxu0 0
        %1503 = vmatpush1.bf16.msra.mxu0 0
        %1504 = vmatprep.subr.bf16.mxu0 0
        %1505 = vmatpush1.bf16.msra.mxu0 0
        %1506 = vmatprep.subr.bf16.mxu0 0
        %1507 = vmatpush1.bf16.msra.mxu0 0
        %1508 = vmatprep.subr.bf16.mxu0 0
        %1509 = vmatpush1.bf16.msra.mxu0 0
        %1510 = vmatprep.subr.bf16.mxu0 0
        %1511 = vmatpush1.bf16.msra.mxu0 0
        %1512 = vmatprep.subr.bf16.mxu0 0
        %1513 = vmatpush1.bf16.msra.mxu0 0
        %1514 = vmatprep.subr.bf16.mxu0 0
        %1515 = vmatpush1.bf16.msra.mxu0 0
        %1516 = vmatprep.subr.bf16.mxu0 0
        %1517 = vmatpush1.bf16.msra.mxu0 0
        %1518 = vmatprep.subr.bf16.mxu0 0
        %1519 = vmatpush1.bf16.msra.mxu0 0
        %1520 = vmatprep.subr.bf16.mxu0 0
        %1521 = vmatpush1.bf16.msra.mxu0 0
        %1522 = vmatprep.mubr.bf16.mxu0 0
        %1523 = vmatmul.mubr.bf16.gmra.mrb[0].mxu0 %v875
        %v1524 = vpop.f32.mrb[0].mxu0
        %v1525 = vadd.f32 0.0, %v1524
        %v1526 = vpop.f32.mrb[0].mxu0
        %v1527 = vpop.f32.mrb[0].mxu0
        %v1528 = vadd.f32 0.0, %v1527
        %v1529 = vpop.f32.mrb[0].mxu0
        %1530 = vmatprep.mubr.bf16.mxu0 0
        %1531 = vmatmul.mubr.bf16.gmra.mrb[0].mxu0 %v878
        %v1532 = vpop.f32.mrb[0].mxu0
        %v1533 = vadd.f32 0.0, %v1532
        %v1534 = vpop.f32.mrb[0].mxu0
        %v1535 = vpop.f32.mrb[0].mxu0
        %v1536 = vadd.f32 0.0, %v1535
        %v1537 = vpop.f32.mrb[0].mxu0
        %1538 = vdwg.mxu0
        %v1543 = vunpack.c.l.b16 %v858
        %v1544 = vunpack.c.l.b16 %v859
        %v1545 = vunpack.c.l.b16 %v860
        %v1546 = vunpack.c.l.b16 %v861
        %v1547 = vpack.c.b16 %v1544, %v1543
        %v1548 = vpack.c.b16 %v1546, %v1545
        %1551 = vmatprep.subr.bf16.mxu0 0
        %1552 = vmatpush1.bf16.msra.mxu0 %v1547
        %1553 = vmatprep.subr.bf16.mxu0 0
        %1554 = vmatpush1.bf16.msra.mxu0 %v1548
        %1555 = vmatprep.subr.bf16.mxu0 0
        %1556 = vmatpush1.bf16.msra.mxu0 0
        %1557 = vmatprep.subr.bf16.mxu0 0
        %1558 = vmatpush1.bf16.msra.mxu0 0
        %1559 = vmatprep.subr.bf16.mxu0 0
        %1560 = vmatpush1.bf16.msra.mxu0 0
        %1561 = vmatprep.subr.bf16.mxu0 0
        %1562 = vmatpush1.bf16.msra.mxu0 0
        %1563 = vmatprep.subr.bf16.mxu0 0
        %1564 = vmatpush1.bf16.msra.mxu0 0
        %1565 = vmatprep.subr.bf16.mxu0 0
        %1566 = vmatpush1.bf16.msra.mxu0 0
        %1567 = vmatprep.subr.bf16.mxu0 0
        %1568 = vmatpush1.bf16.msra.mxu0 0
        %1569 = vmatprep.subr.bf16.mxu0 0
        %1570 = vmatpush1.bf16.msra.mxu0 0
        %1571 = vmatprep.subr.bf16.mxu0 0
        %1572 = vmatpush1.bf16.msra.mxu0 0
        %1573 = vmatprep.subr.bf16.mxu0 0
        %1574 = vmatpush1.bf16.msra.mxu0 0
        %1575 = vmatprep.subr.bf16.mxu0 0
        %1576 = vmatpush1.bf16.msra.mxu0 0
        %1577 = vmatprep.subr.bf16.mxu0 0
        %1578 = vmatpush1.bf16.msra.mxu0 0
        %1579 = vmatprep.subr.bf16.mxu0 0
        %1580 = vmatpush1.bf16.msra.mxu0 0
        %1581 = vmatprep.subr.bf16.mxu0 0
        %1582 = vmatpush1.bf16.msra.mxu0 0
        %1583 = vmatprep.mubr.bf16.mxu0 0
        %1584 = vmatmul.mubr.bf16.gmra.mrb[0].mxu0 %v875
        %v1585 = vpop.f32.mrb[0].mxu0
        %v1586 = vadd.f32 0.0, %v1585
        %v1587 = vpop.f32.mrb[0].mxu0
        %v1588 = vpop.f32.mrb[0].mxu0
        %v1589 = vadd.f32 0.0, %v1588
        %v1590 = vpop.f32.mrb[0].mxu0
        %1591 = vmatprep.mubr.bf16.mxu0 0
        %1592 = vmatmul.mubr.bf16.gmra.mrb[0].mxu0 %v878
        %v1593 = vpop.f32.mrb[0].mxu0
        %v1594 = vadd.f32 0.0, %v1593
        %v1595 = vpop.f32.mrb[0].mxu0
        %v1596 = vpop.f32.mrb[0].mxu0
        %v1597 = vadd.f32 0.0, %v1596
        %v1598 = vpop.f32.mrb[0].mxu0
        %1599 = vdwg.mxu0
        %v1600 = vpack.c.bf16 %v918, %v915
        %v1601 = vpack.c.bf16 %v926, %v923
        %v1602 = vpack.c.bf16 %v979, %v976
        %v1603 = vpack.c.bf16 %v987, %v984
        %v1604 = vpack.c.bf16 %v1040, %v1037
        %v1605 = vpack.c.bf16 %v1048, %v1045
        %v1606 = vpack.c.bf16 %v1101, %v1098
        %v1607 = vpack.c.bf16 %v1109, %v1106
        %v1608 = vpack.c.bf16 %v1162, %v1159
        %v1609 = vpack.c.bf16 %v1170, %v1167
        %v1610 = vpack.c.bf16 %v1223, %v1220
        %v1611 = vpack.c.bf16 %v1231, %v1228
        %v1612 = vpack.c.bf16 %v1284, %v1281
        %v1613 = vpack.c.bf16 %v1292, %v1289
        %v1614 = vpack.c.bf16 %v1345, %v1342
        %v1615 = vpack.c.bf16 %v1353, %v1350
        %vm1616 = vcmask 64512
        %v1618 = vsel %vm1616, %v1600, 0
        %v1621 = vsel %vm1616, %v1601, 0
        %v1624 = vsel %vm1616, %v1608, 0
        %v1627 = vsel %vm1616, %v1609, 0
        %1629 = vmatprep.subr.bf16.mxu0 0
        %1630 = vmatpush1.bf16.xpose.msra.mxu0 %v1624
        %1631 = vmatprep.subr.bf16.mxu0 0
        %1632 = vmatpush1.bf16.xpose.msra.mxu0 %v1627
        %1633 = vmatprep.subr.bf16.mxu0 0
        %1634 = vmatpush1.bf16.xpose.msra.mxu0 0
        %1635 = vmatprep.subr.bf16.mxu0 0
        %1636 = vmatpush1.bf16.xpose.msra.mxu0 0
        %1637 = vmatprep.subr.bf16.mxu0 0
        %1638 = vmatpush1.bf16.xpose.msra.mxu0 0
        %1639 = vmatprep.subr.bf16.mxu0 0
        %1640 = vmatpush1.bf16.xpose.msra.mxu0 0
        %1641 = vmatprep.subr.bf16.mxu0 0
        %1642 = vmatpush1.bf16.xpose.msra.mxu0 0
        %1643 = vmatprep.subr.bf16.mxu0 0
        %1644 = vmatpush1.bf16.xpose.msra.mxu0 0
        %1645 = vmatprep.subr.bf16.mxu0 0
        %1646 = vmatpush1.bf16.xpose.msra.mxu0 0
        %1647 = vmatprep.subr.bf16.mxu0 0
        %1648 = vmatpush1.bf16.xpose.msra.mxu0 0
        %1649 = vmatprep.subr.bf16.mxu0 0
        %1650 = vmatpush1.bf16.xpose.msra.mxu0 0
        %1651 = vmatprep.subr.bf16.mxu0 0
        %1652 = vmatpush1.bf16.xpose.msra.mxu0 0
        %1653 = vmatprep.subr.bf16.mxu0 0
        %1654 = vmatpush1.bf16.xpose.msra.mxu0 0
        %1655 = vmatprep.subr.bf16.mxu0 0
        %1656 = vmatpush1.bf16.xpose.msra.mxu0 0
        %1657 = vmatprep.subr.bf16.mxu0 0
        %1658 = vmatpush1.bf16.xpose.msra.mxu0 0
        %1659 = vmatprep.subr.bf16.mxu0 0
        %1660 = vmatpush1.bf16.xpose.msra.mxu0 0
        %1661 = vmatprep.mubr.bf16.mxu0 0
        %1662 = vmatmul.mubr.bf16.gmra.mrb[0].mxu0 %v1618
        %v1663 = vpop.f32.mrb[0].mxu0
        %v1664 = vadd.f32 0.0, %v1663
        %v1665 = vpop.f32.mrb[0].mxu0
        %v1666 = vpop.f32.mrb[0].mxu0
        %v1667 = vadd.f32 0.0, %v1666
        %v1668 = vpop.f32.mrb[0].mxu0
        %1669 = vmatprep.mubr.bf16.mxu0 0
        %1670 = vmatmul.mubr.bf16.gmra.mrb[0].mxu0 %v1621
        %v1671 = vpop.f32.mrb[0].mxu0
        %v1672 = vadd.f32 0.0, %v1671
        %v1673 = vpop.f32.mrb[0].mxu0
        %v1674 = vpop.f32.mrb[0].mxu0
        %v1675 = vadd.f32 0.0, %v1674
        %v1676 = vpop.f32.mrb[0].mxu0
        %1677 = vdwg.mxu0
        %v1679 = vsel %vm1616, %v1602, 0
        %v1682 = vsel %vm1616, %v1603, 0
        %v1685 = vsel %vm1616, %v1610, 0
        %v1688 = vsel %vm1616, %v1611, 0
        %1690 = vmatprep.subr.bf16.mxu0 0
        %1691 = vmatpush1.bf16.xpose.msra.mxu0 %v1685
        %1692 = vmatprep.subr.bf16.mxu0 0
        %1693 = vmatpush1.bf16.xpose.msra.mxu0 %v1688
        %1694 = vmatprep.subr.bf16.mxu0 0
        %1695 = vmatpush1.bf16.xpose.msra.mxu0 0
        %1696 = vmatprep.subr.bf16.mxu0 0
        %1697 = vmatpush1.bf16.xpose.msra.mxu0 0
        %1698 = vmatprep.subr.bf16.mxu0 0
        %1699 = vmatpush1.bf16.xpose.msra.mxu0 0
        %1700 = vmatprep.subr.bf16.mxu0 0
        %1701 = vmatpush1.bf16.xpose.msra.mxu0 0
        %1702 = vmatprep.subr.bf16.mxu0 0
        %1703 = vmatpush1.bf16.xpose.msra.mxu0 0
        %1704 = vmatprep.subr.bf16.mxu0 0
        %1705 = vmatpush1.bf16.xpose.msra.mxu0 0
        %1706 = vmatprep.subr.bf16.mxu0 0
        %1707 = vmatpush1.bf16.xpose.msra.mxu0 0
        %1708 = vmatprep.subr.bf16.mxu0 0
        %1709 = vmatpush1.bf16.xpose.msra.mxu0 0
        %1710 = vmatprep.subr.bf16.mxu0 0
        %1711 = vmatpush1.bf16.xpose.msra.mxu0 0
        %1712 = vmatprep.subr.bf16.mxu0 0
        %1713 = vmatpush1.bf16.xpose.msra.mxu0 0
        %1714 = vmatprep.subr.bf16.mxu0 0
        %1715 = vmatpush1.bf16.xpose.msra.mxu0 0
        %1716 = vmatprep.subr.bf16.mxu0 0
        %1717 = vmatpush1.bf16.xpose.msra.mxu0 0
        %1718 = vmatprep.subr.bf16.mxu0 0
        %1719 = vmatpush1.bf16.xpose.msra.mxu0 0
        %1720 = vmatprep.subr.bf16.mxu0 0
        %1721 = vmatpush1.bf16.xpose.msra.mxu0 0
        %1722 = vmatprep.mubr.bf16.mxu0 0
        %1723 = vmatmul.mubr.bf16.gmra.mrb[0].mxu0 %v1679
        %v1724 = vpop.f32.mrb[0].mxu0
        %v1725 = vadd.f32 0.0, %v1724
        %v1726 = vpop.f32.mrb[0].mxu0
        %v1727 = vpop.f32.mrb[0].mxu0
        %v1728 = vadd.f32 0.0, %v1727
        %v1729 = vpop.f32.mrb[0].mxu0
        %1730 = vmatprep.mubr.bf16.mxu0 0
        %1731 = vmatmul.mubr.bf16.gmra.mrb[0].mxu0 %v1682
        %v1732 = vpop.f32.mrb[0].mxu0
        %v1733 = vadd.f32 0.0, %v1732
        %v1734 = vpop.f32.mrb[0].mxu0
        %v1735 = vpop.f32.mrb[0].mxu0
        %v1736 = vadd.f32 0.0, %v1735
        %v1737 = vpop.f32.mrb[0].mxu0
        %1738 = vdwg.mxu0
        %v1740 = vsel %vm1616, %v1604, 0
        %v1743 = vsel %vm1616, %v1605, 0
        %v1746 = vsel %vm1616, %v1612, 0
        %v1749 = vsel %vm1616, %v1613, 0
        %1751 = vmatprep.subr.bf16.mxu0 0
        %1752 = vmatpush1.bf16.xpose.msra.mxu0 %v1746
        %1753 = vmatprep.subr.bf16.mxu0 0
        %1754 = vmatpush1.bf16.xpose.msra.mxu0 %v1749
        %1755 = vmatprep.subr.bf16.mxu0 0
        %1756 = vmatpush1.bf16.xpose.msra.mxu0 0
        %1757 = vmatprep.subr.bf16.mxu0 0
        %1758 = vmatpush1.bf16.xpose.msra.mxu0 0
        %1759 = vmatprep.subr.bf16.mxu0 0
        %1760 = vmatpush1.bf16.xpose.msra.mxu0 0
        %1761 = vmatprep.subr.bf16.mxu0 0
        %1762 = vmatpush1.bf16.xpose.msra.mxu0 0
        %1763 = vmatprep.subr.bf16.mxu0 0
        %1764 = vmatpush1.bf16.xpose.msra.mxu0 0
        %1765 = vmatprep.subr.bf16.mxu0 0
        %1766 = vmatpush1.bf16.xpose.msra.mxu0 0
        %1767 = vmatprep.subr.bf16.mxu0 0
        %1768 = vmatpush1.bf16.xpose.msra.mxu0 0
        %1769 = vmatprep.subr.bf16.mxu0 0
        %1770 = vmatpush1.bf16.xpose.msra.mxu0 0
        %1771 = vmatprep.subr.bf16.mxu0 0
        %1772 = vmatpush1.bf16.xpose.msra.mxu0 0
        %1773 = vmatprep.subr.bf16.mxu0 0
        %1774 = vmatpush1.bf16.xpose.msra.mxu0 0
        %1775 = vmatprep.subr.bf16.mxu0 0
        %1776 = vmatpush1.bf16.xpose.msra.mxu0 0
        %1777 = vmatprep.subr.bf16.mxu0 0
        %1778 = vmatpush1.bf16.xpose.msra.mxu0 0
        %1779 = vmatprep.subr.bf16.mxu0 0
        %1780 = vmatpush1.bf16.xpose.msra.mxu0 0
        %1781 = vmatprep.subr.bf16.mxu0 0
        %1782 = vmatpush1.bf16.xpose.msra.mxu0 0
        %1783 = vmatprep.mubr.bf16.mxu0 0
        %1784 = vmatmul.mubr.bf16.gmra.mrb[0].mxu0 %v1740
        %v1785 = vpop.f32.mrb[0].mxu0
        %v1786 = vadd.f32 0.0, %v1785
        %v1787 = vpop.f32.mrb[0].mxu0
        %v1788 = vpop.f32.mrb[0].mxu0
        %v1789 = vadd.f32 0.0, %v1788
        %v1790 = vpop.f32.mrb[0].mxu0
        %1791 = vmatprep.mubr.bf16.mxu0 0
        %1792 = vmatmul.mubr.bf16.gmra.mrb[0].mxu0 %v1743
        %v1793 = vpop.f32.mrb[0].mxu0
        %v1794 = vadd.f32 0.0, %v1793
        %v1795 = vpop.f32.mrb[0].mxu0
        %v1796 = vpop.f32.mrb[0].mxu0
        %v1797 = vadd.f32 0.0, %v1796
        %v1798 = vpop.f32.mrb[0].mxu0
        %1799 = vdwg.mxu0
        %v1801 = vsel %vm1616, %v1606, 0
        %v1804 = vsel %vm1616, %v1607, 0
        %v1807 = vsel %vm1616, %v1614, 0
        %v1810 = vsel %vm1616, %v1615, 0
        %1812 = vmatprep.subr.bf16.mxu0 0
        %1813 = vmatpush1.bf16.xpose.msra.mxu0 %v1807
        %1814 = vmatprep.subr.bf16.mxu0 0
        %1815 = vmatpush1.bf16.xpose.msra.mxu0 %v1810
        %1816 = vmatprep.subr.bf16.mxu0 0
        %1817 = vmatpush1.bf16.xpose.msra.mxu0 0
        %1818 = vmatprep.subr.bf16.mxu0 0
        %1819 = vmatpush1.bf16.xpose.msra.mxu0 0
        %1820 = vmatprep.subr.bf16.mxu0 0
        %1821 = vmatpush1.bf16.xpose.msra.mxu0 0
        %1822 = vmatprep.subr.bf16.mxu0 0
        %1823 = vmatpush1.bf16.xpose.msra.mxu0 0
        %1824 = vmatprep.subr.bf16.mxu0 0
        %1825 = vmatpush1.bf16.xpose.msra.mxu0 0
        %1826 = vmatprep.subr.bf16.mxu0 0
        %1827 = vmatpush1.bf16.xpose.msra.mxu0 0
        %1828 = vmatprep.subr.bf16.mxu0 0
        %1829 = vmatpush1.bf16.xpose.msra.mxu0 0
        %1830 = vmatprep.subr.bf16.mxu0 0
        %1831 = vmatpush1.bf16.xpose.msra.mxu0 0
        %1832 = vmatprep.subr.bf16.mxu0 0
        %1833 = vmatpush1.bf16.xpose.msra.mxu0 0
        %1834 = vmatprep.subr.bf16.mxu0 0
        %1835 = vmatpush1.bf16.xpose.msra.mxu0 0
        %1836 = vmatprep.subr.bf16.mxu0 0
        %1837 = vmatpush1.bf16.xpose.msra.mxu0 0
        %1838 = vmatprep.subr.bf16.mxu0 0
        %1839 = vmatpush1.bf16.xpose.msra.mxu0 0
        %1840 = vmatprep.subr.bf16.mxu0 0
        %1841 = vmatpush1.bf16.xpose.msra.mxu0 0
        %1842 = vmatprep.subr.bf16.mxu0 0
        %1843 = vmatpush1.bf16.xpose.msra.mxu0 0
        %1844 = vmatprep.mubr.bf16.mxu0 0
        %1845 = vmatmul.mubr.bf16.gmra.mrb[0].mxu0 %v1801
        %v1846 = vpop.f32.mrb[0].mxu0
        %v1847 = vadd.f32 0.0, %v1846
        %v1848 = vpop.f32.mrb[0].mxu0
        %v1849 = vpop.f32.mrb[0].mxu0
        %v1850 = vadd.f32 0.0, %v1849
        %v1851 = vpop.f32.mrb[0].mxu0
        %1852 = vmatprep.mubr.bf16.mxu0 0
        %1853 = vmatmul.mubr.bf16.gmra.mrb[0].mxu0 %v1804
        %v1854 = vpop.f32.mrb[0].mxu0
        %v1855 = vadd.f32 0.0, %v1854
        %v1856 = vpop.f32.mrb[0].mxu0
        %v1857 = vpop.f32.mrb[0].mxu0
        %v1858 = vadd.f32 0.0, %v1857
        %v1859 = vpop.f32.mrb[0].mxu0
        %1860 = vdwg.mxu0
        %v1861 = vmul.f32 %v1664, 0.35355338
        %v1862 = vmul.f32 %v1667, 0.35355338
        %v1863 = vmul.f32 %v1672, 0.35355338
        %v1864 = vmul.f32 %v1675, 0.35355338
        %v1865 = vmul.f32 %v1725, 0.35355338
        %v1866 = vmul.f32 %v1728, 0.35355338
        %v1867 = vmul.f32 %v1733, 0.35355338
        %v1868 = vmul.f32 %v1736, 0.35355338
        %v1869 = vmul.f32 %v1786, 0.35355338
        %v1870 = vmul.f32 %v1789, 0.35355338
        %v1871 = vmul.f32 %v1794, 0.35355338
        %v1872 = vmul.f32 %v1797, 0.35355338
        %v1873 = vmul.f32 %v1847, 0.35355338
        %v1874 = vmul.f32 %v1850, 0.35355338
        %v1875 = vmul.f32 %v1855, 0.35355338
        %v1876 = vmul.f32 %v1858, 0.35355338
        %v1877 = vld [vmem:[%s4] sm:$0xff]
        %v1878 = vld [vmem:[%s4 + $0x8] sm:$0xff]
        %v1879 = vld [vmem:[%s4 + $0x10] sm:$0xff]
        %v1880 = vld [vmem:[%s4 + $0x18] sm:$0xff]
        %v1881 = vadd.f32 %v1861, %v1877
        %v1882 = vadd.f32 %v1862, %v1878
        %v1883 = vadd.f32 %v1863, %v1879
        %v1884 = vadd.f32 %v1864, %v1880
        %v1885 = vadd.f32 %v1865, %v1877
        %v1886 = vadd.f32 %v1866, %v1878
        %v1887 = vadd.f32 %v1867, %v1879
        %v1888 = vadd.f32 %v1868, %v1880
        %v1889 = vadd.f32 %v1869, %v1877
        %v1890 = vadd.f32 %v1870, %v1878
        %v1891 = vadd.f32 %v1871, %v1879
        %v1892 = vadd.f32 %v1872, %v1880
        %v1893 = vadd.f32 %v1873, %v1877
        %v1894 = vadd.f32 %v1874, %v1878
        %v1895 = vadd.f32 %v1875, %v1879
        %v1896 = vadd.f32 %v1876, %v1880
        %v1897 = vsel %vm730, %v1881, -inf
        %1898 = vmax.xlane.f32.xlu0 %v1897
        %v1899 = vpop.xlane.xlu0 %1898
        %v1900 = vsel %vm730, %v1882, -inf
        %1901 = vmax.xlane.f32.xlu0 %v1900
        %v1902 = vpop.xlane.xlu0 %1901
        %v1903 = vsel %vm730, %v1883, -inf
        %1904 = vmax.xlane.f32.xlu0 %v1903
        %v1905 = vpop.xlane.xlu0 %1904
        %v1906 = vsel %vm730, %v1884, -inf
        %1907 = vmax.xlane.f32.xlu0 %v1906
        %v1908 = vpop.xlane.xlu0 %1907
        %v1909 = vsel %vm730, %v1885, -inf
        %1910 = vmax.xlane.f32.xlu0 %v1909
        %v1911 = vpop.xlane.xlu0 %1910
        %v1912 = vsel %vm730, %v1886, -inf
        %1913 = vmax.xlane.f32.xlu0 %v1912
        %v1914 = vpop.xlane.xlu0 %1913
        %v1915 = vsel %vm730, %v1887, -inf
        %1916 = vmax.xlane.f32.xlu0 %v1915
        %v1917 = vpop.xlane.xlu0 %1916
        %v1918 = vsel %vm730, %v1888, -inf
        %1919 = vmax.xlane.f32.xlu0 %v1918
        %v1920 = vpop.xlane.xlu0 %1919
        %v1921 = vsel %vm730, %v1889, -inf
        %1922 = vmax.xlane.f32.xlu0 %v1921
        %v1923 = vpop.xlane.xlu0 %1922
        %v1924 = vsel %vm730, %v1890, -inf
        %1925 = vmax.xlane.f32.xlu0 %v1924
        %v1926 = vpop.xlane.xlu0 %1925
        %v1927 = vsel %vm730, %v1891, -inf
        %1928 = vmax.xlane.f32.xlu0 %v1927
        %v1929 = vpop.xlane.xlu0 %1928
        %v1930 = vsel %vm730, %v1892, -inf
        %1931 = vmax.xlane.f32.xlu0 %v1930
        %v1932 = vpop.xlane.xlu0 %1931
        %v1933 = vsel %vm730, %v1893, -inf
        %1934 = vmax.xlane.f32.xlu0 %v1933
        %v1935 = vpop.xlane.xlu0 %1934
        %v1936 = vsel %vm730, %v1894, -inf
        %1937 = vmax.xlane.f32.xlu0 %v1936
        %v1938 = vpop.xlane.xlu0 %1937
        %v1939 = vsel %vm730, %v1895, -inf
        %1940 = vmax.xlane.f32.xlu0 %v1939
        %v1941 = vpop.xlane.xlu0 %1940
        %v1942 = vsel %vm730, %v1896, -inf
        %1943 = vmax.xlane.f32.xlu0 %v1942
        %v1944 = vpop.xlane.xlu0 %1943
        %v1945 = vsub.f32 %v1881, %v1899
        %v1946 = vsub.f32 %v1882, %v1902
        %v1947 = vsub.f32 %v1883, %v1905
        %v1948 = vsub.f32 %v1884, %v1908
        %v1949 = vsub.f32 %v1885, %v1911
        %v1950 = vsub.f32 %v1886, %v1914
        %v1951 = vsub.f32 %v1887, %v1917
        %v1952 = vsub.f32 %v1888, %v1920
        %v1953 = vsub.f32 %v1889, %v1923
        %v1954 = vsub.f32 %v1890, %v1926
        %v1955 = vsub.f32 %v1891, %v1929
        %v1956 = vsub.f32 %v1892, %v1932
        %v1957 = vsub.f32 %v1893, %v1935
        %v1958 = vsub.f32 %v1894, %v1938
        %v1959 = vsub.f32 %v1895, %v1941
        %v1960 = vsub.f32 %v1896, %v1944
        %v1961 = vmul.f32 %v1945, 1.442695
        %v1962 = vpow.pop %v1961
        %v1963 = vmul.f32 %v1946, 1.442695
        %v1964 = vpow.pop %v1963
        %v1965 = vmul.f32 %v1947, 1.442695
        %v1966 = vpow.pop %v1965
        %v1967 = vmul.f32 %v1948, 1.442695
        %v1968 = vpow.pop %v1967
        %v1969 = vmul.f32 %v1949, 1.442695
        %v1970 = vpow.pop %v1969
        %v1971 = vmul.f32 %v1950, 1.442695
        %v1972 = vpow.pop %v1971
        %v1973 = vmul.f32 %v1951, 1.442695
        %v1974 = vpow.pop %v1973
        %v1975 = vmul.f32 %v1952, 1.442695
        %v1976 = vpow.pop %v1975
        %v1977 = vmul.f32 %v1953, 1.442695
        %v1978 = vpow.pop %v1977
        %v1979 = vmul.f32 %v1954, 1.442695
        %v1980 = vpow.pop %v1979
        %v1981 = vmul.f32 %v1955, 1.442695
        %v1982 = vpow.pop %v1981
        %v1983 = vmul.f32 %v1956, 1.442695
        %v1984 = vpow.pop %v1983
        %v1985 = vmul.f32 %v1957, 1.442695
        %v1986 = vpow.pop %v1985
        %v1987 = vmul.f32 %v1958, 1.442695
        %v1988 = vpow.pop %v1987
        %v1989 = vmul.f32 %v1959, 1.442695
        %v1990 = vpow.pop %v1989
        %v1991 = vmul.f32 %v1960, 1.442695
        %v1992 = vpow.pop %v1991
        %v1993 = vsel %vm730, %v1962, 0.0
        %1994 = vadd.xlane.f32.xlu0 %v1993
        %v1995 = vpop.xlane.xlu0 %1994
        %v1996 = vsel %vm730, %v1964, 0.0
        %1997 = vadd.xlane.f32.xlu0 %v1996
        %v1998 = vpop.xlane.xlu0 %1997
        %v1999 = vsel %vm730, %v1966, 0.0
        %2000 = vadd.xlane.f32.xlu0 %v1999
        %v2001 = vpop.xlane.xlu0 %2000
        %v2002 = vsel %vm730, %v1968, 0.0
        %2003 = vadd.xlane.f32.xlu0 %v2002
        %v2004 = vpop.xlane.xlu0 %2003
        %v2005 = vsel %vm730, %v1970, 0.0
        %2006 = vadd.xlane.f32.xlu0 %v2005
        %v2007 = vpop.xlane.xlu0 %2006
        %v2008 = vsel %vm730, %v1972, 0.0
        %2009 = vadd.xlane.f32.xlu0 %v2008
        %v2010 = vpop.xlane.xlu0 %2009
        %v2011 = vsel %vm730, %v1974, 0.0
        %2012 = vadd.xlane.f32.xlu0 %v2011
        %v2013 = vpop.xlane.xlu0 %2012
        %v2014 = vsel %vm730, %v1976, 0.0
        %2015 = vadd.xlane.f32.xlu0 %v2014
        %v2016 = vpop.xlane.xlu0 %2015
        %v2017 = vsel %vm730, %v1978, 0.0
        %2018 = vadd.xlane.f32.xlu0 %v2017
        %v2019 = vpop.xlane.xlu0 %2018
        %v2020 = vsel %vm730, %v1980, 0.0
        %2021 = vadd.xlane.f32.xlu0 %v2020
        %v2022 = vpop.xlane.xlu0 %2021
        %v2023 = vsel %vm730, %v1982, 0.0
        %2024 = vadd.xlane.f32.xlu0 %v2023
        %v2025 = vpop.xlane.xlu0 %2024
        %v2026 = vsel %vm730, %v1984, 0.0
        %2027 = vadd.xlane.f32.xlu0 %v2026
        %v2028 = vpop.xlane.xlu0 %2027
        %v2029 = vsel %vm730, %v1986, 0.0
        %2030 = vadd.xlane.f32.xlu0 %v2029
        %v2031 = vpop.xlane.xlu0 %2030
        %v2032 = vsel %vm730, %v1988, 0.0
        %2033 = vadd.xlane.f32.xlu0 %v2032
        %v2034 = vpop.xlane.xlu0 %2033
        %v2035 = vsel %vm730, %v1990, 0.0
        %2036 = vadd.xlane.f32.xlu0 %v2035
        %v2037 = vpop.xlane.xlu0 %2036
        %v2038 = vsel %vm730, %v1992, 0.0
        %2039 = vadd.xlane.f32.xlu0 %v2038
        %v2040 = vpop.xlane.xlu0 %2039
        %v2041 = vrcp.pop %v1995
        %v2042 = vrcp.pop %v1998
        %v2043 = vrcp.pop %v2001
        %v2044 = vrcp.pop %v2004
        %v2045 = vrcp.pop %v2007
        %v2046 = vrcp.pop %v2010
        %v2047 = vrcp.pop %v2013
        %v2048 = vrcp.pop %v2016
        %v2049 = vrcp.pop %v2019
        %v2050 = vrcp.pop %v2022
        %v2051 = vrcp.pop %v2025
        %v2052 = vrcp.pop %v2028
        %v2053 = vrcp.pop %v2031
        %v2054 = vrcp.pop %v2034
        %v2055 = vrcp.pop %v2037
        %v2056 = vrcp.pop %v2040
        %v2057 = vmul.f32 %v1962, %v2041
        %v2058 = vmul.f32 %v1964, %v2042
        %v2059 = vmul.f32 %v1966, %v2043
        %v2060 = vmul.f32 %v1968, %v2044
        %v2061 = vmul.f32 %v1970, %v2045
        %v2062 = vmul.f32 %v1972, %v2046
        %v2063 = vmul.f32 %v1974, %v2047
        %v2064 = vmul.f32 %v1976, %v2048
        %v2065 = vmul.f32 %v1978, %v2049
        %v2066 = vmul.f32 %v1980, %v2050
        %v2067 = vmul.f32 %v1982, %v2051
        %v2068 = vmul.f32 %v1984, %v2052
        %v2069 = vmul.f32 %v1986, %v2053
        %v2070 = vmul.f32 %v1988, %v2054
        %v2071 = vmul.f32 %v1990, %v2055
        %v2072 = vmul.f32 %v1992, %v2056
        %v2073 = vpack.c.bf16 %v2058, %v2057
        %v2074 = vpack.c.bf16 %v2060, %v2059
        %v2075 = vpack.c.bf16 %v2062, %v2061
        %v2076 = vpack.c.bf16 %v2064, %v2063
        %v2077 = vpack.c.bf16 %v2066, %v2065
        %v2078 = vpack.c.bf16 %v2068, %v2067
        %v2079 = vpack.c.bf16 %v2070, %v2069
        %v2080 = vpack.c.bf16 %v2072, %v2071
        %v2081 = vpack.c.bf16 %v1406, %v1403
        %v2082 = vpack.c.bf16 %v1414, %v1411
        %v2083 = vpack.c.bf16 %v1467, %v1464
        %v2084 = vpack.c.bf16 %v1475, %v1472
        %v2085 = vpack.c.bf16 %v1528, %v1525
        %v2086 = vpack.c.bf16 %v1536, %v1533
        %v2087 = vpack.c.bf16 %v1589, %v1586
        %v2088 = vpack.c.bf16 %v1597, %v1594
        %v2090 = vsel %vm730, %v2073, 0
        %v2093 = vsel %vm730, %v2074, 0
        %2095 = vmatprep.subr.bf16.mxu0 0
        %2096 = vmatpush1.bf16.msra.mxu0 %v2081
        %2097 = vmatprep.subr.bf16.mxu0 0
        %2098 = vmatpush1.bf16.msra.mxu0 %v2082
        %2099 = vmatprep.subr.bf16.mxu0 0
        %2100 = vmatpush1.bf16.msra.mxu0 0
        %2101 = vmatprep.subr.bf16.mxu0 0
        %2102 = vmatpush1.bf16.msra.mxu0 0
        %2103 = vmatprep.subr.bf16.mxu0 0
        %2104 = vmatpush1.bf16.msra.mxu0 0
        %2105 = vmatprep.subr.bf16.mxu0 0
        %2106 = vmatpush1.bf16.msra.mxu0 0
        %2107 = vmatprep.subr.bf16.mxu0 0
        %2108 = vmatpush1.bf16.msra.mxu0 0
        %2109 = vmatprep.subr.bf16.mxu0 0
        %2110 = vmatpush1.bf16.msra.mxu0 0
        %2111 = vmatprep.subr.bf16.mxu0 0
        %2112 = vmatpush1.bf16.msra.mxu0 0
        %2113 = vmatprep.subr.bf16.mxu0 0
        %2114 = vmatpush1.bf16.msra.mxu0 0
        %2115 = vmatprep.subr.bf16.mxu0 0
        %2116 = vmatpush1.bf16.msra.mxu0 0
        %2117 = vmatprep.subr.bf16.mxu0 0
        %2118 = vmatpush1.bf16.msra.mxu0 0
        %2119 = vmatprep.subr.bf16.mxu0 0
        %2120 = vmatpush1.bf16.msra.mxu0 0
        %2121 = vmatprep.subr.bf16.mxu0 0
        %2122 = vmatpush1.bf16.msra.mxu0 0
        %2123 = vmatprep.subr.bf16.mxu0 0
        %2124 = vmatpush1.bf16.msra.mxu0 0
        %2125 = vmatprep.subr.bf16.mxu0 0
        %2126 = vmatpush1.bf16.msra.mxu0 0
        %2127 = vmatprep.mubr.bf16.mxu0 0
        %2128 = vmatmul.mubr.bf16.gmra.mrb[0].mxu0 %v2090
        %v2129 = vpop.f32.mrb[0].mxu0
        %v2130 = vadd.f32 0.0, %v2129
        %v2131 = vpop.f32.mrb[0].mxu0
        %v2132 = vpop.f32.mrb[0].mxu0
        %v2133 = vadd.f32 0.0, %v2132
        %v2134 = vpop.f32.mrb[0].mxu0
        %2135 = vmatprep.mubr.bf16.mxu0 0
        %2136 = vmatmul.mubr.bf16.gmra.mrb[0].mxu0 %v2093
        %v2137 = vpop.f32.mrb[0].mxu0
        %v2138 = vadd.f32 0.0, %v2137
        %v2139 = vpop.f32.mrb[0].mxu0
        %v2140 = vpop.f32.mrb[0].mxu0
        %v2141 = vadd.f32 0.0, %v2140
        %v2142 = vpop.f32.mrb[0].mxu0
        %2143 = vdwg.mxu0
        %v2145 = vsel %vm730, %v2075, 0
        %v2148 = vsel %vm730, %v2076, 0
        %2150 = vmatprep.subr.bf16.mxu0 0
        %2151 = vmatpush1.bf16.msra.mxu0 %v2083
        %2152 = vmatprep.subr.bf16.mxu0 0
        %2153 = vmatpush1.bf16.msra.mxu0 %v2084
        %2154 = vmatprep.subr.bf16.mxu0 0
        %2155 = vmatpush1.bf16.msra.mxu0 0
        %2156 = vmatprep.subr.bf16.mxu0 0
        %2157 = vmatpush1.bf16.msra.mxu0 0
        %2158 = vmatprep.subr.bf16.mxu0 0
        %2159 = vmatpush1.bf16.msra.mxu0 0
        %2160 = vmatprep.subr.bf16.mxu0 0
        %2161 = vmatpush1.bf16.msra.mxu0 0
        %2162 = vmatprep.subr.bf16.mxu0 0
        %2163 = vmatpush1.bf16.msra.mxu0 0
        %2164 = vmatprep.subr.bf16.mxu0 0
        %2165 = vmatpush1.bf16.msra.mxu0 0
        %2166 = vmatprep.subr.bf16.mxu0 0
        %2167 = vmatpush1.bf16.msra.mxu0 0
        %2168 = vmatprep.subr.bf16.mxu0 0
        %2169 = vmatpush1.bf16.msra.mxu0 0
        %2170 = vmatprep.subr.bf16.mxu0 0
        %2171 = vmatpush1.bf16.msra.mxu0 0
        %2172 = vmatprep.subr.bf16.mxu0 0
        %2173 = vmatpush1.bf16.msra.mxu0 0
        %2174 = vmatprep.subr.bf16.mxu0 0
        %2175 = vmatpush1.bf16.msra.mxu0 0
        %2176 = vmatprep.subr.bf16.mxu0 0
        %2177 = vmatpush1.bf16.msra.mxu0 0
        %2178 = vmatprep.subr.bf16.mxu0 0
        %2179 = vmatpush1.bf16.msra.mxu0 0
        %2180 = vmatprep.subr.bf16.mxu0 0
        %2181 = vmatpush1.bf16.msra.mxu0 0
        %2182 = vmatprep.mubr.bf16.mxu0 0
        %2183 = vmatmul.mubr.bf16.gmra.mrb[0].mxu0 %v2145
        %v2184 = vpop.f32.mrb[0].mxu0
        %v2185 = vadd.f32 0.0, %v2184
        %v2186 = vpop.f32.mrb[0].mxu0
        %v2187 = vpop.f32.mrb[0].mxu0
        %v2188 = vadd.f32 0.0, %v2187
        %v2189 = vpop.f32.mrb[0].mxu0
        %2190 = vmatprep.mubr.bf16.mxu0 0
        %2191 = vmatmul.mubr.bf16.gmra.mrb[0].mxu0 %v2148
        %v2192 = vpop.f32.mrb[0].mxu0
        %v2193 = vadd.f32 0.0, %v2192
        %v2194 = vpop.f32.mrb[0].mxu0
        %v2195 = vpop.f32.mrb[0].mxu0
        %v2196 = vadd.f32 0.0, %v2195
        %v2197 = vpop.f32.mrb[0].mxu0
        %2198 = vdwg.mxu0
        %v2200 = vsel %vm730, %v2077, 0
        %v2203 = vsel %vm730, %v2078, 0
        %2205 = vmatprep.subr.bf16.mxu0 0
        %2206 = vmatpush1.bf16.msra.mxu0 %v2085
        %2207 = vmatprep.subr.bf16.mxu0 0
        %2208 = vmatpush1.bf16.msra.mxu0 %v2086
        %2209 = vmatprep.subr.bf16.mxu0 0
        %2210 = vmatpush1.bf16.msra.mxu0 0
        %2211 = vmatprep.subr.bf16.mxu0 0
        %2212 = vmatpush1.bf16.msra.mxu0 0
        %2213 = vmatprep.subr.bf16.mxu0 0
        %2214 = vmatpush1.bf16.msra.mxu0 0
        %2215 = vmatprep.subr.bf16.mxu0 0
        %2216 = vmatpush1.bf16.msra.mxu0 0
        %2217 = vmatprep.subr.bf16.mxu0 0
        %2218 = vmatpush1.bf16.msra.mxu0 0
        %2219 = vmatprep.subr.bf16.mxu0 0
        %2220 = vmatpush1.bf16.msra.mxu0 0
        %2221 = vmatprep.subr.bf16.mxu0 0
        %2222 = vmatpush1.bf16.msra.mxu0 0
        %2223 = vmatprep.subr.bf16.mxu0 0
        %2224 = vmatpush1.bf16.msra.mxu0 0
        %2225 = vmatprep.subr.bf16.mxu0 0
        %2226 = vmatpush1.bf16.msra.mxu0 0
        %2227 = vmatprep.subr.bf16.mxu0 0
        %2228 = vmatpush1.bf16.msra.mxu0 0
        %2229 = vmatprep.subr.bf16.mxu0 0
        %2230 = vmatpush1.bf16.msra.mxu0 0
        %2231 = vmatprep.subr.bf16.mxu0 0
        %2232 = vmatpush1.bf16.msra.mxu0 0
        %2233 = vmatprep.subr.bf16.mxu0 0
        %2234 = vmatpush1.bf16.msra.mxu0 0
        %2235 = vmatprep.subr.bf16.mxu0 0
        %2236 = vmatpush1.bf16.msra.mxu0 0
        %2237 = vmatprep.mubr.bf16.mxu0 0
        %2238 = vmatmul.mubr.bf16.gmra.mrb[0].mxu0 %v2200
        %v2239 = vpop.f32.mrb[0].mxu0
        %v2240 = vadd.f32 0.0, %v2239
        %v2241 = vpop.f32.mrb[0].mxu0
        %v2242 = vpop.f32.mrb[0].mxu0
        %v2243 = vadd.f32 0.0, %v2242
        %v2244 = vpop.f32.mrb[0].mxu0
        %2245 = vmatprep.mubr.bf16.mxu0 0
        %2246 = vmatmul.mubr.bf16.gmra.mrb[0].mxu0 %v2203
        %v2247 = vpop.f32.mrb[0].mxu0
        %v2248 = vadd.f32 0.0, %v2247
        %v2249 = vpop.f32.mrb[0].mxu0
        %v2250 = vpop.f32.mrb[0].mxu0
        %v2251 = vadd.f32 0.0, %v2250
        %v2252 = vpop.f32.mrb[0].mxu0
        %2253 = vdwg.mxu0
        %v2255 = vsel %vm730, %v2079, 0
        %v2258 = vsel %vm730, %v2080, 0
        %2260 = vmatprep.subr.bf16.mxu0 0
        %2261 = vmatpush1.bf16.msra.mxu0 %v2087
        %2262 = vmatprep.subr.bf16.mxu0 0
        %2263 = vmatpush1.bf16.msra.mxu0 %v2088
        %2264 = vmatprep.subr.bf16.mxu0 0
        %2265 = vmatpush1.bf16.msra.mxu0 0
        %2266 = vmatprep.subr.bf16.mxu0 0
        %2267 = vmatpush1.bf16.msra.mxu0 0
        %2268 = vmatprep.subr.bf16.mxu0 0
        %2269 = vmatpush1.bf16.msra.mxu0 0
        %2270 = vmatprep.subr.bf16.mxu0 0
        %2271 = vmatpush1.bf16.msra.mxu0 0
        %2272 = vmatprep.subr.bf16.mxu0 0
        %2273 = vmatpush1.bf16.msra.mxu0 0
        %2274 = vmatprep.subr.bf16.mxu0 0
        %2275 = vmatpush1.bf16.msra.mxu0 0
        %2276 = vmatprep.subr.bf16.mxu0 0
        %2277 = vmatpush1.bf16.msra.mxu0 0
        %2278 = vmatprep.subr.bf16.mxu0 0
        %2279 = vmatpush1.bf16.msra.mxu0 0
        %2280 = vmatprep.subr.bf16.mxu0 0
        %2281 = vmatpush1.bf16.msra.mxu0 0
        %2282 = vmatprep.subr.bf16.mxu0 0
        %2283 = vmatpush1.bf16.msra.mxu0 0
        %2284 = vmatprep.subr.bf16.mxu0 0
        %2285 = vmatpush1.bf16.msra.mxu0 0
        %2286 = vmatprep.subr.bf16.mxu0 0
        %2287 = vmatpush1.bf16.msra.mxu0 0
        %2288 = vmatprep.subr.bf16.mxu0 0
        %2289 = vmatpush1.bf16.msra.mxu0 0
        %2290 = vmatprep.subr.bf16.mxu0 0
        %2291 = vmatpush1.bf16.msra.mxu0 0
        %2292 = vmatprep.mubr.bf16.mxu0 0
        %2293 = vmatmul.mubr.bf16.gmra.mrb[0].mxu0 %v2255
        %v2294 = vpop.f32.mrb[0].mxu0
        %v2295 = vadd.f32 0.0, %v2294
        %v2296 = vpop.f32.mrb[0].mxu0
        %v2297 = vpop.f32.mrb[0].mxu0
        %v2298 = vadd.f32 0.0, %v2297
        %v2299 = vpop.f32.mrb[0].mxu0
        %2300 = vmatprep.mubr.bf16.mxu0 0
        %2301 = vmatmul.mubr.bf16.gmra.mrb[0].mxu0 %v2258
        %v2302 = vpop.f32.mrb[0].mxu0
        %v2303 = vadd.f32 0.0, %v2302
        %v2304 = vpop.f32.mrb[0].mxu0
        %v2305 = vpop.f32.mrb[0].mxu0
        %v2306 = vadd.f32 0.0, %v2305
        %v2307 = vpop.f32.mrb[0].mxu0
        %2308 = vdwg.mxu0
        %v2309 = vld [vmem:[%s5] sm:$0xff]
        %v2310 = vld [vmem:[%s5 + $0x8] sm:$0xff]
        %v2311 = vld [vmem:[%s5 + $0x10] sm:$0xff]
        %v2312 = vld [vmem:[%s5 + $0x18] sm:$0xff]
        %v2314 = vsel %vm1616, %v2130, 0
        %v2317 = vsel %vm1616, %v2133, 0
        %v2320 = vsel %vm1616, %v2138, 0
        %v2323 = vsel %vm1616, %v2141, 0
        %2325 = vmatprep.subr.mxu0 0.0
        %2326 = vmatpush1.msra.mxu0 %v2309
        %2327 = vmatprep.subr.mxu0 0.0
        %2328 = vmatpush1.msra.mxu0 0.0
        %2329 = vmatprep.subr.mxu0 0.0
        %2330 = vmatpush1.msra.mxu0 0.0
        %2331 = vmatprep.subr.mxu0 0.0
        %2332 = vmatpush1.msra.mxu0 0.0
        %2333 = vmatprep.subr.mxu0 0.0
        %2334 = vmatpush1.msra.mxu0 0.0
        %2335 = vmatprep.subr.mxu0 0.0
        %2336 = vmatpush1.msra.mxu0 0.0
        %2337 = vmatprep.subr.mxu0 0.0
        %2338 = vmatpush1.msra.mxu0 0.0
        %2339 = vmatprep.subr.mxu0 0.0
        %2340 = vmatpush1.msra.mxu0 0.0
        %2341 = vmatprep.subr.mxu0 0.0
        %2342 = vmatpush1.msra.mxu0 0.0
        %2343 = vmatprep.subr.mxu0 0.0
        %2344 = vmatpush1.msra.mxu0 0.0
        %2345 = vmatprep.subr.mxu0 0.0
        %2346 = vmatpush1.msra.mxu0 0.0
        %2347 = vmatprep.subr.mxu0 0.0
        %2348 = vmatpush1.msra.mxu0 0.0
        %2349 = vmatprep.subr.mxu0 0.0
        %2350 = vmatpush1.msra.mxu0 0.0
        %2351 = vmatprep.subr.mxu0 0.0
        %2352 = vmatpush1.msra.mxu0 0.0
        %2353 = vmatprep.subr.mxu0 0.0
        %2354 = vmatpush1.msra.mxu0 0.0
        %2355 = vmatprep.subr.mxu0 0.0
        %2356 = vmatpush1.msra.mxu0 0.0
        %2357 = vmatprep.subr.mxu0 0.0
        %2358 = vmatpush1.msra.mxu0 0.0
        %2359 = vmatprep.subr.mxu0 0.0
        %2360 = vmatpush1.msra.mxu0 0.0
        %2361 = vmatprep.subr.mxu0 0.0
        %2362 = vmatpush1.msra.mxu0 0.0
        %2363 = vmatprep.subr.mxu0 0.0
        %2364 = vmatpush1.msra.mxu0 0.0
        %2365 = vmatprep.subr.mxu0 0.0
        %2366 = vmatpush1.msra.mxu0 0.0
        %2367 = vmatprep.subr.mxu0 0.0
        %2368 = vmatpush1.msra.mxu0 0.0
        %2369 = vmatprep.subr.mxu0 0.0
        %2370 = vmatpush1.msra.mxu0 0.0
        %2371 = vmatprep.subr.mxu0 0.0
        %2372 = vmatpush1.msra.mxu0 0.0
        %2373 = vmatprep.subr.mxu0 0.0
        %2374 = vmatpush1.msra.mxu0 0.0
        %2375 = vmatprep.subr.mxu0 0.0
        %2376 = vmatpush1.msra.mxu0 0.0
        %2377 = vmatprep.subr.mxu0 0.0
        %2378 = vmatpush1.msra.mxu0 0.0
        %2379 = vmatprep.subr.mxu0 0.0
        %2380 = vmatpush1.msra.mxu0 0.0
        %2381 = vmatprep.subr.mxu0 0.0
        %2382 = vmatpush1.msra.mxu0 0.0
        %2383 = vmatprep.subr.mxu0 0.0
        %2384 = vmatpush1.msra.mxu0 0.0
        %2385 = vmatprep.subr.mxu0 0.0
        %2386 = vmatpush1.msra.mxu0 0.0
        %2387 = vmatprep.subr.mxu0 0.0
        %2388 = vmatpush1.msra.mxu0 0.0
        %2389 = vmatprep.mubr.f32.mxu0 0.0
        %2390 = vmatmul.mubr.f32.gmra.mrb[0].mxu0 %v2314
        %v2391 = vpop.f32.mrb[0].mxu0
        %v2392 = vadd.f32 0.0, %v2391
        %v2393 = vpop.f32.mrb[0].mxu0
        %2394 = vmatprep.mubr.f32.mxu0 0.0
        %2395 = vmatmul.mubr.f32.gmra.mrb[0].mxu0 %v2317
        %v2396 = vpop.f32.mrb[0].mxu0
        %v2397 = vadd.f32 0.0, %v2396
        %v2398 = vpop.f32.mrb[0].mxu0
        %2399 = vmatprep.mubr.f32.mxu0 0.0
        %2400 = vmatmul.mubr.f32.gmra.mrb[0].mxu0 %v2320
        %v2401 = vpop.f32.mrb[0].mxu0
        %v2402 = vadd.f32 0.0, %v2401
        %v2403 = vpop.f32.mrb[0].mxu0
        %2404 = vmatprep.mubr.f32.mxu0 0.0
        %2405 = vmatmul.mubr.f32.gmra.mrb[0].mxu0 %v2323
        %v2406 = vpop.f32.mrb[0].mxu0
        %v2407 = vadd.f32 0.0, %v2406
        %v2408 = vpop.f32.mrb[0].mxu0
        %2409 = vdwg.mxu0
        %v2411 = vsel %vm1616, %v2185, 0
        %v2414 = vsel %vm1616, %v2188, 0
        %v2417 = vsel %vm1616, %v2193, 0
        %v2420 = vsel %vm1616, %v2196, 0
        %2422 = vmatprep.subr.mxu0 0.0
        %2423 = vmatpush1.msra.mxu0 %v2310
        %2424 = vmatprep.subr.mxu0 0.0
        %2425 = vmatpush1.msra.mxu0 0.0
        %2426 = vmatprep.subr.mxu0 0.0
        %2427 = vmatpush1.msra.mxu0 0.0
        %2428 = vmatprep.subr.mxu0 0.0
        %2429 = vmatpush1.msra.mxu0 0.0
        %2430 = vmatprep.subr.mxu0 0.0
        %2431 = vmatpush1.msra.mxu0 0.0
        %2432 = vmatprep.subr.mxu0 0.0
        %2433 = vmatpush1.msra.mxu0 0.0
        %2434 = vmatprep.subr.mxu0 0.0
        %2435 = vmatpush1.msra.mxu0 0.0
        %2436 = vmatprep.subr.mxu0 0.0
        %2437 = vmatpush1.msra.mxu0 0.0
        %2438 = vmatprep.subr.mxu0 0.0
        %2439 = vmatpush1.msra.mxu0 0.0
        %2440 = vmatprep.subr.mxu0 0.0
        %2441 = vmatpush1.msra.mxu0 0.0
        %2442 = vmatprep.subr.mxu0 0.0
        %2443 = vmatpush1.msra.mxu0 0.0
        %2444 = vmatprep.subr.mxu0 0.0
        %2445 = vmatpush1.msra.mxu0 0.0
        %2446 = vmatprep.subr.mxu0 0.0
        %2447 = vmatpush1.msra.mxu0 0.0
        %2448 = vmatprep.subr.mxu0 0.0
        %2449 = vmatpush1.msra.mxu0 0.0
        %2450 = vmatprep.subr.mxu0 0.0
        %2451 = vmatpush1.msra.mxu0 0.0
        %2452 = vmatprep.subr.mxu0 0.0
        %2453 = vmatpush1.msra.mxu0 0.0
        %2454 = vmatprep.subr.mxu0 0.0
        %2455 = vmatpush1.msra.mxu0 0.0
        %2456 = vmatprep.subr.mxu0 0.0
        %2457 = vmatpush1.msra.mxu0 0.0
        %2458 = vmatprep.subr.mxu0 0.0
        %2459 = vmatpush1.msra.mxu0 0.0
        %2460 = vmatprep.subr.mxu0 0.0
        %2461 = vmatpush1.msra.mxu0 0.0
        %2462 = vmatprep.subr.mxu0 0.0
        %2463 = vmatpush1.msra.mxu0 0.0
        %2464 = vmatprep.subr.mxu0 0.0
        %2465 = vmatpush1.msra.mxu0 0.0
        %2466 = vmatprep.subr.mxu0 0.0
        %2467 = vmatpush1.msra.mxu0 0.0
        %2468 = vmatprep.subr.mxu0 0.0
        %2469 = vmatpush1.msra.mxu0 0.0
        %2470 = vmatprep.subr.mxu0 0.0
        %2471 = vmatpush1.msra.mxu0 0.0
        %2472 = vmatprep.subr.mxu0 0.0
        %2473 = vmatpush1.msra.mxu0 0.0
        %2474 = vmatprep.subr.mxu0 0.0
        %2475 = vmatpush1.msra.mxu0 0.0
        %2476 = vmatprep.subr.mxu0 0.0
        %2477 = vmatpush1.msra.mxu0 0.0
        %2478 = vmatprep.subr.mxu0 0.0
        %2479 = vmatpush1.msra.mxu0 0.0
        %2480 = vmatprep.subr.mxu0 0.0
        %2481 = vmatpush1.msra.mxu0 0.0
        %2482 = vmatprep.subr.mxu0 0.0
        %2483 = vmatpush1.msra.mxu0 0.0
        %2484 = vmatprep.subr.mxu0 0.0
        %2485 = vmatpush1.msra.mxu0 0.0
        %2486 = vmatprep.mubr.f32.mxu0 0.0
        %2487 = vmatmul.mubr.f32.gmra.mrb[0].mxu0 %v2411
        %v2488 = vpop.f32.mrb[0].mxu0
        %v2489 = vadd.f32 0.0, %v2488
        %v2490 = vpop.f32.mrb[0].mxu0
        %2491 = vmatprep.mubr.f32.mxu0 0.0
        %2492 = vmatmul.mubr.f32.gmra.mrb[0].mxu0 %v2414
        %v2493 = vpop.f32.mrb[0].mxu0
        %v2494 = vadd.f32 0.0, %v2493
        %v2495 = vpop.f32.mrb[0].mxu0
        %2496 = vmatprep.mubr.f32.mxu0 0.0
        %2497 = vmatmul.mubr.f32.gmra.mrb[0].mxu0 %v2417
        %v2498 = vpop.f32.mrb[0].mxu0
        %v2499 = vadd.f32 0.0, %v2498
        %v2500 = vpop.f32.mrb[0].mxu0
        %2501 = vmatprep.mubr.f32.mxu0 0.0
        %2502 = vmatmul.mubr.f32.gmra.mrb[0].mxu0 %v2420
        %v2503 = vpop.f32.mrb[0].mxu0
        %v2504 = vadd.f32 0.0, %v2503
        %v2505 = vpop.f32.mrb[0].mxu0
        %2506 = vdwg.mxu0
        %v2508 = vsel %vm1616, %v2240, 0
        %v2511 = vsel %vm1616, %v2243, 0
        %v2514 = vsel %vm1616, %v2248, 0
        %v2517 = vsel %vm1616, %v2251, 0
        %2519 = vmatprep.subr.mxu0 0.0
        %2520 = vmatpush1.msra.mxu0 %v2311
        %2521 = vmatprep.subr.mxu0 0.0
        %2522 = vmatpush1.msra.mxu0 0.0
        %2523 = vmatprep.subr.mxu0 0.0
        %2524 = vmatpush1.msra.mxu0 0.0
        %2525 = vmatprep.subr.mxu0 0.0
        %2526 = vmatpush1.msra.mxu0 0.0
        %2527 = vmatprep.subr.mxu0 0.0
        %2528 = vmatpush1.msra.mxu0 0.0
        %2529 = vmatprep.subr.mxu0 0.0
        %2530 = vmatpush1.msra.mxu0 0.0
        %2531 = vmatprep.subr.mxu0 0.0
        %2532 = vmatpush1.msra.mxu0 0.0
        %2533 = vmatprep.subr.mxu0 0.0
        %2534 = vmatpush1.msra.mxu0 0.0
        %2535 = vmatprep.subr.mxu0 0.0
        %2536 = vmatpush1.msra.mxu0 0.0
        %2537 = vmatprep.subr.mxu0 0.0
        %2538 = vmatpush1.msra.mxu0 0.0
        %2539 = vmatprep.subr.mxu0 0.0
        %2540 = vmatpush1.msra.mxu0 0.0
        %2541 = vmatprep.subr.mxu0 0.0
        %2542 = vmatpush1.msra.mxu0 0.0
        %2543 = vmatprep.subr.mxu0 0.0
        %2544 = vmatpush1.msra.mxu0 0.0
        %2545 = vmatprep.subr.mxu0 0.0
        %2546 = vmatpush1.msra.mxu0 0.0
        %2547 = vmatprep.subr.mxu0 0.0
        %2548 = vmatpush1.msra.mxu0 0.0
        %2549 = vmatprep.subr.mxu0 0.0
        %2550 = vmatpush1.msra.mxu0 0.0
        %2551 = vmatprep.subr.mxu0 0.0
        %2552 = vmatpush1.msra.mxu0 0.0
        %2553 = vmatprep.subr.mxu0 0.0
        %2554 = vmatpush1.msra.mxu0 0.0
        %2555 = vmatprep.subr.mxu0 0.0
        %2556 = vmatpush1.msra.mxu0 0.0
        %2557 = vmatprep.subr.mxu0 0.0
        %2558 = vmatpush1.msra.mxu0 0.0
        %2559 = vmatprep.subr.mxu0 0.0
        %2560 = vmatpush1.msra.mxu0 0.0
        %2561 = vmatprep.subr.mxu0 0.0
        %2562 = vmatpush1.msra.mxu0 0.0
        %2563 = vmatprep.subr.mxu0 0.0
        %2564 = vmatpush1.msra.mxu0 0.0
        %2565 = vmatprep.subr.mxu0 0.0
        %2566 = vmatpush1.msra.mxu0 0.0
        %2567 = vmatprep.subr.mxu0 0.0
        %2568 = vmatpush1.msra.mxu0 0.0
        %2569 = vmatprep.subr.mxu0 0.0
        %2570 = vmatpush1.msra.mxu0 0.0
        %2571 = vmatprep.subr.mxu0 0.0
        %2572 = vmatpush1.msra.mxu0 0.0
        %2573 = vmatprep.subr.mxu0 0.0
        %2574 = vmatpush1.msra.mxu0 0.0
        %2575 = vmatprep.subr.mxu0 0.0
        %2576 = vmatpush1.msra.mxu0 0.0
        %2577 = vmatprep.subr.mxu0 0.0
        %2578 = vmatpush1.msra.mxu0 0.0
        %2579 = vmatprep.subr.mxu0 0.0
        %2580 = vmatpush1.msra.mxu0 0.0
        %2581 = vmatprep.subr.mxu0 0.0
        %2582 = vmatpush1.msra.mxu0 0.0
        %2583 = vmatprep.mubr.f32.mxu0 0.0
        %2584 = vmatmul.mubr.f32.gmra.mrb[0].mxu0 %v2508
        %v2585 = vpop.f32.mrb[0].mxu0
        %v2586 = vadd.f32 0.0, %v2585
        %v2587 = vpop.f32.mrb[0].mxu0
        %2588 = vmatprep.mubr.f32.mxu0 0.0
        %2589 = vmatmul.mubr.f32.gmra.mrb[0].mxu0 %v2511
        %v2590 = vpop.f32.mrb[0].mxu0
        %v2591 = vadd.f32 0.0, %v2590
        %v2592 = vpop.f32.mrb[0].mxu0
        %2593 = vmatprep.mubr.f32.mxu0 0.0
        %2594 = vmatmul.mubr.f32.gmra.mrb[0].mxu0 %v2514
        %v2595 = vpop.f32.mrb[0].mxu0
        %v2596 = vadd.f32 0.0, %v2595
        %v2597 = vpop.f32.mrb[0].mxu0
        %2598 = vmatprep.mubr.f32.mxu0 0.0
        %2599 = vmatmul.mubr.f32.gmra.mrb[0].mxu0 %v2517
        %v2600 = vpop.f32.mrb[0].mxu0
        %v2601 = vadd.f32 0.0, %v2600
        %v2602 = vpop.f32.mrb[0].mxu0
        %2603 = vdwg.mxu0
        %v2605 = vsel %vm1616, %v2295, 0
        %v2608 = vsel %vm1616, %v2298, 0
        %v2611 = vsel %vm1616, %v2303, 0
        %v2614 = vsel %vm1616, %v2306, 0
        %2616 = vmatprep.subr.mxu0 0.0
        %2617 = vmatpush1.msra.mxu0 %v2312
        %2618 = vmatprep.subr.mxu0 0.0
        %2619 = vmatpush1.msra.mxu0 0.0
        %2620 = vmatprep.subr.mxu0 0.0
        %2621 = vmatpush1.msra.mxu0 0.0
        %2622 = vmatprep.subr.mxu0 0.0
        %2623 = vmatpush1.msra.mxu0 0.0
        %2624 = vmatprep.subr.mxu0 0.0
        %2625 = vmatpush1.msra.mxu0 0.0
        %2626 = vmatprep.subr.mxu0 0.0
        %2627 = vmatpush1.msra.mxu0 0.0
        %2628 = vmatprep.subr.mxu0 0.0
        %2629 = vmatpush1.msra.mxu0 0.0
        %2630 = vmatprep.subr.mxu0 0.0
        %2631 = vmatpush1.msra.mxu0 0.0
        %2632 = vmatprep.subr.mxu0 0.0
        %2633 = vmatpush1.msra.mxu0 0.0
        %2634 = vmatprep.subr.mxu0 0.0
        %2635 = vmatpush1.msra.mxu0 0.0
        %2636 = vmatprep.subr.mxu0 0.0
        %2637 = vmatpush1.msra.mxu0 0.0
        %2638 = vmatprep.subr.mxu0 0.0
        %2639 = vmatpush1.msra.mxu0 0.0
        %2640 = vmatprep.subr.mxu0 0.0
        %2641 = vmatpush1.msra.mxu0 0.0
        %2642 = vmatprep.subr.mxu0 0.0
        %2643 = vmatpush1.msra.mxu0 0.0
        %2644 = vmatprep.subr.mxu0 0.0
        %2645 = vmatpush1.msra.mxu0 0.0
        %2646 = vmatprep.subr.mxu0 0.0
        %2647 = vmatpush1.msra.mxu0 0.0
        %2648 = vmatprep.subr.mxu0 0.0
        %2649 = vmatpush1.msra.mxu0 0.0
        %2650 = vmatprep.subr.mxu0 0.0
        %2651 = vmatpush1.msra.mxu0 0.0
        %2652 = vmatprep.subr.mxu0 0.0
        %2653 = vmatpush1.msra.mxu0 0.0
        %2654 = vmatprep.subr.mxu0 0.0
        %2655 = vmatpush1.msra.mxu0 0.0
        %2656 = vmatprep.subr.mxu0 0.0
        %2657 = vmatpush1.msra.mxu0 0.0
        %2658 = vmatprep.subr.mxu0 0.0
        %2659 = vmatpush1.msra.mxu0 0.0
        %2660 = vmatprep.subr.mxu0 0.0
        %2661 = vmatpush1.msra.mxu0 0.0
        %2662 = vmatprep.subr.mxu0 0.0
        %2663 = vmatpush1.msra.mxu0 0.0
        %2664 = vmatprep.subr.mxu0 0.0
        %2665 = vmatpush1.msra.mxu0 0.0
        %2666 = vmatprep.subr.mxu0 0.0
        %2667 = vmatpush1.msra.mxu0 0.0
        %2668 = vmatprep.subr.mxu0 0.0
        %2669 = vmatpush1.msra.mxu0 0.0
        %2670 = vmatprep.subr.mxu0 0.0
        %2671 = vmatpush1.msra.mxu0 0.0
        %2672 = vmatprep.subr.mxu0 0.0
        %2673 = vmatpush1.msra.mxu0 0.0
        %2674 = vmatprep.subr.mxu0 0.0
        %2675 = vmatpush1.msra.mxu0 0.0
        %2676 = vmatprep.subr.mxu0 0.0
        %2677 = vmatpush1.msra.mxu0 0.0
        %2678 = vmatprep.subr.mxu0 0.0
        %2679 = vmatpush1.msra.mxu0 0.0
        %2680 = vmatprep.mubr.f32.mxu0 0.0
        %2681 = vmatmul.mubr.f32.gmra.mrb[0].mxu0 %v2605
        %v2682 = vpop.f32.mrb[0].mxu0
        %v2683 = vadd.f32 0.0, %v2682
        %v2684 = vpop.f32.mrb[0].mxu0
        %2685 = vmatprep.mubr.f32.mxu0 0.0
        %2686 = vmatmul.mubr.f32.gmra.mrb[0].mxu0 %v2608
        %v2687 = vpop.f32.mrb[0].mxu0
        %v2688 = vadd.f32 0.0, %v2687
        %v2689 = vpop.f32.mrb[0].mxu0
        %2690 = vmatprep.mubr.f32.mxu0 0.0
        %2691 = vmatmul.mubr.f32.gmra.mrb[0].mxu0 %v2611
        %v2692 = vpop.f32.mrb[0].mxu0
        %v2693 = vadd.f32 0.0, %v2692
        %v2694 = vpop.f32.mrb[0].mxu0
        %2695 = vmatprep.mubr.f32.mxu0 0.0
        %2696 = vmatmul.mubr.f32.gmra.mrb[0].mxu0 %v2614
        %v2697 = vpop.f32.mrb[0].mxu0
        %v2698 = vadd.f32 0.0, %v2697
        %v2699 = vpop.f32.mrb[0].mxu0
        %2700 = vdwg.mxu0
        %v2701 = vsel %vm730, %v2392, 0.0
        %v2702 = vsel %vm730, %v2489, 0.0
        %v2703 = vadd.f32 %v2701, %v2702
        %v2704 = vsel %vm730, %v2586, 0.0
        %v2705 = vadd.f32 %v2703, %v2704
        %v2706 = vsel %vm730, %v2683, 0.0
        %v2707 = vadd.f32 %v2705, %v2706
        %v2708 = vsel %vm730, %v2397, 0.0
        %v2709 = vsel %vm730, %v2494, 0.0
        %v2710 = vadd.f32 %v2708, %v2709
        %v2711 = vsel %vm730, %v2591, 0.0
        %v2712 = vadd.f32 %v2710, %v2711
        %v2713 = vsel %vm730, %v2688, 0.0
        %v2714 = vadd.f32 %v2712, %v2713
        %v2715 = vsel %vm730, %v2402, 0.0
        %v2716 = vsel %vm730, %v2499, 0.0
        %v2717 = vadd.f32 %v2715, %v2716
        %v2718 = vsel %vm730, %v2596, 0.0
        %v2719 = vadd.f32 %v2717, %v2718
        %v2720 = vsel %vm730, %v2693, 0.0
        %v2721 = vadd.f32 %v2719, %v2720
        %v2722 = vsel %vm730, %v2407, 0.0
        %v2723 = vsel %vm730, %v2504, 0.0
        %v2724 = vadd.f32 %v2722, %v2723
        %v2725 = vsel %vm730, %v2601, 0.0
        %v2726 = vadd.f32 %v2724, %v2725
        %v2727 = vsel %vm730, %v2698, 0.0
        %v2728 = vadd.f32 %v2726, %v2727
        %v2729 = vadd.f32 %v724, %v2707
        %v2730 = vadd.f32 %v725, %v2714
        %v2731 = vadd.f32 %v726, %v2721
        %v2732 = vadd.f32 %v727, %v2728
        %v2733 = vld [vmem:[%s585] sm:$0x1]
        %v2734 = vld [vmem:[%s588] sm:$0x1]
        %v2735 = vsel %vm730, %v2729, 0.0
        %2736 = vadd.xlane.f32.xlu0 %v2735
        %v2737 = vpop.xlane.xlu0 %2736
        %v2738 = vsel %vm730, %v2730, 0.0
        %2739 = vadd.xlane.f32.xlu0 %v2738
        %v2740 = vpop.xlane.xlu0 %2739
        %v2741 = vsel %vm730, %v2731, 0.0
        %2742 = vadd.xlane.f32.xlu0 %v2741
        %v2743 = vpop.xlane.xlu0 %2742
        %v2744 = vsel %vm730, %v2732, 0.0
        %2745 = vadd.xlane.f32.xlu0 %v2744
        %v2746 = vpop.xlane.xlu0 %2745
        %v2747 = vmul.f32 %v2737, %v743
        %v2748 = vmul.f32 %v2740, %v743
        %v2749 = vmul.f32 %v2743, %v743
        %v2750 = vmul.f32 %v2746, %v743
        %v2751 = vmul.f32 %v2729, %v2729
        %v2752 = vmul.f32 %v2730, %v2730
        %v2753 = vmul.f32 %v2731, %v2731
        %v2754 = vmul.f32 %v2732, %v2732
        %v2755 = vsel %vm730, %v2751, 0.0
        %2756 = vadd.xlane.f32.xlu0 %v2755
        %v2757 = vpop.xlane.xlu0 %2756
        %v2758 = vsel %vm730, %v2752, 0.0
        %2759 = vadd.xlane.f32.xlu0 %v2758
        %v2760 = vpop.xlane.xlu0 %2759
        %v2761 = vsel %vm730, %v2753, 0.0
        %2762 = vadd.xlane.f32.xlu0 %v2761
        %v2763 = vpop.xlane.xlu0 %2762
        %v2764 = vsel %vm730, %v2754, 0.0
        %2765 = vadd.xlane.f32.xlu0 %v2764
        %v2766 = vpop.xlane.xlu0 %2765
        %v2767 = vmul.f32 %v2757, %v743
        %v2768 = vmul.f32 %v2760, %v743
        %v2769 = vmul.f32 %v2763, %v743
        %v2770 = vmul.f32 %v2766, %v743
        %v2771 = vmul.f32 %v2747, %v2747
        %v2772 = vmul.f32 %v2748, %v2748
        %v2773 = vmul.f32 %v2749, %v2749
        %v2774 = vmul.f32 %v2750, %v2750
        %v2775 = vsub.f32 %v2767, %v2771
        %v2776 = vsub.f32 %v2768, %v2772
        %v2777 = vsub.f32 %v2769, %v2773
        %v2778 = vsub.f32 %v2770, %v2774
        %v2779 = vsub.f32 %v2729, %v2747
        %v2780 = vsub.f32 %v2730, %v2748
        %v2781 = vsub.f32 %v2731, %v2749
        %v2782 = vsub.f32 %v2732, %v2750
        %v2783 = vadd.f32 %v2775, 1e-05
        %v2784 = vadd.f32 %v2776, 1e-05
        %v2785 = vadd.f32 %v2777, 1e-05
        %v2786 = vadd.f32 %v2778, 1e-05
        %v2787 = vrsqrt.pop %v2783
        %v2788 = vrsqrt.pop %v2784
        %v2789 = vrsqrt.pop %v2785
        %v2790 = vrsqrt.pop %v2786
        %v2791 = vmul.f32 %v2779, %v2787
        %v2792 = vmul.f32 %v2780, %v2788
        %v2793 = vmul.f32 %v2781, %v2789
        %v2794 = vmul.f32 %v2782, %v2790
        %v2796 = vlaneseq
        %v2797 = vshrl.u32 %v2796, 7
        %v2798 = vsub.s32 0, %v2797
        %v2799 = vrot.slane %v2733, %v2798
        %v2801 = vmul.f32 %v2791, %v2799
        %v2802 = vmul.f32 %v2792, %v2799
        %v2803 = vmul.f32 %v2793, %v2799
        %v2804 = vmul.f32 %v2794, %v2799
        %v2806 = vlaneseq
        %v2807 = vshrl.u32 %v2806, 7
        %v2808 = vsub.s32 0, %v2807
        %v2809 = vrot.slane %v2734, %v2808
        %v2811 = vadd.f32 %v2801, %v2809
        %v2812 = vadd.f32 %v2802, %v2809
        %v2813 = vadd.f32 %v2803, %v2809
        %v2814 = vadd.f32 %v2804, %v2809
        %v2815 = vpack.c.bf16 %v2812, %v2811
        %v2816 = vpack.c.bf16 %v2814, %v2813
        %v2817 = vld [vmem:[%s593] sm:$0xf]
        %v2818 = vld [vmem:[%s593 + $0x4] sm:$0xf]
        %v2819 = vld [vmem:[%s593 + $0x8] sm:$0xf]
        %v2820 = vld [vmem:[%s593 + $0xc] sm:$0xf]
        %v2821 = vld [vmem:[%s596] sm:$0x1]
        %v2823 = vlaneseq
        %v2824 = vshrl.u32 %v2823, 7
        %v2825 = vsub.s32 0, %v2824
        %v2826 = vrot.slane %v2821, %v2825
        %v2832 = vunpack.c.l.b16 %v2817
        %v2833 = vunpack.c.l.b16 %v2818
        %v2834 = vunpack.c.l.b16 %v2819
        %v2835 = vunpack.c.l.b16 %v2820
        %v2836 = vpack.c.b16 %v2833, %v2832
        %v2837 = vpack.c.b16 %v2835, %v2834
        %v2841 = vsel %vm730, %v2815, 0
        %v2844 = vsel %vm730, %v2816, 0
        %2846 = vmatprep.subr.bf16.mxu0 0
        %2847 = vmatpush1.bf16.msra.mxu0 %v2836
        %2848 = vmatprep.subr.bf16.mxu0 0
        %2849 = vmatpush1.bf16.msra.mxu0 %v2837
        %2850 = vmatprep.subr.bf16.mxu0 0
        %2851 = vmatpush1.bf16.msra.mxu0 0
        %2852 = vmatprep.subr.bf16.mxu0 0
        %2853 = vmatpush1.bf16.msra.mxu0 0
        %2854 = vmatprep.subr.bf16.mxu0 0
        %2855 = vmatpush1.bf16.msra.mxu0 0
        %2856 = vmatprep.subr.bf16.mxu0 0
        %2857 = vmatpush1.bf16.msra.mxu0 0
        %2858 = vmatprep.subr.bf16.mxu0 0
        %2859 = vmatpush1.bf16.msra.mxu0 0
        %2860 = vmatprep.subr.bf16.mxu0 0
        %2861 = vmatpush1.bf16.msra.mxu0 0
        %2862 = vmatprep.subr.bf16.mxu0 0
        %2863 = vmatpush1.bf16.msra.mxu0 0
        %2864 = vmatprep.subr.bf16.mxu0 0
        %2865 = vmatpush1.bf16.msra.mxu0 0
        %2866 = vmatprep.subr.bf16.mxu0 0
        %2867 = vmatpush1.bf16.msra.mxu0 0
        %2868 = vmatprep.subr.bf16.mxu0 0
        %2869 = vmatpush1.bf16.msra.mxu0 0
        %2870 = vmatprep.subr.bf16.mxu0 0
        %2871 = vmatpush1.bf16.msra.mxu0 0
        %2872 = vmatprep.subr.bf16.mxu0 0
        %2873 = vmatpush1.bf16.msra.mxu0 0
        %2874 = vmatprep.subr.bf16.mxu0 0
        %2875 = vmatpush1.bf16.msra.mxu0 0
        %2876 = vmatprep.subr.bf16.mxu0 0
        %2877 = vmatpush1.bf16.msra.mxu0 0
        %2878 = vmatprep.mubr.bf16.mxu0 0
        %2879 = vmatmul.mubr.bf16.gmra.mrb[0].mxu0 %v2841
        %v2880 = vpop.f32.mrb[0].mxu0
        %v2881 = vadd.f32 %v2826, %v2880
        %v2882 = vpop.f32.mrb[0].mxu0
        %v2883 = vpop.f32.mrb[0].mxu0
        %v2884 = vadd.f32 %v2826, %v2883
        %v2885 = vpop.f32.mrb[0].mxu0
        %2886 = vmatprep.mubr.bf16.mxu0 0
        %2887 = vmatmul.mubr.bf16.gmra.mrb[0].mxu0 %v2844
        %v2888 = vpop.f32.mrb[0].mxu0
        %v2889 = vadd.f32 %v2826, %v2888
        %v2890 = vpop.f32.mrb[0].mxu0
        %v2891 = vpop.f32.mrb[0].mxu0
        %v2892 = vadd.f32 %v2826, %v2891
        %v2893 = vpop.f32.mrb[0].mxu0
        %2894 = vdwg.mxu0
        %v2895 = vmul.f32 %v2881, 0.5
        %v2896 = vmul.f32 %v2884, 0.5
        %v2897 = vmul.f32 %v2889, 0.5
        %v2898 = vmul.f32 %v2892, 0.5
        %v2899 = vmul.f32 %v2881, 0.70710677
        %v2900 = vmul.f32 %v2884, 0.70710677
        %v2901 = vmul.f32 %v2889, 0.70710677
        %v2902 = vmul.f32 %v2892, 0.70710677
        %v2903 = verf.f32.pop %v2899
        %v2904 = verf.f32.pop %v2900
        %v2905 = verf.f32.pop %v2901
        %v2906 = verf.f32.pop %v2902
        %v2907 = vadd.f32 %v2903, 1.0
        %v2908 = vadd.f32 %v2904, 1.0
        %v2909 = vadd.f32 %v2905, 1.0
        %v2910 = vadd.f32 %v2906, 1.0
        %v2911 = vmul.f32 %v2895, %v2907
        %v2912 = vmul.f32 %v2896, %v2908
        %v2913 = vmul.f32 %v2897, %v2909
        %v2914 = vmul.f32 %v2898, %v2910
        %v2915 = vpack.c.bf16 %v2912, %v2911
        %v2916 = vpack.c.bf16 %v2914, %v2913
        %v2917 = vld [vmem:[%s601] sm:$0xf]
        %v2918 = vld [vmem:[%s601 + $0x4] sm:$0xf]
        %v2919 = vld [vmem:[%s601 + $0x8] sm:$0xf]
        %v2920 = vld [vmem:[%s601 + $0xc] sm:$0xf]
        %v2921 = vld [vmem:[%s601 + $0x10] sm:$0xf]
        %v2922 = vld [vmem:[%s601 + $0x14] sm:$0xf]
        %v2923 = vld [vmem:[%s601 + $0x18] sm:$0xf]
        %v2924 = vld [vmem:[%s601 + $0x1c] sm:$0xf]
        %v2925 = vld [vmem:[%s604] sm:$0x1]
        %v2927 = vlaneseq
        %v2928 = vshrl.u32 %v2927, 7
        %v2929 = vsub.s32 0, %v2928
        %v2930 = vrot.slane %v2925, %v2929
        %v2940 = vunpack.c.l.b16 %v2917
        %v2941 = vunpack.c.l.b16 %v2918
        %v2942 = vunpack.c.l.b16 %v2919
        %v2943 = vunpack.c.l.b16 %v2920
        %v2944 = vunpack.c.l.b16 %v2921
        %v2945 = vunpack.c.l.b16 %v2922
        %v2946 = vunpack.c.l.b16 %v2923
        %v2947 = vunpack.c.l.b16 %v2924
        %v2948 = vpack.c.b16 %v2941, %v2940
        %v2949 = vpack.c.b16 %v2943, %v2942
        %v2950 = vpack.c.b16 %v2945, %v2944
        %v2951 = vpack.c.b16 %v2947, %v2946
        %vm2956 = vcmask 523264
        %v2958 = vsel %vm2956, %v2915, 0
        %v2961 = vsel %vm2956, %v2916, 0
        %2963 = vmatprep.subr.bf16.mxu0 0
        %2964 = vmatpush1.bf16.msra.mxu0 %v2948
        %2965 = vmatprep.subr.bf16.mxu0 0
        %2966 = vmatpush1.bf16.msra.mxu0 %v2949
        %2967 = vmatprep.subr.bf16.mxu0 0
        %2968 = vmatpush1.bf16.msra.mxu0 %v2950
        %2969 = vmatprep.subr.bf16.mxu0 0
        %2970 = vmatpush1.bf16.msra.mxu0 %v2951
        %2971 = vmatprep.subr.bf16.mxu0 0
        %2972 = vmatpush1.bf16.msra.mxu0 0
        %2973 = vmatprep.subr.bf16.mxu0 0
        %2974 = vmatpush1.bf16.msra.mxu0 0
        %2975 = vmatprep.subr.bf16.mxu0 0
        %2976 = vmatpush1.bf16.msra.mxu0 0
        %2977 = vmatprep.subr.bf16.mxu0 0
        %2978 = vmatpush1.bf16.msra.mxu0 0
        %2979 = vmatprep.subr.bf16.mxu0 0
        %2980 = vmatpush1.bf16.msra.mxu0 0
        %2981 = vmatprep.subr.bf16.mxu0 0
        %2982 = vmatpush1.bf16.msra.mxu0 0
        %2983 = vmatprep.subr.bf16.mxu0 0
        %2984 = vmatpush1.bf16.msra.mxu0 0
        %2985 = vmatprep.subr.bf16.mxu0 0
        %2986 = vmatpush1.bf16.msra.mxu0 0
        %2987 = vmatprep.subr.bf16.mxu0 0
        %2988 = vmatpush1.bf16.msra.mxu0 0
        %2989 = vmatprep.subr.bf16.mxu0 0
        %2990 = vmatpush1.bf16.msra.mxu0 0
        %2991 = vmatprep.subr.bf16.mxu0 0
        %2992 = vmatpush1.bf16.msra.mxu0 0
        %2993 = vmatprep.subr.bf16.mxu0 0
        %2994 = vmatpush1.bf16.msra.mxu0 0
        %2995 = vmatprep.mubr.bf16.mxu0 0
        %2996 = vmatmul.mubr.bf16.gmra.mrb[0].mxu0 %v2958
        %v2997 = vpop.f32.mrb[0].mxu0
        %v2998 = vadd.f32 %v2930, %v2997
        %v2999 = vpop.f32.mrb[0].mxu0
        %v3000 = vpop.f32.mrb[0].mxu0
        %v3001 = vadd.f32 %v2930, %v3000
        %v3002 = vpop.f32.mrb[0].mxu0
        %3003 = vmatprep.mubr.bf16.mxu0 0
        %3004 = vmatmul.mubr.bf16.gmra.mrb[0].mxu0 %v2961
        %v3005 = vpop.f32.mrb[0].mxu0
        %v3006 = vadd.f32 %v2930, %v3005
        %v3007 = vpop.f32.mrb[0].mxu0
        %v3008 = vpop.f32.mrb[0].mxu0
        %v3009 = vadd.f32 %v2930, %v3008
        %v3010 = vpop.f32.mrb[0].mxu0
        %3011 = vdwg.mxu0
        %v3012 = vadd.f32 %v2729, %v2998
        %v3013 = vadd.f32 %v2730, %v3001
        %v3014 = vadd.f32 %v2731, %v3006
        %v3015 = vadd.f32 %v2732, %v3009
        %3016 = vst.msk [vmem:[#allocation2] sm:$0xff] %vm730, %v3012
        %3017 = vst.msk [vmem:[#allocation2 + $0x8] sm:$0xff] %vm730, %v3013
        %3018 = vst.msk [vmem:[#allocation2 + $0x10] sm:$0xff] %vm730, %v3014
        %3019 = vst.msk [vmem:[#allocation2 + $0x18] sm:$0xff] %vm730, %v3015
        %p3020 = scmp.eq.s32.totalorder %s27, 1
        // Predicated region
        $region85: #{transformer_encoder_forward.1} parent=79 // pred_check
          %p3021 = pneg %p3020
        $region86: #{transformer_encoder_forward.1} parent=79 // pred_check_branch
          %3023 = sbr.rel (%p3021) target = $region88
        $region87: #{transformer_encoder_forward.1} parent=79 // pred_region
          %3024 = vst.msk [vmem:[#allocation3] sm:$0xff] %vm730, %v3012
          %3025 = vst.msk [vmem:[#allocation3 + $0x8] sm:$0xff] %vm730, %v3013
          %3026 = vst.msk [vmem:[#allocation3 + $0x10] sm:$0xff] %vm730, %v3014
          %3027 = vst.msk [vmem:[#allocation3 + $0x18] sm:$0xff] %vm730, %v3015
        $region88: #{transformer_encoder_forward.1} parent=79 // pred_fallthru
          _
        // Predicated region
        $region89: #{transformer_encoder_forward.1} parent=79 // pred_check
          %p3028 = pneg %p400
        $region90: #{transformer_encoder_forward.1} parent=79 // pred_check_branch
          %3030 = sbr.rel (%p3028) target = $region92
        $region91: #{transformer_encoder_forward.1} parent=79 // pred_region
          %s3032 = ssub.s32 512, 512
          %3033 = vsyncadd [#allocation4], %s3032
          %s3034 = sshll.u32 [#allocation3], 4
          %s3035 = int_to_ptr.vmem [resolvable:$true] %s3034
          %3040 = dma.vmem_to_hbm [thread:$0]  %s3035, 512, %s15, [#allocation4], 128, 128, 8
        $region92: #{transformer_encoder_forward.1} parent=79 // pred_fallthru
          _
        // Predicated region
        $region93: #{transformer_encoder_forward.1} parent=79 // pred_check
          %p3041 = pneg %p400
        $region94: #{transformer_encoder_forward.1} parent=79 // pred_check_branch
          %3043 = sbr.rel (%p3041) target = $region96
        $region95: #{transformer_encoder_forward.1} parent=79 // pred_region
          %3044 = dma.done [#allocation4], 512
        $region96: #{transformer_encoder_forward.1} parent=79 // pred_fallthru
          _
      $region80: #{transformer_encoder_forward.1} parent=5 // pred_fallthru
        _
      %p3045 = scmp.le.s32.totalorder 2, %s22
      // Predicated region
      $region97: #{transformer_encoder_forward.1} parent=5 // pred_check
        %p3046 = pneg %p3045
      $region98: #{transformer_encoder_forward.1} parent=5 // pred_check_branch
        %3048 = sbr.rel (%p3046) target = $region100
      $region99: #{transformer_encoder_forward.1} parent=5 // pred_region
        %s3049 = ssub.s32 %s22, 2
      $region100: #{transformer_encoder_forward.1} parent=5 // pred_fallthru
        _
    $region6: #{transformer_encoder_forward.1} parent=1 // loop_footer
      %s26 = sadd.s32 1, %s22
    $region7: #{transformer_encoder_forward.1} parent=1 // loop_footer_branch
      %21 = sbr.rel target = $region3
    $region8: #{transformer_encoder_forward.1} parent=1 // loop_exit
      _
    %3050 = vsyncpa [#allocation4], 1
    %s3051 = scalar_lea.sflag [#allocation4], 1
    %3052 = vsyncpa %s3051, 1

</llo_original>
